<compile_context>
chip_gen: v5e
topology: v5e:2x2
jax: 0.10.0
libtpu: 0.0.40
codegen_flags: <defaults>
</compile_context>

<pallas_src>
import jax
import jax.numpy as jnp
import numpy as np
from jax.experimental import pallas as pl
from jax.experimental.pallas import tpu as pltpu

# ------------------------- configuration (small, synthetic) -------------------------
B, S = 2, 8
NUM_HEADS = 4
HIDDEN = 32
HEAD_DIM = HIDDEN // NUM_HEADS          # 8
IMG_DIM = 16                            # config['image']['projection_dim']
TXT_DIM = 24                            # config['text']['projection_dim']
LN_EPS = 1e-5
L2_EPS = 1e-12
SCALING = float(HEAD_DIM) ** -0.5       # module-level scaling applied to q/k inputs
MHA_SCALE = float(HEAD_DIM) ** -0.5     # nn.MultiheadAttention internal 1/sqrt(E)

# TODO(synk): dropout (projection + attention dropout) is a no-op in eval mode; omitted.
# TODO(synk): attention_mask / key_padding_mask path not implemented (mask=None only).


# ------------------------- single fused kernel -------------------------
def fused_kernel(img_ref, txt_ref,
                 img_w_ref, img_b_ref, img_g_ref, img_beta_ref,
                 txt_w_ref, txt_b_ref, txt_g_ref, txt_beta_ref,
                 wqkv_img_ref, bqkv_img_ref, wqkv_txt_ref, bqkv_txt_ref,
                 wo_i2t_ref, bo_i2t_ref, wo_t2i_ref, bo_t2i_ref,
                 hn_g_ref, hn_b_ref, out_ref):
    f32 = jnp.float32

    def project(x, w, b, g, beta):
        # Linear + LayerNorm + F.normalize(p=2, dim=-1)
        y = jnp.dot(x, w, preferred_element_type=f32) + b
        mean = jnp.mean(y, axis=-1, keepdims=True)
        c = y - mean
        var = jnp.mean(c * c, axis=-1, keepdims=True)
        ln = c * jax.lax.rsqrt(var + LN_EPS) * g + beta
        nrm = jnp.sqrt(jnp.sum(ln * ln, axis=-1, keepdims=True))
        return ln * pl.reciprocal(jnp.maximum(nrm, L2_EPS), approx=True)

    # module-level scaling folded right after projection (residual uses the scaled value)
    x_img = project(img_ref[...], img_w_ref[...], img_b_ref[...],
                    img_g_ref[...], img_beta_ref[...]) * SCALING      # (B*S, HIDDEN)
    x_txt = project(txt_ref[...], txt_w_ref[...], txt_b_ref[...],
                    txt_g_ref[...], txt_beta_ref[...]) * SCALING      # (B*S, HIDDEN)

    # All heads' Q|K|V in ONE matmul per modality (block-diagonal packed weights).
    #   img_qkv cols [0:H)   : Q for image->text heads        (H == HIDDEN)
    #                [H:2H)  : K for text->image heads
    #                [2H:3H) : V for text->image heads
    #   txt_qkv cols [0:H) Q_t2i, [H:2H) K_i2t, [2H:3H) V_i2t
    img_qkv = jnp.dot(x_img, wqkv_img_ref[...], preferred_element_type=f32) + bqkv_img_ref[...]
    txt_qkv = jnp.dot(x_txt, wqkv_txt_ref[...], preferred_element_type=f32) + bqkv_txt_ref[...]

    dn = (((1,), (1,)), ((), ()))   # contract last dims: q @ k^T without a transpose

    def attend(q, k, v, wo, bo):
        s = jax.lax.dot_general(q * MHA_SCALE, k, dimension_numbers=dn,
                                preferred_element_type=f32)            # (S, S)
        s = s - jnp.max(s, axis=-1, keepdims=True)
        p = jnp.exp(s)
        p = p * pl.reciprocal(jnp.sum(p, axis=-1, keepdims=True), approx=True)
        ctx = jnp.dot(p, v, preferred_element_type=f32)                # (S, head_dim)
        return jnp.dot(ctx, wo, preferred_element_type=f32) + bo

    inv_2hd = 1.0 / (2 * HEAD_DIM)
    # Fully unrolled over (head, batch): all B*H attentions happen inside ONE grid step.
    for h in range(NUM_HEADS):
        c0, c1 = h * HEAD_DIM, (h + 1) * HEAD_DIM
        wo_i = wo_i2t_ref[c0:c1, :]
        bo_i = bo_i2t_ref[h:h + 1, :]
        wo_t = wo_t2i_ref[c0:c1, :]
        bo_t = bo_t2i_ref[h:h + 1, :]
        g1 = hn_g_ref[h:h + 1, 0:HEAD_DIM]
        g2 = hn_g_ref[h:h + 1, HEAD_DIM:2 * HEAD_DIM]
        be1 = hn_b_ref[h:h + 1, 0:HEAD_DIM]
        be2 = hn_b_ref[h:h + 1, HEAD_DIM:2 * HEAD_DIM]
        for b in range(B):
            r0, r1 = b * S, (b + 1) * S
            q_i = img_qkv[r0:r1, c0:c1]
            k_i = txt_qkv[r0:r1, HIDDEN + c0:HIDDEN + c1]
            v_i = txt_qkv[r0:r1, 2 * HIDDEN + c0:2 * HIDDEN + c1]
            q_t = txt_qkv[r0:r1, c0:c1]
            k_t = img_qkv[r0:r1, HIDDEN + c0:HIDDEN + c1]
            v_t = img_qkv[r0:r1, 2 * HIDDEN + c0:2 * HIDDEN + c1]

            # residual with the (scaled) query, as in the torch forward
            i2t = x_img[r0:r1, c0:c1] + attend(q_i, k_i, v_i, wo_i, bo_i)
            t2i = x_txt[r0:r1, c0:c1] + attend(q_t, k_t, v_t, wo_t, bo_t)

            # LayerNorm over the virtual concat [i2t | t2i] without materializing it.
            mean = (jnp.sum(i2t, axis=-1, keepdims=True)
                    + jnp.sum(t2i, axis=-1, keepdims=True)) * inv_2hd
            ci = i2t - mean
            ct = t2i - mean
            var = (jnp.sum(ci * ci, axis=-1, keepdims=True)
                   + jnp.sum(ct * ct, axis=-1, keepdims=True)) * inv_2hd
            inv = jax.lax.rsqrt(var + LN_EPS)
            o0 = h * 2 * HEAD_DIM
            out_ref[r0:r1, o0:o0 + HEAD_DIM] = ci * inv * g1 + be1
            out_ref[r0:r1, o0 + HEAD_DIM:o0 + 2 * HEAD_DIM] = ct * inv * g2 + be2


# ------------------------- wrapper -------------------------
def _full_spec(shape):
    zeros = (0,) * len(shape)
    return pl.BlockSpec(shape, lambda *_: zeros)


@jax.jit
def multi_head_cross_attention(image_features, text_features, pp):
    Bb, Ss, _ = image_features.shape
    img2d = image_features.reshape(Bb * Ss, IMG_DIM)
    txt2d = text_features.reshape(Bb * Ss, TXT_DIM)
    args = (img2d, txt2d,
            pp["img_w"], pp["img_b"], pp["img_g"], pp["img_beta"],
            pp["txt_w"], pp["txt_b"], pp["txt_g"], pp["txt_beta"],
            pp["wqkv_img"], pp["bqkv_img"], pp["wqkv_txt"], pp["bqkv_txt"],
            pp["wo_i2t"], pp["bo_i2t"], pp["wo_t2i"], pp["bo_t2i"],
            pp["hn_g"], pp["hn_b"])
    out2d_shape = (Bb * Ss, NUM_HEADS * 2 * HEAD_DIM)                  # lane-dense (16, 64)
    out2d = pl.pallas_call(
        fused_kernel,
        out_shape=jax.ShapeDtypeStruct(out2d_shape, jnp.float32),
        grid=(1,),
        in_specs=[_full_spec(a.shape) for a in args],
        out_specs=_full_spec(out2d_shape),
        compiler_params=pltpu.CompilerParams(dimension_semantics=("arbitrary",)),
    )(*args)
    # cheap XLA layout plumbing back to the torch output layout (B, H, S, 2*head_dim)
    return out2d.reshape(Bb, Ss, NUM_HEADS, 2 * HEAD_DIM).transpose(0, 2, 1, 3)


# ------------------------- one-time parameter repacking -------------------------
def _block_diag(mats):
    # mats: (H, d, d) -> (H*d, H*d) block-diagonal
    Hh, d, _ = mats.shape
    out = jnp.zeros((Hh * d, Hh * d), mats.dtype)
    for h in range(Hh):
        out = out.at[h * d:(h + 1) * d, h * d:(h + 1) * d].set(mats[h])
    return out


def pack_params(p):
    """Repack raw per-head weights into the fused layouts the kernel expects."""
    wq_i2t, wk_i2t, wv_i2t, wo_i2t = (p["w_i2t"][:, j] for j in range(4))
    bq_i2t, bk_i2t, bv_i2t, bo_i2t = (p["b_i2t"][:, j] for j in range(4))
    wq_t2i, wk_t2i, wv_t2i, wo_t2i = (p["w_t2i"][:, j] for j in range(4))
    bq_t2i, bk_t2i, bv_t2i, bo_t2i = (p["b_t2i"][:, j] for j in range(4))

    return {
        "img_w": p["img_w"], "img_b": p["img_b"].reshape(1, -1),
        "img_g": p["img_g"].reshape(1, -1), "img_beta": p["img_beta"].reshape(1, -1),
        "txt_w": p["txt_w"], "txt_b": p["txt_b"].reshape(1, -1),
        "txt_g": p["txt_g"].reshape(1, -1), "txt_beta": p["txt_beta"].reshape(1, -1),
        # image features feed: Q of image->text heads, K and V of text->image heads
        "wqkv_img": jnp.concatenate(
            [_block_diag(wq_i2t), _block_diag(wk_t2i), _block_diag(wv_t2i)], axis=1),
        "bqkv_img": jnp.concatenate(
            [bq_i2t.reshape(-1), bk_t2i.reshape(-1), bv_t2i.reshape(-1)]).reshape(1, -1),
        # text features feed: Q of text->image heads, K and V of image->text heads
        "wqkv_txt": jnp.concatenate(
            [_block_diag(wq_t2i), _block_diag(wk_i2t), _block_diag(wv_i2t)], axis=1),
        "bqkv_txt": jnp.concatenate(
            [bq_t2i.reshape(-1), bk_i2t.reshape(-1), bv_i2t.reshape(-1)]).reshape(1, -1),
        "wo_i2t": wo_i2t.reshape(NUM_HEADS * HEAD_DIM, HEAD_DIM),
        "bo_i2t": bo_i2t,                                            # (H, head_dim)
        "wo_t2i": wo_t2i.reshape(NUM_HEADS * HEAD_DIM, HEAD_DIM),
        "bo_t2i": bo_t2i,
        "hn_g": p["hn_g"].reshape(NUM_HEADS, 2 * HEAD_DIM),
        "hn_b": p["hn_b"].reshape(NUM_HEADS, 2 * HEAD_DIM),
    }


# ------------------------- deterministic parameter init -------------------------
def init_params(key):
    ks = jax.random.split(key, 16)
    p = {}
    p["img_w"] = 0.2 * jax.random.normal(ks[0], (IMG_DIM, HIDDEN), jnp.float32)
    p["img_b"] = 0.05 * jax.random.normal(ks[1], (HIDDEN,), jnp.float32)
    p["img_g"] = 1.0 + 0.1 * jax.random.normal(ks[2], (HIDDEN,), jnp.float32)
    p["img_beta"] = 0.05 * jax.random.normal(ks[3], (HIDDEN,), jnp.float32)
    p["txt_w"] = 0.2 * jax.random.normal(ks[4], (TXT_DIM, HIDDEN), jnp.float32)
    p["txt_b"] = 0.05 * jax.random.normal(ks[5], (HIDDEN,), jnp.float32)
    p["txt_g"] = 1.0 + 0.1 * jax.random.normal(ks[6], (HIDDEN,), jnp.float32)
    p["txt_beta"] = 0.05 * jax.random.normal(ks[7], (HIDDEN,), jnp.float32)
    # per-head attention weights: slot 0..3 = Wq, Wk, Wv, Wout (stored (in, out))
    p["w_i2t"] = 0.3 * jax.random.normal(ks[8], (NUM_HEADS, 4, HEAD_DIM, HEAD_DIM), jnp.float32)
    p["b_i2t"] = 0.05 * jax.random.normal(ks[9], (NUM_HEADS, 4, HEAD_DIM), jnp.float32)
    p["w_t2i"] = 0.3 * jax.random.normal(ks[10], (NUM_HEADS, 4, HEAD_DIM, HEAD_DIM), jnp.float32)
    p["b_t2i"] = 0.05 * jax.random.normal(ks[11], (NUM_HEADS, 4, HEAD_DIM), jnp.float32)
    p["hn_g"] = 1.0 + 0.1 * jax.random.normal(ks[12], (NUM_HEADS, 1, 2 * HEAD_DIM), jnp.float32)
    p["hn_b"] = 0.05 * jax.random.normal(ks[13], (NUM_HEADS, 1, 2 * HEAD_DIM), jnp.float32)
    return p


# ------------------------- pure-JAX reference (mirrors the torch forward) -------------------------
def reference_forward(image_features, text_features, p):
    def proj(x, w, b, g, beta):
        y = x @ w + b
        mean = y.mean(-1, keepdims=True)
        var = ((y - mean) ** 2).mean(-1, keepdims=True)
        ln = (y - mean) / jnp.sqrt(var + LN_EPS) * g + beta
        nrm = jnp.sqrt((ln * ln).sum(-1, keepdims=True))
        return ln / jnp.maximum(nrm, L2_EPS)

    ip = proj(image_features, p["img_w"], p["img_b"], p["img_g"], p["img_beta"])
    tp = proj(text_features, p["txt_w"], p["txt_b"], p["txt_g"], p["txt_beta"])
    ih = ip.reshape(B, S, NUM_HEADS, HEAD_DIM).transpose(0, 2, 1, 3)
    th = tp.reshape(B, S, NUM_HEADS, HEAD_DIM).transpose(0, 2, 1, 3)

    def mha(q_in, kv_in, w, b):
        q = q_in @ w[0] + b[0]
        k = kv_in @ w[1] + b[1]
        v = kv_in @ w[2] + b[2]
        s = jnp.einsum("bqd,bkd->bqk", q * MHA_SCALE, k)
        a = jax.nn.softmax(s, axis=-1)
        return jnp.einsum("bqk,bkd->bqd", a, v) @ w[3] + b[3]

    outs = []
    for h in range(NUM_HEADS):
        ci = ih[:, h] * SCALING
        ct = th[:, h] * SCALING
        i2t = ci + mha(ci, ct, p["w_i2t"][h], p["b_i2t"][h])
        t2i = ct + mha(ct, ci, p["w_t2i"][h], p["b_t2i"][h])
        comb = jnp.concatenate([i2t, t2i], axis=-1)
        mean = comb.mean(-1, keepdims=True)
        var = ((comb - mean) ** 2).mean(-1, keepdims=True)
        outs.append((comb - mean) / jnp.sqrt(var + LN_EPS) * p["hn_g"][h, 0] + p["hn_b"][h, 0])
    return jnp.stack(outs, axis=1)


# ------------------------- main -------------------------
if __name__ == "__main__":
    key = jax.random.PRNGKey(0)
    k_img, k_txt, k_par = jax.random.split(key, 3)
    image_features = jax.random.normal(k_img, (B, S, IMG_DIM), jnp.float32)
    text_features = jax.random.normal(k_txt, (B, S, TXT_DIM), jnp.float32)
    params = init_params(k_par)
    packed = pack_params(params)

    out = multi_head_cross_attention(image_features, text_features, packed)
    out = jax.block_until_ready(out)

    ref = reference_forward(image_features, text_features, params)
    assert out.shape == (B, NUM_HEADS, S, 2 * HEAD_DIM), out.shape
    assert np.allclose(np.asarray(out), np.asarray(ref), atol=2e-2, rtol=2e-2), \
        float(np.max(np.abs(np.asarray(out) - np.asarray(ref))))

    print("KERNEL_OK")
</pallas_src>

<mosaic_0001>
module attributes {stable_mosaic.version = 11 : i64} {
  func.func @fused_kernel(%arg0: i32, %arg1: memref<16x16xf32, #tpu.memory_space<vmem>>, %arg2: memref<16x24xf32, #tpu.memory_space<vmem>>, %arg3: memref<16x32xf32, #tpu.memory_space<vmem>>, %arg4: memref<1x32xf32, #tpu.memory_space<vmem>>, %arg5: memref<1x32xf32, #tpu.memory_space<vmem>>, %arg6: memref<1x32xf32, #tpu.memory_space<vmem>>, %arg7: memref<24x32xf32, #tpu.memory_space<vmem>>, %arg8: memref<1x32xf32, #tpu.memory_space<vmem>>, %arg9: memref<1x32xf32, #tpu.memory_space<vmem>>, %arg10: memref<1x32xf32, #tpu.memory_space<vmem>>, %arg11: memref<32x96xf32, #tpu.memory_space<vmem>>, %arg12: memref<1x96xf32, #tpu.memory_space<vmem>>, %arg13: memref<32x96xf32, #tpu.memory_space<vmem>>, %arg14: memref<1x96xf32, #tpu.memory_space<vmem>>, %arg15: memref<32x8xf32, #tpu.memory_space<vmem>>, %arg16: memref<4x8xf32, #tpu.memory_space<vmem>>, %arg17: memref<32x8xf32, #tpu.memory_space<vmem>>, %arg18: memref<4x8xf32, #tpu.memory_space<vmem>>, %arg19: memref<4x16xf32, #tpu.memory_space<vmem>>, %arg20: memref<4x16xf32, #tpu.memory_space<vmem>>, %arg21: memref<16x64xf32, #tpu.memory_space<vmem>>) attributes {dimension_semantics = [#tpu.dimension_semantics<arbitrary>], iteration_bounds = array<i64: 1>, scalar_prefetch = 0 : i64, scratch_operands = 0 : i64, tpu.core_type = #tpu.core_type<tc>, window_params = [{pipeline_mode = #tpu.pipeline_mode<synchronous>, transform_indices = @transform_0, window_bounds = array<i64: 16, 16>}, {pipeline_mode = #tpu.pipeline_mode<synchronous>, transform_indices = @transform_1, window_bounds = array<i64: 16, 24>}, {pipeline_mode = #tpu.pipeline_mode<synchronous>, transform_indices = @transform_2, window_bounds = array<i64: 16, 32>}, {pipeline_mode = #tpu.pipeline_mode<synchronous>, transform_indices = @transform_3, window_bounds = array<i64: 1, 32>}, {pipeline_mode = #tpu.pipeline_mode<synchronous>, transform_indices = @transform_4, window_bounds = array<i64: 1, 32>}, {pipeline_mode = #tpu.pipeline_mode<synchronous>, transform_indices = @transform_5, window_bounds = array<i64: 1, 32>}, {pipeline_mode = #tpu.pipeline_mode<synchronous>, transform_indices = @transform_6, window_bounds = array<i64: 24, 32>}, {pipeline_mode = #tpu.pipeline_mode<synchronous>, transform_indices = @transform_7, window_bounds = array<i64: 1, 32>}, {pipeline_mode = #tpu.pipeline_mode<synchronous>, transform_indices = @transform_8, window_bounds = array<i64: 1, 32>}, {pipeline_mode = #tpu.pipeline_mode<synchronous>, transform_indices = @transform_9, window_bounds = array<i64: 1, 32>}, {pipeline_mode = #tpu.pipeline_mode<synchronous>, transform_indices = @transform_10, window_bounds = array<i64: 32, 96>}, {pipeline_mode = #tpu.pipeline_mode<synchronous>, transform_indices = @transform_11, window_bounds = array<i64: 1, 96>}, {pipeline_mode = #tpu.pipeline_mode<synchronous>, transform_indices = @transform_12, window_bounds = array<i64: 32, 96>}, {pipeline_mode = #tpu.pipeline_mode<synchronous>, transform_indices = @transform_13, window_bounds = array<i64: 1, 96>}, {pipeline_mode = #tpu.pipeline_mode<synchronous>, transform_indices = @transform_14, window_bounds = array<i64: 32, 8>}, {pipeline_mode = #tpu.pipeline_mode<synchronous>, transform_indices = @transform_15, window_bounds = array<i64: 4, 8>}, {pipeline_mode = #tpu.pipeline_mode<synchronous>, transform_indices = @transform_16, window_bounds = array<i64: 32, 8>}, {pipeline_mode = #tpu.pipeline_mode<synchronous>, transform_indices = @transform_17, window_bounds = array<i64: 4, 8>}, {pipeline_mode = #tpu.pipeline_mode<synchronous>, transform_indices = @transform_18, window_bounds = array<i64: 4, 16>}, {pipeline_mode = #tpu.pipeline_mode<synchronous>, transform_indices = @transform_19, window_bounds = array<i64: 4, 16>}, {pipeline_mode = #tpu.pipeline_mode<synchronous>, transform_indices = @transform_20, window_bounds = array<i64: 16, 64>}]} {
    %c0 = arith.constant 0 : index
    %c0_0 = arith.constant 0 : index
    %0 = vector.load %arg1[%c0, %c0_0] : memref<16x16xf32, #tpu.memory_space<vmem>>, vector<16x16xf32>
    %c0_1 = arith.constant 0 : index
    %c0_2 = arith.constant 0 : index
    %1 = vector.load %arg3[%c0_1, %c0_2] : memref<16x32xf32, #tpu.memory_space<vmem>>, vector<16x32xf32>
    %c0_3 = arith.constant 0 : index
    %c0_4 = arith.constant 0 : index
    %2 = vector.load %arg4[%c0_3, %c0_4] : memref<1x32xf32, #tpu.memory_space<vmem>>, vector<1x32xf32>
    %c0_5 = arith.constant 0 : index
    %c0_6 = arith.constant 0 : index
    %3 = vector.load %arg5[%c0_5, %c0_6] : memref<1x32xf32, #tpu.memory_space<vmem>>, vector<1x32xf32>
    %c0_7 = arith.constant 0 : index
    %c0_8 = arith.constant 0 : index
    %4 = vector.load %arg6[%c0_7, %c0_8] : memref<1x32xf32, #tpu.memory_space<vmem>>, vector<1x32xf32>
    %cst = arith.constant dense<0.000000e+00> : vector<16x32xf32>
    %5 = tpu.matmul %0, %1, %cst {dimension_numbers = #tpu.dot_dimension_numbers<[1], [0], [0], [1], [0, 0, 1, 1], [], []>} : vector<16x16xf32>, vector<16x32xf32>, vector<16x32xf32> -> vector<16x32xf32>
    %6 = vector.broadcast %2 : vector<1x32xf32> to vector<16x32xf32>
    %7 = arith.addf %5, %6 : vector<16x32xf32>
    %cst_9 = arith.constant dense<0.000000e+00> : vector<16xf32>
    %8 = vector.multi_reduction <add>, %7, %cst_9 [1] : vector<16x32xf32> to vector<16xf32>
    %9 = vector.shape_cast %8 : vector<16xf32> to vector<16x1xf32>
    %cst_10 = arith.constant 3.200000e+01 : f32
    %10 = vector.broadcast %cst_10 : f32 to vector<16x1xf32>
    %11 = arith.divf %9, %10 : vector<16x1xf32>
    %12 = vector.broadcast %11 : vector<16x1xf32> to vector<16x32xf32>
    %13 = arith.subf %7, %12 : vector<16x32xf32>
    %14 = arith.mulf %13, %13 : vector<16x32xf32>
    %cst_11 = arith.constant dense<0.000000e+00> : vector<16xf32>
    %15 = vector.multi_reduction <add>, %14, %cst_11 [1] : vector<16x32xf32> to vector<16xf32>
    %16 = vector.shape_cast %15 : vector<16xf32> to vector<16x1xf32>
    %cst_12 = arith.constant 3.200000e+01 : f32
    %17 = vector.broadcast %cst_12 : f32 to vector<16x1xf32>
    %18 = arith.divf %16, %17 : vector<16x1xf32>
    %cst_13 = arith.constant 9.99999974E-6 : f32
    %19 = vector.broadcast %cst_13 : f32 to vector<16x1xf32>
    %20 = arith.addf %18, %19 : vector<16x1xf32>
    %21 = math.rsqrt %20 : vector<16x1xf32>
    %22 = vector.broadcast %21 : vector<16x1xf32> to vector<16x32xf32>
    %23 = arith.mulf %13, %22 : vector<16x32xf32>
    %24 = vector.broadcast %3 : vector<1x32xf32> to vector<16x32xf32>
    %25 = arith.mulf %23, %24 : vector<16x32xf32>
    %26 = vector.broadcast %4 : vector<1x32xf32> to vector<16x32xf32>
    %27 = arith.addf %25, %26 : vector<16x32xf32>
    %28 = arith.mulf %27, %27 : vector<16x32xf32>
    %cst_14 = arith.constant dense<0.000000e+00> : vector<16xf32>
    %29 = vector.multi_reduction <add>, %28, %cst_14 [1] : vector<16x32xf32> to vector<16xf32>
    %30 = vector.shape_cast %29 : vector<16xf32> to vector<16x1xf32>
    %31 = math.sqrt %30 : vector<16x1xf32>
    %cst_15 = arith.constant 9.99999996E-13 : f32
    %32 = vector.broadcast %cst_15 : f32 to vector<16x1xf32>
    %33 = arith.maximumf %31, %32 : vector<16x1xf32>
    %34 = tpu.reciprocal %33 {approx = true} : vector<16x1xf32> -> vector<16x1xf32>
    %35 = vector.broadcast %34 : vector<16x1xf32> to vector<16x32xf32>
    %36 = arith.mulf %27, %35 : vector<16x32xf32>
    %cst_16 = arith.constant 0.353553385 : f32
    %37 = vector.broadcast %cst_16 : f32 to vector<16x32xf32>
    %38 = arith.mulf %36, %37 : vector<16x32xf32>
    %c0_17 = arith.constant 0 : index
    %c0_18 = arith.constant 0 : index
    %39 = vector.load %arg2[%c0_17, %c0_18] : memref<16x24xf32, #tpu.memory_space<vmem>>, vector<16x24xf32>
    %c0_19 = arith.constant 0 : index
    %c0_20 = arith.constant 0 : index
    %40 = vector.load %arg7[%c0_19, %c0_20] : memref<24x32xf32, #tpu.memory_space<vmem>>, vector<24x32xf32>
    %c0_21 = arith.constant 0 : index
    %c0_22 = arith.constant 0 : index
    %41 = vector.load %arg8[%c0_21, %c0_22] : memref<1x32xf32, #tpu.memory_space<vmem>>, vector<1x32xf32>
    %c0_23 = arith.constant 0 : index
    %c0_24 = arith.constant 0 : index
    %42 = vector.load %arg9[%c0_23, %c0_24] : memref<1x32xf32, #tpu.memory_space<vmem>>, vector<1x32xf32>
    %c0_25 = arith.constant 0 : index
    %c0_26 = arith.constant 0 : index
    %43 = vector.load %arg10[%c0_25, %c0_26] : memref<1x32xf32, #tpu.memory_space<vmem>>, vector<1x32xf32>
    %cst_27 = arith.constant dense<0.000000e+00> : vector<16x32xf32>
    %44 = tpu.matmul %39, %40, %cst_27 {dimension_numbers = #tpu.dot_dimension_numbers<[1], [0], [0], [1], [0, 0, 1, 1], [], []>} : vector<16x24xf32>, vector<24x32xf32>, vector<16x32xf32> -> vector<16x32xf32>
    %45 = vector.broadcast %41 : vector<1x32xf32> to vector<16x32xf32>
    %46 = arith.addf %44, %45 : vector<16x32xf32>
    %cst_28 = arith.constant dense<0.000000e+00> : vector<16xf32>
    %47 = vector.multi_reduction <add>, %46, %cst_28 [1] : vector<16x32xf32> to vector<16xf32>
    %48 = vector.shape_cast %47 : vector<16xf32> to vector<16x1xf32>
    %cst_29 = arith.constant 3.200000e+01 : f32
    %49 = vector.broadcast %cst_29 : f32 to vector<16x1xf32>
    %50 = arith.divf %48, %49 : vector<16x1xf32>
    %51 = vector.broadcast %50 : vector<16x1xf32> to vector<16x32xf32>
    %52 = arith.subf %46, %51 : vector<16x32xf32>
    %53 = arith.mulf %52, %52 : vector<16x32xf32>
    %cst_30 = arith.constant dense<0.000000e+00> : vector<16xf32>
    %54 = vector.multi_reduction <add>, %53, %cst_30 [1] : vector<16x32xf32> to vector<16xf32>
    %55 = vector.shape_cast %54 : vector<16xf32> to vector<16x1xf32>
    %cst_31 = arith.constant 3.200000e+01 : f32
    %56 = vector.broadcast %cst_31 : f32 to vector<16x1xf32>
    %57 = arith.divf %55, %56 : vector<16x1xf32>
    %cst_32 = arith.constant 9.99999974E-6 : f32
    %58 = vector.broadcast %cst_32 : f32 to vector<16x1xf32>
    %59 = arith.addf %57, %58 : vector<16x1xf32>
    %60 = math.rsqrt %59 : vector<16x1xf32>
    %61 = vector.broadcast %60 : vector<16x1xf32> to vector<16x32xf32>
    %62 = arith.mulf %52, %61 : vector<16x32xf32>
    %63 = vector.broadcast %42 : vector<1x32xf32> to vector<16x32xf32>
    %64 = arith.mulf %62, %63 : vector<16x32xf32>
    %65 = vector.broadcast %43 : vector<1x32xf32> to vector<16x32xf32>
    %66 = arith.addf %64, %65 : vector<16x32xf32>
    %67 = arith.mulf %66, %66 : vector<16x32xf32>
    %cst_33 = arith.constant dense<0.000000e+00> : vector<16xf32>
    %68 = vector.multi_reduction <add>, %67, %cst_33 [1] : vector<16x32xf32> to vector<16xf32>
    %69 = vector.shape_cast %68 : vector<16xf32> to vector<16x1xf32>
    %70 = math.sqrt %69 : vector<16x1xf32>
    %cst_34 = arith.constant 9.99999996E-13 : f32
    %71 = vector.broadcast %cst_34 : f32 to vector<16x1xf32>
    %72 = arith.maximumf %70, %71 : vector<16x1xf32>
    %73 = tpu.reciprocal %72 {approx = true} : vector<16x1xf32> -> vector<16x1xf32>
    %74 = vector.broadcast %73 : vector<16x1xf32> to vector<16x32xf32>
    %75 = arith.mulf %66, %74 : vector<16x32xf32>
    %cst_35 = arith.constant 0.353553385 : f32
    %76 = vector.broadcast %cst_35 : f32 to vector<16x32xf32>
    %77 = arith.mulf %75, %76 : vector<16x32xf32>
    %c0_36 = arith.constant 0 : index
    %c0_37 = arith.constant 0 : index
    %78 = vector.load %arg11[%c0_36, %c0_37] : memref<32x96xf32, #tpu.memory_space<vmem>>, vector<32x96xf32>
    %cst_38 = arith.constant dense<0.000000e+00> : vector<16x96xf32>
    %79 = tpu.matmul %38, %78, %cst_38 {dimension_numbers = #tpu.dot_dimension_numbers<[1], [0], [0], [1], [0, 0, 1, 1], [], []>} : vector<16x32xf32>, vector<32x96xf32>, vector<16x96xf32> -> vector<16x96xf32>
    %c0_39 = arith.constant 0 : index
    %c0_40 = arith.constant 0 : index
    %80 = vector.load %arg12[%c0_39, %c0_40] : memref<1x96xf32, #tpu.memory_space<vmem>>, vector<1x96xf32>
    %81 = vector.broadcast %80 : vector<1x96xf32> to vector<16x96xf32>
    %82 = arith.addf %79, %81 : vector<16x96xf32>
    %c0_41 = arith.constant 0 : index
    %c0_42 = arith.constant 0 : index
    %83 = vector.load %arg13[%c0_41, %c0_42] : memref<32x96xf32, #tpu.memory_space<vmem>>, vector<32x96xf32>
    %cst_43 = arith.constant dense<0.000000e+00> : vector<16x96xf32>
    %84 = tpu.matmul %77, %83, %cst_43 {dimension_numbers = #tpu.dot_dimension_numbers<[1], [0], [0], [1], [0, 0, 1, 1], [], []>} : vector<16x32xf32>, vector<32x96xf32>, vector<16x96xf32> -> vector<16x96xf32>
    %c0_44 = arith.constant 0 : index
    %c0_45 = arith.constant 0 : index
    %85 = vector.load %arg14[%c0_44, %c0_45] : memref<1x96xf32, #tpu.memory_space<vmem>>, vector<1x96xf32>
    %86 = vector.broadcast %85 : vector<1x96xf32> to vector<16x96xf32>
    %87 = arith.addf %84, %86 : vector<16x96xf32>
    %c0_46 = arith.constant 0 : index
    %c0_47 = arith.constant 0 : index
    %88 = vector.load %arg15[%c0_46, %c0_47] : memref<32x8xf32, #tpu.memory_space<vmem>>, vector<8x8xf32>
    %c0_48 = arith.constant 0 : index
    %c0_49 = arith.constant 0 : index
    %89 = vector.load %arg16[%c0_48, %c0_49] : memref<4x8xf32, #tpu.memory_space<vmem>>, vector<1x8xf32>
    %c0_50 = arith.constant 0 : index
    %c0_51 = arith.constant 0 : index
    %90 = vector.load %arg17[%c0_50, %c0_51] : memref<32x8xf32, #tpu.memory_space<vmem>>, vector<8x8xf32>
    %c0_52 = arith.constant 0 : index
    %c0_53 = arith.constant 0 : index
    %91 = vector.load %arg18[%c0_52, %c0_53] : memref<4x8xf32, #tpu.memory_space<vmem>>, vector<1x8xf32>
    %c0_54 = arith.constant 0 : index
    %c0_55 = arith.constant 0 : index
    %92 = vector.load %arg19[%c0_54, %c0_55] : memref<4x16xf32, #tpu.memory_space<vmem>>, vector<1x8xf32>
    %c0_56 = arith.constant 0 : index
    %c8 = arith.constant 8 : index
    %93 = vector.load %arg19[%c0_56, %c8] : memref<4x16xf32, #tpu.memory_space<vmem>>, vector<1x8xf32>
    %c0_57 = arith.constant 0 : index
    %c0_58 = arith.constant 0 : index
    %94 = vector.load %arg20[%c0_57, %c0_58] : memref<4x16xf32, #tpu.memory_space<vmem>>, vector<1x8xf32>
    %c0_59 = arith.constant 0 : index
    %c8_60 = arith.constant 8 : index
    %95 = vector.load %arg20[%c0_59, %c8_60] : memref<4x16xf32, #tpu.memory_space<vmem>>, vector<1x8xf32>
    %96 = vector.extract_strided_slice %82 {offsets = [0, 0], sizes = [8, 8], strides = [1, 1]} : vector<16x96xf32> to vector<8x8xf32>
    %97 = vector.extract_strided_slice %87 {offsets = [0, 32], sizes = [8, 8], strides = [1, 1]} : vector<16x96xf32> to vector<8x8xf32>
    %98 = vector.extract_strided_slice %87 {offsets = [0, 64], sizes = [8, 8], strides = [1, 1]} : vector<16x96xf32> to vector<8x8xf32>
    %99 = vector.extract_strided_slice %87 {offsets = [0, 0], sizes = [8, 8], strides = [1, 1]} : vector<16x96xf32> to vector<8x8xf32>
    %100 = vector.extract_strided_slice %82 {offsets = [0, 32], sizes = [8, 8], strides = [1, 1]} : vector<16x96xf32> to vector<8x8xf32>
    %101 = vector.extract_strided_slice %82 {offsets = [0, 64], sizes = [8, 8], strides = [1, 1]} : vector<16x96xf32> to vector<8x8xf32>
    %102 = vector.extract_strided_slice %38 {offsets = [0, 0], sizes = [8, 8], strides = [1, 1]} : vector<16x32xf32> to vector<8x8xf32>
    %cst_61 = arith.constant 0.353553385 : f32
    %103 = vector.broadcast %cst_61 : f32 to vector<8x8xf32>
    %104 = arith.mulf %96, %103 : vector<8x8xf32>
    %cst_62 = arith.constant dense<0.000000e+00> : vector<8x8xf32>
    %105 = tpu.matmul %104, %97, %cst_62 {dimension_numbers = #tpu.dot_dimension_numbers<[1], [1], [0], [0], [0, 0, 1, 0], [], []>} : vector<8x8xf32>, vector<8x8xf32>, vector<8x8xf32> -> vector<8x8xf32>
    %cst_63 = arith.constant dense<0xFF800000> : vector<8xf32>
    %106 = vector.multi_reduction <maximumf>, %105, %cst_63 [1] : vector<8x8xf32> to vector<8xf32>
    %107 = vector.shape_cast %106 : vector<8xf32> to vector<8x1xf32>
    %108 = vector.broadcast %107 : vector<8x1xf32> to vector<8x8xf32>
    %109 = arith.subf %105, %108 : vector<8x8xf32>
    %110 = math.exp %109 : vector<8x8xf32>
    %cst_64 = arith.constant dense<0.000000e+00> : vector<8xf32>
    %111 = vector.multi_reduction <add>, %110, %cst_64 [1] : vector<8x8xf32> to vector<8xf32>
    %112 = vector.shape_cast %111 : vector<8xf32> to vector<8x1xf32>
    %113 = tpu.reciprocal %112 {approx = true} : vector<8x1xf32> -> vector<8x1xf32>
    %114 = vector.broadcast %113 : vector<8x1xf32> to vector<8x8xf32>
    %115 = arith.mulf %110, %114 : vector<8x8xf32>
    %cst_65 = arith.constant dense<0.000000e+00> : vector<8x8xf32>
    %116 = tpu.matmul %115, %98, %cst_65 {dimension_numbers = #tpu.dot_dimension_numbers<[1], [0], [0], [1], [0, 0, 1, 1], [], []>} : vector<8x8xf32>, vector<8x8xf32>, vector<8x8xf32> -> vector<8x8xf32>
    %cst_66 = arith.constant dense<0.000000e+00> : vector<8x8xf32>
    %117 = tpu.matmul %116, %88, %cst_66 {dimension_numbers = #tpu.dot_dimension_numbers<[1], [0], [0], [1], [0, 0, 1, 1], [], []>} : vector<8x8xf32>, vector<8x8xf32>, vector<8x8xf32> -> vector<8x8xf32>
    %118 = vector.broadcast %89 : vector<1x8xf32> to vector<8x8xf32>
    %119 = arith.addf %117, %118 : vector<8x8xf32>
    %120 = arith.addf %102, %119 : vector<8x8xf32>
    %121 = vector.extract_strided_slice %77 {offsets = [0, 0], sizes = [8, 8], strides = [1, 1]} : vector<16x32xf32> to vector<8x8xf32>
    %cst_67 = arith.constant 0.353553385 : f32
    %122 = vector.broadcast %cst_67 : f32 to vector<8x8xf32>
    %123 = arith.mulf %99, %122 : vector<8x8xf32>
    %cst_68 = arith.constant dense<0.000000e+00> : vector<8x8xf32>
    %124 = tpu.matmul %123, %100, %cst_68 {dimension_numbers = #tpu.dot_dimension_numbers<[1], [1], [0], [0], [0, 0, 1, 0], [], []>} : vector<8x8xf32>, vector<8x8xf32>, vector<8x8xf32> -> vector<8x8xf32>
    %cst_69 = arith.constant dense<0xFF800000> : vector<8xf32>
    %125 = vector.multi_reduction <maximumf>, %124, %cst_69 [1] : vector<8x8xf32> to vector<8xf32>
    %126 = vector.shape_cast %125 : vector<8xf32> to vector<8x1xf32>
    %127 = vector.broadcast %126 : vector<8x1xf32> to vector<8x8xf32>
    %128 = arith.subf %124, %127 : vector<8x8xf32>
    %129 = math.exp %128 : vector<8x8xf32>
    %cst_70 = arith.constant dense<0.000000e+00> : vector<8xf32>
    %130 = vector.multi_reduction <add>, %129, %cst_70 [1] : vector<8x8xf32> to vector<8xf32>
    %131 = vector.shape_cast %130 : vector<8xf32> to vector<8x1xf32>
    %132 = tpu.reciprocal %131 {approx = true} : vector<8x1xf32> -> vector<8x1xf32>
    %133 = vector.broadcast %132 : vector<8x1xf32> to vector<8x8xf32>
    %134 = arith.mulf %129, %133 : vector<8x8xf32>
    %cst_71 = arith.constant dense<0.000000e+00> : vector<8x8xf32>
    %135 = tpu.matmul %134, %101, %cst_71 {dimension_numbers = #tpu.dot_dimension_numbers<[1], [0], [0], [1], [0, 0, 1, 1], [], []>} : vector<8x8xf32>, vector<8x8xf32>, vector<8x8xf32> -> vector<8x8xf32>
    %cst_72 = arith.constant dense<0.000000e+00> : vector<8x8xf32>
    %136 = tpu.matmul %135, %90, %cst_72 {dimension_numbers = #tpu.dot_dimension_numbers<[1], [0], [0], [1], [0, 0, 1, 1], [], []>} : vector<8x8xf32>, vector<8x8xf32>, vector<8x8xf32> -> vector<8x8xf32>
    %137 = vector.broadcast %91 : vector<1x8xf32> to vector<8x8xf32>
    %138 = arith.addf %136, %137 : vector<8x8xf32>
    %139 = arith.addf %121, %138 : vector<8x8xf32>
    %cst_73 = arith.constant dense<0.000000e+00> : vector<8xf32>
    %140 = vector.multi_reduction <add>, %120, %cst_73 [1] : vector<8x8xf32> to vector<8xf32>
    %141 = vector.shape_cast %140 : vector<8xf32> to vector<8x1xf32>
    %cst_74 = arith.constant dense<0.000000e+00> : vector<8xf32>
    %142 = vector.multi_reduction <add>, %139, %cst_74 [1] : vector<8x8xf32> to vector<8xf32>
    %143 = vector.shape_cast %142 : vector<8xf32> to vector<8x1xf32>
    %144 = arith.addf %141, %143 : vector<8x1xf32>
    %cst_75 = arith.constant 6.250000e-02 : f32
    %145 = vector.broadcast %cst_75 : f32 to vector<8x1xf32>
    %146 = arith.mulf %144, %145 : vector<8x1xf32>
    %147 = vector.broadcast %146 : vector<8x1xf32> to vector<8x8xf32>
    %148 = arith.subf %120, %147 : vector<8x8xf32>
    %149 = vector.broadcast %146 : vector<8x1xf32> to vector<8x8xf32>
    %150 = arith.subf %139, %149 : vector<8x8xf32>
    %151 = arith.mulf %148, %148 : vector<8x8xf32>
    %cst_76 = arith.constant dense<0.000000e+00> : vector<8xf32>
    %152 = vector.multi_reduction <add>, %151, %cst_76 [1] : vector<8x8xf32> to vector<8xf32>
    %153 = vector.shape_cast %152 : vector<8xf32> to vector<8x1xf32>
    %154 = arith.mulf %150, %150 : vector<8x8xf32>
    %cst_77 = arith.constant dense<0.000000e+00> : vector<8xf32>
    %155 = vector.multi_reduction <add>, %154, %cst_77 [1] : vector<8x8xf32> to vector<8xf32>
    %156 = vector.shape_cast %155 : vector<8xf32> to vector<8x1xf32>
    %157 = arith.addf %153, %156 : vector<8x1xf32>
    %cst_78 = arith.constant 6.250000e-02 : f32
    %158 = vector.broadcast %cst_78 : f32 to vector<8x1xf32>
    %159 = arith.mulf %157, %158 : vector<8x1xf32>
    %cst_79 = arith.constant 9.99999974E-6 : f32
    %160 = vector.broadcast %cst_79 : f32 to vector<8x1xf32>
    %161 = arith.addf %159, %160 : vector<8x1xf32>
    %162 = math.rsqrt %161 : vector<8x1xf32>
    %163 = vector.broadcast %162 : vector<8x1xf32> to vector<8x8xf32>
    %164 = arith.mulf %148, %163 : vector<8x8xf32>
    %165 = vector.broadcast %92 : vector<1x8xf32> to vector<8x8xf32>
    %166 = arith.mulf %164, %165 : vector<8x8xf32>
    %167 = vector.broadcast %94 : vector<1x8xf32> to vector<8x8xf32>
    %168 = arith.addf %166, %167 : vector<8x8xf32>
    %c0_80 = arith.constant 0 : index
    %c0_81 = arith.constant 0 : index
    %169 = vector.load %arg21[%c0_80, %c0_81] : memref<16x64xf32, #tpu.memory_space<vmem>>, vector<8x8xf32>
    tpu.vector_store %arg21[%c0_80, %c0_81], %168 {strides = array<i32>} : memref<16x64xf32, #tpu.memory_space<vmem>>, vector<8x8xf32>,
    %170 = vector.broadcast %162 : vector<8x1xf32> to vector<8x8xf32>
    %171 = arith.mulf %150, %170 : vector<8x8xf32>
    %172 = vector.broadcast %93 : vector<1x8xf32> to vector<8x8xf32>
    %173 = arith.mulf %171, %172 : vector<8x8xf32>
    %174 = vector.broadcast %95 : vector<1x8xf32> to vector<8x8xf32>
    %175 = arith.addf %173, %174 : vector<8x8xf32>
    %c0_82 = arith.constant 0 : index
    %c8_83 = arith.constant 8 : index
    %176 = vector.load %arg21[%c0_82, %c8_83] : memref<16x64xf32, #tpu.memory_space<vmem>>, vector<8x8xf32>
    tpu.vector_store %arg21[%c0_82, %c8_83], %175 {strides = array<i32>} : memref<16x64xf32, #tpu.memory_space<vmem>>, vector<8x8xf32>,
    %177 = vector.extract_strided_slice %82 {offsets = [8, 0], sizes = [8, 8], strides = [1, 1]} : vector<16x96xf32> to vector<8x8xf32>
    %178 = vector.extract_strided_slice %87 {offsets = [8, 32], sizes = [8, 8], strides = [1, 1]} : vector<16x96xf32> to vector<8x8xf32>
    %179 = vector.extract_strided_slice %87 {offsets = [8, 64], sizes = [8, 8], strides = [1, 1]} : vector<16x96xf32> to vector<8x8xf32>
    %180 = vector.extract_strided_slice %87 {offsets = [8, 0], sizes = [8, 8], strides = [1, 1]} : vector<16x96xf32> to vector<8x8xf32>
    %181 = vector.extract_strided_slice %82 {offsets = [8, 32], sizes = [8, 8], strides = [1, 1]} : vector<16x96xf32> to vector<8x8xf32>
    %182 = vector.extract_strided_slice %82 {offsets = [8, 64], sizes = [8, 8], strides = [1, 1]} : vector<16x96xf32> to vector<8x8xf32>
    %183 = vector.extract_strided_slice %38 {offsets = [8, 0], sizes = [8, 8], strides = [1, 1]} : vector<16x32xf32> to vector<8x8xf32>
    %cst_84 = arith.constant 0.353553385 : f32
    %184 = vector.broadcast %cst_84 : f32 to vector<8x8xf32>
    %185 = arith.mulf %177, %184 : vector<8x8xf32>
    %cst_85 = arith.constant dense<0.000000e+00> : vector<8x8xf32>
    %186 = tpu.matmul %185, %178, %cst_85 {dimension_numbers = #tpu.dot_dimension_numbers<[1], [1], [0], [0], [0, 0, 1, 0], [], []>} : vector<8x8xf32>, vector<8x8xf32>, vector<8x8xf32> -> vector<8x8xf32>
    %cst_86 = arith.constant dense<0xFF800000> : vector<8xf32>
    %187 = vector.multi_reduction <maximumf>, %186, %cst_86 [1] : vector<8x8xf32> to vector<8xf32>
    %188 = vector.shape_cast %187 : vector<8xf32> to vector<8x1xf32>
    %189 = vector.broadcast %188 : vector<8x1xf32> to vector<8x8xf32>
    %190 = arith.subf %186, %189 : vector<8x8xf32>
    %191 = math.exp %190 : vector<8x8xf32>
    %cst_87 = arith.constant dense<0.000000e+00> : vector<8xf32>
    %192 = vector.multi_reduction <add>, %191, %cst_87 [1] : vector<8x8xf32> to vector<8xf32>
    %193 = vector.shape_cast %192 : vector<8xf32> to vector<8x1xf32>
    %194 = tpu.reciprocal %193 {approx = true} : vector<8x1xf32> -> vector<8x1xf32>
    %195 = vector.broadcast %194 : vector<8x1xf32> to vector<8x8xf32>
    %196 = arith.mulf %191, %195 : vector<8x8xf32>
    %cst_88 = arith.constant dense<0.000000e+00> : vector<8x8xf32>
    %197 = tpu.matmul %196, %179, %cst_88 {dimension_numbers = #tpu.dot_dimension_numbers<[1], [0], [0], [1], [0, 0, 1, 1], [], []>} : vector<8x8xf32>, vector<8x8xf32>, vector<8x8xf32> -> vector<8x8xf32>
    %cst_89 = arith.constant dense<0.000000e+00> : vector<8x8xf32>
    %198 = tpu.matmul %197, %88, %cst_89 {dimension_numbers = #tpu.dot_dimension_numbers<[1], [0], [0], [1], [0, 0, 1, 1], [], []>} : vector<8x8xf32>, vector<8x8xf32>, vector<8x8xf32> -> vector<8x8xf32>
    %199 = vector.broadcast %89 : vector<1x8xf32> to vector<8x8xf32>
    %200 = arith.addf %198, %199 : vector<8x8xf32>
    %201 = arith.addf %183, %200 : vector<8x8xf32>
    %202 = vector.extract_strided_slice %77 {offsets = [8, 0], sizes = [8, 8], strides = [1, 1]} : vector<16x32xf32> to vector<8x8xf32>
    %cst_90 = arith.constant 0.353553385 : f32
    %203 = vector.broadcast %cst_90 : f32 to vector<8x8xf32>
    %204 = arith.mulf %180, %203 : vector<8x8xf32>
    %cst_91 = arith.constant dense<0.000000e+00> : vector<8x8xf32>
    %205 = tpu.matmul %204, %181, %cst_91 {dimension_numbers = #tpu.dot_dimension_numbers<[1], [1], [0], [0], [0, 0, 1, 0], [], []>} : vector<8x8xf32>, vector<8x8xf32>, vector<8x8xf32> -> vector<8x8xf32>
    %cst_92 = arith.constant dense<0xFF800000> : vector<8xf32>
    %206 = vector.multi_reduction <maximumf>, %205, %cst_92 [1] : vector<8x8xf32> to vector<8xf32>
    %207 = vector.shape_cast %206 : vector<8xf32> to vector<8x1xf32>
    %208 = vector.broadcast %207 : vector<8x1xf32> to vector<8x8xf32>
    %209 = arith.subf %205, %208 : vector<8x8xf32>
    %210 = math.exp %209 : vector<8x8xf32>
    %cst_93 = arith.constant dense<0.000000e+00> : vector<8xf32>
    %211 = vector.multi_reduction <add>, %210, %cst_93 [1] : vector<8x8xf32> to vector<8xf32>
    %212 = vector.shape_cast %211 : vector<8xf32> to vector<8x1xf32>
    %213 = tpu.reciprocal %212 {approx = true} : vector<8x1xf32> -> vector<8x1xf32>
    %214 = vector.broadcast %213 : vector<8x1xf32> to vector<8x8xf32>
    %215 = arith.mulf %210, %214 : vector<8x8xf32>
    %cst_94 = arith.constant dense<0.000000e+00> : vector<8x8xf32>
    %216 = tpu.matmul %215, %182, %cst_94 {dimension_numbers = #tpu.dot_dimension_numbers<[1], [0], [0], [1], [0, 0, 1, 1], [], []>} : vector<8x8xf32>, vector<8x8xf32>, vector<8x8xf32> -> vector<8x8xf32>
    %cst_95 = arith.constant dense<0.000000e+00> : vector<8x8xf32>
    %217 = tpu.matmul %216, %90, %cst_95 {dimension_numbers = #tpu.dot_dimension_numbers<[1], [0], [0], [1], [0, 0, 1, 1], [], []>} : vector<8x8xf32>, vector<8x8xf32>, vector<8x8xf32> -> vector<8x8xf32>
    %218 = vector.broadcast %91 : vector<1x8xf32> to vector<8x8xf32>
    %219 = arith.addf %217, %218 : vector<8x8xf32>
    %220 = arith.addf %202, %219 : vector<8x8xf32>
    %cst_96 = arith.constant dense<0.000000e+00> : vector<8xf32>
    %221 = vector.multi_reduction <add>, %201, %cst_96 [1] : vector<8x8xf32> to vector<8xf32>
    %222 = vector.shape_cast %221 : vector<8xf32> to vector<8x1xf32>
    %cst_97 = arith.constant dense<0.000000e+00> : vector<8xf32>
    %223 = vector.multi_reduction <add>, %220, %cst_97 [1] : vector<8x8xf32> to vector<8xf32>
    %224 = vector.shape_cast %223 : vector<8xf32> to vector<8x1xf32>
    %225 = arith.addf %222, %224 : vector<8x1xf32>
    %cst_98 = arith.constant 6.250000e-02 : f32
    %226 = vector.broadcast %cst_98 : f32 to vector<8x1xf32>
    %227 = arith.mulf %225, %226 : vector<8x1xf32>
    %228 = vector.broadcast %227 : vector<8x1xf32> to vector<8x8xf32>
    %229 = arith.subf %201, %228 : vector<8x8xf32>
    %230 = vector.broadcast %227 : vector<8x1xf32> to vector<8x8xf32>
    %231 = arith.subf %220, %230 : vector<8x8xf32>
    %232 = arith.mulf %229, %229 : vector<8x8xf32>
    %cst_99 = arith.constant dense<0.000000e+00> : vector<8xf32>
    %233 = vector.multi_reduction <add>, %232, %cst_99 [1] : vector<8x8xf32> to vector<8xf32>
    %234 = vector.shape_cast %233 : vector<8xf32> to vector<8x1xf32>
    %235 = arith.mulf %231, %231 : vector<8x8xf32>
    %cst_100 = arith.constant dense<0.000000e+00> : vector<8xf32>
    %236 = vector.multi_reduction <add>, %235, %cst_100 [1] : vector<8x8xf32> to vector<8xf32>
    %237 = vector.shape_cast %236 : vector<8xf32> to vector<8x1xf32>
    %238 = arith.addf %234, %237 : vector<8x1xf32>
    %cst_101 = arith.constant 6.250000e-02 : f32
    %239 = vector.broadcast %cst_101 : f32 to vector<8x1xf32>
    %240 = arith.mulf %238, %239 : vector<8x1xf32>
    %cst_102 = arith.constant 9.99999974E-6 : f32
    %241 = vector.broadcast %cst_102 : f32 to vector<8x1xf32>
    %242 = arith.addf %240, %241 : vector<8x1xf32>
    %243 = math.rsqrt %242 : vector<8x1xf32>
    %244 = vector.broadcast %243 : vector<8x1xf32> to vector<8x8xf32>
    %245 = arith.mulf %229, %244 : vector<8x8xf32>
    %246 = vector.broadcast %92 : vector<1x8xf32> to vector<8x8xf32>
    %247 = arith.mulf %245, %246 : vector<8x8xf32>
    %248 = vector.broadcast %94 : vector<1x8xf32> to vector<8x8xf32>
    %249 = arith.addf %247, %248 : vector<8x8xf32>
    %c8_103 = arith.constant 8 : index
    %c0_104 = arith.constant 0 : index
    %250 = vector.load %arg21[%c8_103, %c0_104] : memref<16x64xf32, #tpu.memory_space<vmem>>, vector<8x8xf32>
    tpu.vector_store %arg21[%c8_103, %c0_104], %249 {strides = array<i32>} : memref<16x64xf32, #tpu.memory_space<vmem>>, vector<8x8xf32>,
    %251 = vector.broadcast %243 : vector<8x1xf32> to vector<8x8xf32>
    %252 = arith.mulf %231, %251 : vector<8x8xf32>
    %253 = vector.broadcast %93 : vector<1x8xf32> to vector<8x8xf32>
    %254 = arith.mulf %252, %253 : vector<8x8xf32>
    %255 = vector.broadcast %95 : vector<1x8xf32> to vector<8x8xf32>
    %256 = arith.addf %254, %255 : vector<8x8xf32>
    %c8_105 = arith.constant 8 : index
    %c8_106 = arith.constant 8 : index
    %257 = vector.load %arg21[%c8_105, %c8_106] : memref<16x64xf32, #tpu.memory_space<vmem>>, vector<8x8xf32>
    tpu.vector_store %arg21[%c8_105, %c8_106], %256 {strides = array<i32>} : memref<16x64xf32, #tpu.memory_space<vmem>>, vector<8x8xf32>,
    %c8_107 = arith.constant 8 : index
    %c0_108 = arith.constant 0 : index
    %258 = vector.load %arg15[%c8_107, %c0_108] : memref<32x8xf32, #tpu.memory_space<vmem>>, vector<8x8xf32>
    %c1 = arith.constant 1 : index
    %c0_109 = arith.constant 0 : index
    %259 = vector.load %arg16[%c1, %c0_109] : memref<4x8xf32, #tpu.memory_space<vmem>>, vector<1x8xf32>
    %c8_110 = arith.constant 8 : index
    %c0_111 = arith.constant 0 : index
    %260 = vector.load %arg17[%c8_110, %c0_111] : memref<32x8xf32, #tpu.memory_space<vmem>>, vector<8x8xf32>
    %c1_112 = arith.constant 1 : index
    %c0_113 = arith.constant 0 : index
    %261 = vector.load %arg18[%c1_112, %c0_113] : memref<4x8xf32, #tpu.memory_space<vmem>>, vector<1x8xf32>
    %c1_114 = arith.constant 1 : index
    %c0_115 = arith.constant 0 : index
    %262 = vector.load %arg19[%c1_114, %c0_115] : memref<4x16xf32, #tpu.memory_space<vmem>>, vector<1x8xf32>
    %c1_116 = arith.constant 1 : index
    %c8_117 = arith.constant 8 : index
    %263 = vector.load %arg19[%c1_116, %c8_117] : memref<4x16xf32, #tpu.memory_space<vmem>>, vector<1x8xf32>
    %c1_118 = arith.constant 1 : index
    %c0_119 = arith.constant 0 : index
    %264 = vector.load %arg20[%c1_118, %c0_119] : memref<4x16xf32, #tpu.memory_space<vmem>>, vector<1x8xf32>
    %c1_120 = arith.constant 1 : index
    %c8_121 = arith.constant 8 : index
    %265 = vector.load %arg20[%c1_120, %c8_121] : memref<4x16xf32, #tpu.memory_space<vmem>>, vector<1x8xf32>
    %266 = vector.extract_strided_slice %82 {offsets = [0, 8], sizes = [8, 8], strides = [1, 1]} : vector<16x96xf32> to vector<8x8xf32>
    %267 = vector.extract_strided_slice %87 {offsets = [0, 40], sizes = [8, 8], strides = [1, 1]} : vector<16x96xf32> to vector<8x8xf32>
    %268 = vector.extract_strided_slice %87 {offsets = [0, 72], sizes = [8, 8], strides = [1, 1]} : vector<16x96xf32> to vector<8x8xf32>
    %269 = vector.extract_strided_slice %87 {offsets = [0, 8], sizes = [8, 8], strides = [1, 1]} : vector<16x96xf32> to vector<8x8xf32>
    %270 = vector.extract_strided_slice %82 {offsets = [0, 40], sizes = [8, 8], strides = [1, 1]} : vector<16x96xf32> to vector<8x8xf32>
    %271 = vector.extract_strided_slice %82 {offsets = [0, 72], sizes = [8, 8], strides = [1, 1]} : vector<16x96xf32> to vector<8x8xf32>
    %272 = vector.extract_strided_slice %38 {offsets = [0, 8], sizes = [8, 8], strides = [1, 1]} : vector<16x32xf32> to vector<8x8xf32>
    %cst_122 = arith.constant 0.353553385 : f32
    %273 = vector.broadcast %cst_122 : f32 to vector<8x8xf32>
    %274 = arith.mulf %266, %273 : vector<8x8xf32>
    %cst_123 = arith.constant dense<0.000000e+00> : vector<8x8xf32>
    %275 = tpu.matmul %274, %267, %cst_123 {dimension_numbers = #tpu.dot_dimension_numbers<[1], [1], [0], [0], [0, 0, 1, 0], [], []>} : vector<8x8xf32>, vector<8x8xf32>, vector<8x8xf32> -> vector<8x8xf32>
    %cst_124 = arith.constant dense<0xFF800000> : vector<8xf32>
    %276 = vector.multi_reduction <maximumf>, %275, %cst_124 [1] : vector<8x8xf32> to vector<8xf32>
    %277 = vector.shape_cast %276 : vector<8xf32> to vector<8x1xf32>
    %278 = vector.broadcast %277 : vector<8x1xf32> to vector<8x8xf32>
    %279 = arith.subf %275, %278 : vector<8x8xf32>
    %280 = math.exp %279 : vector<8x8xf32>
    %cst_125 = arith.constant dense<0.000000e+00> : vector<8xf32>
    %281 = vector.multi_reduction <add>, %280, %cst_125 [1] : vector<8x8xf32> to vector<8xf32>
    %282 = vector.shape_cast %281 : vector<8xf32> to vector<8x1xf32>
    %283 = tpu.reciprocal %282 {approx = true} : vector<8x1xf32> -> vector<8x1xf32>
    %284 = vector.broadcast %283 : vector<8x1xf32> to vector<8x8xf32>
    %285 = arith.mulf %280, %284 : vector<8x8xf32>
    %cst_126 = arith.constant dense<0.000000e+00> : vector<8x8xf32>
    %286 = tpu.matmul %285, %268, %cst_126 {dimension_numbers = #tpu.dot_dimension_numbers<[1], [0], [0], [1], [0, 0, 1, 1], [], []>} : vector<8x8xf32>, vector<8x8xf32>, vector<8x8xf32> -> vector<8x8xf32>
    %cst_127 = arith.constant dense<0.000000e+00> : vector<8x8xf32>
    %287 = tpu.matmul %286, %258, %cst_127 {dimension_numbers = #tpu.dot_dimension_numbers<[1], [0], [0], [1], [0, 0, 1, 1], [], []>} : vector<8x8xf32>, vector<8x8xf32>, vector<8x8xf32> -> vector<8x8xf32>
    %288 = vector.broadcast %259 : vector<1x8xf32> to vector<8x8xf32>
    %289 = arith.addf %287, %288 : vector<8x8xf32>
    %290 = arith.addf %272, %289 : vector<8x8xf32>
    %291 = vector.extract_strided_slice %77 {offsets = [0, 8], sizes = [8, 8], strides = [1, 1]} : vector<16x32xf32> to vector<8x8xf32>
    %cst_128 = arith.constant 0.353553385 : f32
    %292 = vector.broadcast %cst_128 : f32 to vector<8x8xf32>
    %293 = arith.mulf %269, %292 : vector<8x8xf32>
    %cst_129 = arith.constant dense<0.000000e+00> : vector<8x8xf32>
    %294 = tpu.matmul %293, %270, %cst_129 {dimension_numbers = #tpu.dot_dimension_numbers<[1], [1], [0], [0], [0, 0, 1, 0], [], []>} : vector<8x8xf32>, vector<8x8xf32>, vector<8x8xf32> -> vector<8x8xf32>
    %cst_130 = arith.constant dense<0xFF800000> : vector<8xf32>
    %295 = vector.multi_reduction <maximumf>, %294, %cst_130 [1] : vector<8x8xf32> to vector<8xf32>
    %296 = vector.shape_cast %295 : vector<8xf32> to vector<8x1xf32>
    %297 = vector.broadcast %296 : vector<8x1xf32> to vector<8x8xf32>
    %298 = arith.subf %294, %297 : vector<8x8xf32>
    %299 = math.exp %298 : vector<8x8xf32>
    %cst_131 = arith.constant dense<0.000000e+00> : vector<8xf32>
    %300 = vector.multi_reduction <add>, %299, %cst_131 [1] : vector<8x8xf32> to vector<8xf32>
    %301 = vector.shape_cast %300 : vector<8xf32> to vector<8x1xf32>
    %302 = tpu.reciprocal %301 {approx = true} : vector<8x1xf32> -> vector<8x1xf32>
    %303 = vector.broadcast %302 : vector<8x1xf32> to vector<8x8xf32>
    %304 = arith.mulf %299, %303 : vector<8x8xf32>
    %cst_132 = arith.constant dense<0.000000e+00> : vector<8x8xf32>
    %305 = tpu.matmul %304, %271, %cst_132 {dimension_numbers = #tpu.dot_dimension_numbers<[1], [0], [0], [1], [0, 0, 1, 1], [], []>} : vector<8x8xf32>, vector<8x8xf32>, vector<8x8xf32> -> vector<8x8xf32>
    %cst_133 = arith.constant dense<0.000000e+00> : vector<8x8xf32>
    %306 = tpu.matmul %305, %260, %cst_133 {dimension_numbers = #tpu.dot_dimension_numbers<[1], [0], [0], [1], [0, 0, 1, 1], [], []>} : vector<8x8xf32>, vector<8x8xf32>, vector<8x8xf32> -> vector<8x8xf32>
    %307 = vector.broadcast %261 : vector<1x8xf32> to vector<8x8xf32>
    %308 = arith.addf %306, %307 : vector<8x8xf32>
    %309 = arith.addf %291, %308 : vector<8x8xf32>
    %cst_134 = arith.constant dense<0.000000e+00> : vector<8xf32>
    %310 = vector.multi_reduction <add>, %290, %cst_134 [1] : vector<8x8xf32> to vector<8xf32>
    %311 = vector.shape_cast %310 : vector<8xf32> to vector<8x1xf32>
    %cst_135 = arith.constant dense<0.000000e+00> : vector<8xf32>
    %312 = vector.multi_reduction <add>, %309, %cst_135 [1] : vector<8x8xf32> to vector<8xf32>
    %313 = vector.shape_cast %312 : vector<8xf32> to vector<8x1xf32>
    %314 = arith.addf %311, %313 : vector<8x1xf32>
    %cst_136 = arith.constant 6.250000e-02 : f32
    %315 = vector.broadcast %cst_136 : f32 to vector<8x1xf32>
    %316 = arith.mulf %314, %315 : vector<8x1xf32>
    %317 = vector.broadcast %316 : vector<8x1xf32> to vector<8x8xf32>
    %318 = arith.subf %290, %317 : vector<8x8xf32>
    %319 = vector.broadcast %316 : vector<8x1xf32> to vector<8x8xf32>
    %320 = arith.subf %309, %319 : vector<8x8xf32>
    %321 = arith.mulf %318, %318 : vector<8x8xf32>
    %cst_137 = arith.constant dense<0.000000e+00> : vector<8xf32>
    %322 = vector.multi_reduction <add>, %321, %cst_137 [1] : vector<8x8xf32> to vector<8xf32>
    %323 = vector.shape_cast %322 : vector<8xf32> to vector<8x1xf32>
    %324 = arith.mulf %320, %320 : vector<8x8xf32>
    %cst_138 = arith.constant dense<0.000000e+00> : vector<8xf32>
    %325 = vector.multi_reduction <add>, %324, %cst_138 [1] : vector<8x8xf32> to vector<8xf32>
    %326 = vector.shape_cast %325 : vector<8xf32> to vector<8x1xf32>
    %327 = arith.addf %323, %326 : vector<8x1xf32>
    %cst_139 = arith.constant 6.250000e-02 : f32
    %328 = vector.broadcast %cst_139 : f32 to vector<8x1xf32>
    %329 = arith.mulf %327, %328 : vector<8x1xf32>
    %cst_140 = arith.constant 9.99999974E-6 : f32
    %330 = vector.broadcast %cst_140 : f32 to vector<8x1xf32>
    %331 = arith.addf %329, %330 : vector<8x1xf32>
    %332 = math.rsqrt %331 : vector<8x1xf32>
    %333 = vector.broadcast %332 : vector<8x1xf32> to vector<8x8xf32>
    %334 = arith.mulf %318, %333 : vector<8x8xf32>
    %335 = vector.broadcast %262 : vector<1x8xf32> to vector<8x8xf32>
    %336 = arith.mulf %334, %335 : vector<8x8xf32>
    %337 = vector.broadcast %264 : vector<1x8xf32> to vector<8x8xf32>
    %338 = arith.addf %336, %337 : vector<8x8xf32>
    %c0_141 = arith.constant 0 : index
    %c16 = arith.constant 16 : index
    %339 = vector.load %arg21[%c0_141, %c16] : memref<16x64xf32, #tpu.memory_space<vmem>>, vector<8x8xf32>
    tpu.vector_store %arg21[%c0_141, %c16], %338 {strides = array<i32>} : memref<16x64xf32, #tpu.memory_space<vmem>>, vector<8x8xf32>,
    %340 = vector.broadcast %332 : vector<8x1xf32> to vector<8x8xf32>
    %341 = arith.mulf %320, %340 : vector<8x8xf32>
    %342 = vector.broadcast %263 : vector<1x8xf32> to vector<8x8xf32>
    %343 = arith.mulf %341, %342 : vector<8x8xf32>
    %344 = vector.broadcast %265 : vector<1x8xf32> to vector<8x8xf32>
    %345 = arith.addf %343, %344 : vector<8x8xf32>
    %c0_142 = arith.constant 0 : index
    %c24 = arith.constant 24 : index
    %346 = vector.load %arg21[%c0_142, %c24] : memref<16x64xf32, #tpu.memory_space<vmem>>, vector<8x8xf32>
    tpu.vector_store %arg21[%c0_142, %c24], %345 {strides = array<i32>} : memref<16x64xf32, #tpu.memory_space<vmem>>, vector<8x8xf32>,
    %347 = vector.extract_strided_slice %82 {offsets = [8, 8], sizes = [8, 8], strides = [1, 1]} : vector<16x96xf32> to vector<8x8xf32>
    %348 = vector.extract_strided_slice %87 {offsets = [8, 40], sizes = [8, 8], strides = [1, 1]} : vector<16x96xf32> to vector<8x8xf32>
    %349 = vector.extract_strided_slice %87 {offsets = [8, 72], sizes = [8, 8], strides = [1, 1]} : vector<16x96xf32> to vector<8x8xf32>
    %350 = vector.extract_strided_slice %87 {offsets = [8, 8], sizes = [8, 8], strides = [1, 1]} : vector<16x96xf32> to vector<8x8xf32>
    %351 = vector.extract_strided_slice %82 {offsets = [8, 40], sizes = [8, 8], strides = [1, 1]} : vector<16x96xf32> to vector<8x8xf32>
    %352 = vector.extract_strided_slice %82 {offsets = [8, 72], sizes = [8, 8], strides = [1, 1]} : vector<16x96xf32> to vector<8x8xf32>
    %353 = vector.extract_strided_slice %38 {offsets = [8, 8], sizes = [8, 8], strides = [1, 1]} : vector<16x32xf32> to vector<8x8xf32>
    %cst_143 = arith.constant 0.353553385 : f32
    %354 = vector.broadcast %cst_143 : f32 to vector<8x8xf32>
    %355 = arith.mulf %347, %354 : vector<8x8xf32>
    %cst_144 = arith.constant dense<0.000000e+00> : vector<8x8xf32>
    %356 = tpu.matmul %355, %348, %cst_144 {dimension_numbers = #tpu.dot_dimension_numbers<[1], [1], [0], [0], [0, 0, 1, 0], [], []>} : vector<8x8xf32>, vector<8x8xf32>, vector<8x8xf32> -> vector<8x8xf32>
    %cst_145 = arith.constant dense<0xFF800000> : vector<8xf32>
    %357 = vector.multi_reduction <maximumf>, %356, %cst_145 [1] : vector<8x8xf32> to vector<8xf32>
    %358 = vector.shape_cast %357 : vector<8xf32> to vector<8x1xf32>
    %359 = vector.broadcast %358 : vector<8x1xf32> to vector<8x8xf32>
    %360 = arith.subf %356, %359 : vector<8x8xf32>
    %361 = math.exp %360 : vector<8x8xf32>
    %cst_146 = arith.constant dense<0.000000e+00> : vector<8xf32>
    %362 = vector.multi_reduction <add>, %361, %cst_146 [1] : vector<8x8xf32> to vector<8xf32>
    %363 = vector.shape_cast %362 : vector<8xf32> to vector<8x1xf32>
    %364 = tpu.reciprocal %363 {approx = true} : vector<8x1xf32> -> vector<8x1xf32>
    %365 = vector.broadcast %364 : vector<8x1xf32> to vector<8x8xf32>
    %366 = arith.mulf %361, %365 : vector<8x8xf32>
    %cst_147 = arith.constant dense<0.000000e+00> : vector<8x8xf32>
    %367 = tpu.matmul %366, %349, %cst_147 {dimension_numbers = #tpu.dot_dimension_numbers<[1], [0], [0], [1], [0, 0, 1, 1], [], []>} : vector<8x8xf32>, vector<8x8xf32>, vector<8x8xf32> -> vector<8x8xf32>
    %cst_148 = arith.constant dense<0.000000e+00> : vector<8x8xf32>
    %368 = tpu.matmul %367, %258, %cst_148 {dimension_numbers = #tpu.dot_dimension_numbers<[1], [0], [0], [1], [0, 0, 1, 1], [], []>} : vector<8x8xf32>, vector<8x8xf32>, vector<8x8xf32> -> vector<8x8xf32>
    %369 = vector.broadcast %259 : vector<1x8xf32> to vector<8x8xf32>
    %370 = arith.addf %368, %369 : vector<8x8xf32>
    %371 = arith.addf %353, %370 : vector<8x8xf32>
    %372 = vector.extract_strided_slice %77 {offsets = [8, 8], sizes = [8, 8], strides = [1, 1]} : vector<16x32xf32> to vector<8x8xf32>
    %cst_149 = arith.constant 0.353553385 : f32
    %373 = vector.broadcast %cst_149 : f32 to vector<8x8xf32>
    %374 = arith.mulf %350, %373 : vector<8x8xf32>
    %cst_150 = arith.constant dense<0.000000e+00> : vector<8x8xf32>
    %375 = tpu.matmul %374, %351, %cst_150 {dimension_numbers = #tpu.dot_dimension_numbers<[1], [1], [0], [0], [0, 0, 1, 0], [], []>} : vector<8x8xf32>, vector<8x8xf32>, vector<8x8xf32> -> vector<8x8xf32>
    %cst_151 = arith.constant dense<0xFF800000> : vector<8xf32>
    %376 = vector.multi_reduction <maximumf>, %375, %cst_151 [1] : vector<8x8xf32> to vector<8xf32>
    %377 = vector.shape_cast %376 : vector<8xf32> to vector<8x1xf32>
    %378 = vector.broadcast %377 : vector<8x1xf32> to vector<8x8xf32>
    %379 = arith.subf %375, %378 : vector<8x8xf32>
    %380 = math.exp %379 : vector<8x8xf32>
    %cst_152 = arith.constant dense<0.000000e+00> : vector<8xf32>
    %381 = vector.multi_reduction <add>, %380, %cst_152 [1] : vector<8x8xf32> to vector<8xf32>
    %382 = vector.shape_cast %381 : vector<8xf32> to vector<8x1xf32>
    %383 = tpu.reciprocal %382 {approx = true} : vector<8x1xf32> -> vector<8x1xf32>
    %384 = vector.broadcast %383 : vector<8x1xf32> to vector<8x8xf32>
    %385 = arith.mulf %380, %384 : vector<8x8xf32>
    %cst_153 = arith.constant dense<0.000000e+00> : vector<8x8xf32>
    %386 = tpu.matmul %385, %352, %cst_153 {dimension_numbers = #tpu.dot_dimension_numbers<[1], [0], [0], [1], [0, 0, 1, 1], [], []>} : vector<8x8xf32>, vector<8x8xf32>, vector<8x8xf32> -> vector<8x8xf32>
    %cst_154 = arith.constant dense<0.000000e+00> : vector<8x8xf32>
    %387 = tpu.matmul %386, %260, %cst_154 {dimension_numbers = #tpu.dot_dimension_numbers<[1], [0], [0], [1], [0, 0, 1, 1], [], []>} : vector<8x8xf32>, vector<8x8xf32>, vector<8x8xf32> -> vector<8x8xf32>
    %388 = vector.broadcast %261 : vector<1x8xf32> to vector<8x8xf32>
    %389 = arith.addf %387, %388 : vector<8x8xf32>
    %390 = arith.addf %372, %389 : vector<8x8xf32>
    %cst_155 = arith.constant dense<0.000000e+00> : vector<8xf32>
    %391 = vector.multi_reduction <add>, %371, %cst_155 [1] : vector<8x8xf32> to vector<8xf32>
    %392 = vector.shape_cast %391 : vector<8xf32> to vector<8x1xf32>
    %cst_156 = arith.constant dense<0.000000e+00> : vector<8xf32>
    %393 = vector.multi_reduction <add>, %390, %cst_156 [1] : vector<8x8xf32> to vector<8xf32>
    %394 = vector.shape_cast %393 : vector<8xf32> to vector<8x1xf32>
    %395 = arith.addf %392, %394 : vector<8x1xf32>
    %cst_157 = arith.constant 6.250000e-02 : f32
    %396 = vector.broadcast %cst_157 : f32 to vector<8x1xf32>
    %397 = arith.mulf %395, %396 : vector<8x1xf32>
    %398 = vector.broadcast %397 : vector<8x1xf32> to vector<8x8xf32>
    %399 = arith.subf %371, %398 : vector<8x8xf32>
    %400 = vector.broadcast %397 : vector<8x1xf32> to vector<8x8xf32>
    %401 = arith.subf %390, %400 : vector<8x8xf32>
    %402 = arith.mulf %399, %399 : vector<8x8xf32>
    %cst_158 = arith.constant dense<0.000000e+00> : vector<8xf32>
    %403 = vector.multi_reduction <add>, %402, %cst_158 [1] : vector<8x8xf32> to vector<8xf32>
    %404 = vector.shape_cast %403 : vector<8xf32> to vector<8x1xf32>
    %405 = arith.mulf %401, %401 : vector<8x8xf32>
    %cst_159 = arith.constant dense<0.000000e+00> : vector<8xf32>
    %406 = vector.multi_reduction <add>, %405, %cst_159 [1] : vector<8x8xf32> to vector<8xf32>
    %407 = vector.shape_cast %406 : vector<8xf32> to vector<8x1xf32>
    %408 = arith.addf %404, %407 : vector<8x1xf32>
    %cst_160 = arith.constant 6.250000e-02 : f32
    %409 = vector.broadcast %cst_160 : f32 to vector<8x1xf32>
    %410 = arith.mulf %408, %409 : vector<8x1xf32>
    %cst_161 = arith.constant 9.99999974E-6 : f32
    %411 = vector.broadcast %cst_161 : f32 to vector<8x1xf32>
    %412 = arith.addf %410, %411 : vector<8x1xf32>
    %413 = math.rsqrt %412 : vector<8x1xf32>
    %414 = vector.broadcast %413 : vector<8x1xf32> to vector<8x8xf32>
    %415 = arith.mulf %399, %414 : vector<8x8xf32>
    %416 = vector.broadcast %262 : vector<1x8xf32> to vector<8x8xf32>
    %417 = arith.mulf %415, %416 : vector<8x8xf32>
    %418 = vector.broadcast %264 : vector<1x8xf32> to vector<8x8xf32>
    %419 = arith.addf %417, %418 : vector<8x8xf32>
    %c8_162 = arith.constant 8 : index
    %c16_163 = arith.constant 16 : index
    %420 = vector.load %arg21[%c8_162, %c16_163] : memref<16x64xf32, #tpu.memory_space<vmem>>, vector<8x8xf32>
    tpu.vector_store %arg21[%c8_162, %c16_163], %419 {strides = array<i32>} : memref<16x64xf32, #tpu.memory_space<vmem>>, vector<8x8xf32>,
    %421 = vector.broadcast %413 : vector<8x1xf32> to vector<8x8xf32>
    %422 = arith.mulf %401, %421 : vector<8x8xf32>
    %423 = vector.broadcast %263 : vector<1x8xf32> to vector<8x8xf32>
    %424 = arith.mulf %422, %423 : vector<8x8xf32>
    %425 = vector.broadcast %265 : vector<1x8xf32> to vector<8x8xf32>
    %426 = arith.addf %424, %425 : vector<8x8xf32>
    %c8_164 = arith.constant 8 : index
    %c24_165 = arith.constant 24 : index
    %427 = vector.load %arg21[%c8_164, %c24_165] : memref<16x64xf32, #tpu.memory_space<vmem>>, vector<8x8xf32>
    tpu.vector_store %arg21[%c8_164, %c24_165], %426 {strides = array<i32>} : memref<16x64xf32, #tpu.memory_space<vmem>>, vector<8x8xf32>,
    %c16_166 = arith.constant 16 : index
    %c0_167 = arith.constant 0 : index
    %428 = vector.load %arg15[%c16_166, %c0_167] : memref<32x8xf32, #tpu.memory_space<vmem>>, vector<8x8xf32>
    %c2 = arith.constant 2 : index
    %c0_168 = arith.constant 0 : index
    %429 = vector.load %arg16[%c2, %c0_168] : memref<4x8xf32, #tpu.memory_space<vmem>>, vector<1x8xf32>
    %c16_169 = arith.constant 16 : index
    %c0_170 = arith.constant 0 : index
    %430 = vector.load %arg17[%c16_169, %c0_170] : memref<32x8xf32, #tpu.memory_space<vmem>>, vector<8x8xf32>
    %c2_171 = arith.constant 2 : index
    %c0_172 = arith.constant 0 : index
    %431 = vector.load %arg18[%c2_171, %c0_172] : memref<4x8xf32, #tpu.memory_space<vmem>>, vector<1x8xf32>
    %c2_173 = arith.constant 2 : index
    %c0_174 = arith.constant 0 : index
    %432 = vector.load %arg19[%c2_173, %c0_174] : memref<4x16xf32, #tpu.memory_space<vmem>>, vector<1x8xf32>
    %c2_175 = arith.constant 2 : index
    %c8_176 = arith.constant 8 : index
    %433 = vector.load %arg19[%c2_175, %c8_176] : memref<4x16xf32, #tpu.memory_space<vmem>>, vector<1x8xf32>
    %c2_177 = arith.constant 2 : index
    %c0_178 = arith.constant 0 : index
    %434 = vector.load %arg20[%c2_177, %c0_178] : memref<4x16xf32, #tpu.memory_space<vmem>>, vector<1x8xf32>
    %c2_179 = arith.constant 2 : index
    %c8_180 = arith.constant 8 : index
    %435 = vector.load %arg20[%c2_179, %c8_180] : memref<4x16xf32, #tpu.memory_space<vmem>>, vector<1x8xf32>
    %436 = vector.extract_strided_slice %82 {offsets = [0, 16], sizes = [8, 8], strides = [1, 1]} : vector<16x96xf32> to vector<8x8xf32>
    %437 = vector.extract_strided_slice %87 {offsets = [0, 48], sizes = [8, 8], strides = [1, 1]} : vector<16x96xf32> to vector<8x8xf32>
    %438 = vector.extract_strided_slice %87 {offsets = [0, 80], sizes = [8, 8], strides = [1, 1]} : vector<16x96xf32> to vector<8x8xf32>
    %439 = vector.extract_strided_slice %87 {offsets = [0, 16], sizes = [8, 8], strides = [1, 1]} : vector<16x96xf32> to vector<8x8xf32>
    %440 = vector.extract_strided_slice %82 {offsets = [0, 48], sizes = [8, 8], strides = [1, 1]} : vector<16x96xf32> to vector<8x8xf32>
    %441 = vector.extract_strided_slice %82 {offsets = [0, 80], sizes = [8, 8], strides = [1, 1]} : vector<16x96xf32> to vector<8x8xf32>
    %442 = vector.extract_strided_slice %38 {offsets = [0, 16], sizes = [8, 8], strides = [1, 1]} : vector<16x32xf32> to vector<8x8xf32>
    %cst_181 = arith.constant 0.353553385 : f32
    %443 = vector.broadcast %cst_181 : f32 to vector<8x8xf32>
    %444 = arith.mulf %436, %443 : vector<8x8xf32>
    %cst_182 = arith.constant dense<0.000000e+00> : vector<8x8xf32>
    %445 = tpu.matmul %444, %437, %cst_182 {dimension_numbers = #tpu.dot_dimension_numbers<[1], [1], [0], [0], [0, 0, 1, 0], [], []>} : vector<8x8xf32>, vector<8x8xf32>, vector<8x8xf32> -> vector<8x8xf32>
    %cst_183 = arith.constant dense<0xFF800000> : vector<8xf32>
    %446 = vector.multi_reduction <maximumf>, %445, %cst_183 [1] : vector<8x8xf32> to vector<8xf32>
    %447 = vector.shape_cast %446 : vector<8xf32> to vector<8x1xf32>
    %448 = vector.broadcast %447 : vector<8x1xf32> to vector<8x8xf32>
    %449 = arith.subf %445, %448 : vector<8x8xf32>
    %450 = math.exp %449 : vector<8x8xf32>
    %cst_184 = arith.constant dense<0.000000e+00> : vector<8xf32>
    %451 = vector.multi_reduction <add>, %450, %cst_184 [1] : vector<8x8xf32> to vector<8xf32>
    %452 = vector.shape_cast %451 : vector<8xf32> to vector<8x1xf32>
    %453 = tpu.reciprocal %452 {approx = true} : vector<8x1xf32> -> vector<8x1xf32>
    %454 = vector.broadcast %453 : vector<8x1xf32> to vector<8x8xf32>
    %455 = arith.mulf %450, %454 : vector<8x8xf32>
    %cst_185 = arith.constant dense<0.000000e+00> : vector<8x8xf32>
    %456 = tpu.matmul %455, %438, %cst_185 {dimension_numbers = #tpu.dot_dimension_numbers<[1], [0], [0], [1], [0, 0, 1, 1], [], []>} : vector<8x8xf32>, vector<8x8xf32>, vector<8x8xf32> -> vector<8x8xf32>
    %cst_186 = arith.constant dense<0.000000e+00> : vector<8x8xf32>
    %457 = tpu.matmul %456, %428, %cst_186 {dimension_numbers = #tpu.dot_dimension_numbers<[1], [0], [0], [1], [0, 0, 1, 1], [], []>} : vector<8x8xf32>, vector<8x8xf32>, vector<8x8xf32> -> vector<8x8xf32>
    %458 = vector.broadcast %429 : vector<1x8xf32> to vector<8x8xf32>
    %459 = arith.addf %457, %458 : vector<8x8xf32>
    %460 = arith.addf %442, %459 : vector<8x8xf32>
    %461 = vector.extract_strided_slice %77 {offsets = [0, 16], sizes = [8, 8], strides = [1, 1]} : vector<16x32xf32> to vector<8x8xf32>
    %cst_187 = arith.constant 0.353553385 : f32
    %462 = vector.broadcast %cst_187 : f32 to vector<8x8xf32>
    %463 = arith.mulf %439, %462 : vector<8x8xf32>
    %cst_188 = arith.constant dense<0.000000e+00> : vector<8x8xf32>
    %464 = tpu.matmul %463, %440, %cst_188 {dimension_numbers = #tpu.dot_dimension_numbers<[1], [1], [0], [0], [0, 0, 1, 0], [], []>} : vector<8x8xf32>, vector<8x8xf32>, vector<8x8xf32> -> vector<8x8xf32>
    %cst_189 = arith.constant dense<0xFF800000> : vector<8xf32>
    %465 = vector.multi_reduction <maximumf>, %464, %cst_189 [1] : vector<8x8xf32> to vector<8xf32>
    %466 = vector.shape_cast %465 : vector<8xf32> to vector<8x1xf32>
    %467 = vector.broadcast %466 : vector<8x1xf32> to vector<8x8xf32>
    %468 = arith.subf %464, %467 : vector<8x8xf32>
    %469 = math.exp %468 : vector<8x8xf32>
    %cst_190 = arith.constant dense<0.000000e+00> : vector<8xf32>
    %470 = vector.multi_reduction <add>, %469, %cst_190 [1] : vector<8x8xf32> to vector<8xf32>
    %471 = vector.shape_cast %470 : vector<8xf32> to vector<8x1xf32>
    %472 = tpu.reciprocal %471 {approx = true} : vector<8x1xf32> -> vector<8x1xf32>
    %473 = vector.broadcast %472 : vector<8x1xf32> to vector<8x8xf32>
    %474 = arith.mulf %469, %473 : vector<8x8xf32>
    %cst_191 = arith.constant dense<0.000000e+00> : vector<8x8xf32>
    %475 = tpu.matmul %474, %441, %cst_191 {dimension_numbers = #tpu.dot_dimension_numbers<[1], [0], [0], [1], [0, 0, 1, 1], [], []>} : vector<8x8xf32>, vector<8x8xf32>, vector<8x8xf32> -> vector<8x8xf32>
    %cst_192 = arith.constant dense<0.000000e+00> : vector<8x8xf32>
    %476 = tpu.matmul %475, %430, %cst_192 {dimension_numbers = #tpu.dot_dimension_numbers<[1], [0], [0], [1], [0, 0, 1, 1], [], []>} : vector<8x8xf32>, vector<8x8xf32>, vector<8x8xf32> -> vector<8x8xf32>
    %477 = vector.broadcast %431 : vector<1x8xf32> to vector<8x8xf32>
    %478 = arith.addf %476, %477 : vector<8x8xf32>
    %479 = arith.addf %461, %478 : vector<8x8xf32>
    %cst_193 = arith.constant dense<0.000000e+00> : vector<8xf32>
    %480 = vector.multi_reduction <add>, %460, %cst_193 [1] : vector<8x8xf32> to vector<8xf32>
    %481 = vector.shape_cast %480 : vector<8xf32> to vector<8x1xf32>
    %cst_194 = arith.constant dense<0.000000e+00> : vector<8xf32>
    %482 = vector.multi_reduction <add>, %479, %cst_194 [1] : vector<8x8xf32> to vector<8xf32>
    %483 = vector.shape_cast %482 : vector<8xf32> to vector<8x1xf32>
    %484 = arith.addf %481, %483 : vector<8x1xf32>
    %cst_195 = arith.constant 6.250000e-02 : f32
    %485 = vector.broadcast %cst_195 : f32 to vector<8x1xf32>
    %486 = arith.mulf %484, %485 : vector<8x1xf32>
    %487 = vector.broadcast %486 : vector<8x1xf32> to vector<8x8xf32>
    %488 = arith.subf %460, %487 : vector<8x8xf32>
    %489 = vector.broadcast %486 : vector<8x1xf32> to vector<8x8xf32>
    %490 = arith.subf %479, %489 : vector<8x8xf32>
    %491 = arith.mulf %488, %488 : vector<8x8xf32>
    %cst_196 = arith.constant dense<0.000000e+00> : vector<8xf32>
    %492 = vector.multi_reduction <add>, %491, %cst_196 [1] : vector<8x8xf32> to vector<8xf32>
    %493 = vector.shape_cast %492 : vector<8xf32> to vector<8x1xf32>
    %494 = arith.mulf %490, %490 : vector<8x8xf32>
    %cst_197 = arith.constant dense<0.000000e+00> : vector<8xf32>
    %495 = vector.multi_reduction <add>, %494, %cst_197 [1] : vector<8x8xf32> to vector<8xf32>
    %496 = vector.shape_cast %495 : vector<8xf32> to vector<8x1xf32>
    %497 = arith.addf %493, %496 : vector<8x1xf32>
    %cst_198 = arith.constant 6.250000e-02 : f32
    %498 = vector.broadcast %cst_198 : f32 to vector<8x1xf32>
    %499 = arith.mulf %497, %498 : vector<8x1xf32>
    %cst_199 = arith.constant 9.99999974E-6 : f32
    %500 = vector.broadcast %cst_199 : f32 to vector<8x1xf32>
    %501 = arith.addf %499, %500 : vector<8x1xf32>
    %502 = math.rsqrt %501 : vector<8x1xf32>
    %503 = vector.broadcast %502 : vector<8x1xf32> to vector<8x8xf32>
    %504 = arith.mulf %488, %503 : vector<8x8xf32>
    %505 = vector.broadcast %432 : vector<1x8xf32> to vector<8x8xf32>
    %506 = arith.mulf %504, %505 : vector<8x8xf32>
    %507 = vector.broadcast %434 : vector<1x8xf32> to vector<8x8xf32>
    %508 = arith.addf %506, %507 : vector<8x8xf32>
    %c0_200 = arith.constant 0 : index
    %c32 = arith.constant 32 : index
    %509 = vector.load %arg21[%c0_200, %c32] : memref<16x64xf32, #tpu.memory_space<vmem>>, vector<8x8xf32>
    tpu.vector_store %arg21[%c0_200, %c32], %508 {strides = array<i32>} : memref<16x64xf32, #tpu.memory_space<vmem>>, vector<8x8xf32>,
    %510 = vector.broadcast %502 : vector<8x1xf32> to vector<8x8xf32>
    %511 = arith.mulf %490, %510 : vector<8x8xf32>
    %512 = vector.broadcast %433 : vector<1x8xf32> to vector<8x8xf32>
    %513 = arith.mulf %511, %512 : vector<8x8xf32>
    %514 = vector.broadcast %435 : vector<1x8xf32> to vector<8x8xf32>
    %515 = arith.addf %513, %514 : vector<8x8xf32>
    %c0_201 = arith.constant 0 : index
    %c40 = arith.constant 40 : index
    %516 = vector.load %arg21[%c0_201, %c40] : memref<16x64xf32, #tpu.memory_space<vmem>>, vector<8x8xf32>
    tpu.vector_store %arg21[%c0_201, %c40], %515 {strides = array<i32>} : memref<16x64xf32, #tpu.memory_space<vmem>>, vector<8x8xf32>,
    %517 = vector.extract_strided_slice %82 {offsets = [8, 16], sizes = [8, 8], strides = [1, 1]} : vector<16x96xf32> to vector<8x8xf32>
    %518 = vector.extract_strided_slice %87 {offsets = [8, 48], sizes = [8, 8], strides = [1, 1]} : vector<16x96xf32> to vector<8x8xf32>
    %519 = vector.extract_strided_slice %87 {offsets = [8, 80], sizes = [8, 8], strides = [1, 1]} : vector<16x96xf32> to vector<8x8xf32>
    %520 = vector.extract_strided_slice %87 {offsets = [8, 16], sizes = [8, 8], strides = [1, 1]} : vector<16x96xf32> to vector<8x8xf32>
    %521 = vector.extract_strided_slice %82 {offsets = [8, 48], sizes = [8, 8], strides = [1, 1]} : vector<16x96xf32> to vector<8x8xf32>
    %522 = vector.extract_strided_slice %82 {offsets = [8, 80], sizes = [8, 8], strides = [1, 1]} : vector<16x96xf32> to vector<8x8xf32>
    %523 = vector.extract_strided_slice %38 {offsets = [8, 16], sizes = [8, 8], strides = [1, 1]} : vector<16x32xf32> to vector<8x8xf32>
    %cst_202 = arith.constant 0.353553385 : f32
    %524 = vector.broadcast %cst_202 : f32 to vector<8x8xf32>
    %525 = arith.mulf %517, %524 : vector<8x8xf32>
    %cst_203 = arith.constant dense<0.000000e+00> : vector<8x8xf32>
    %526 = tpu.matmul %525, %518, %cst_203 {dimension_numbers = #tpu.dot_dimension_numbers<[1], [1], [0], [0], [0, 0, 1, 0], [], []>} : vector<8x8xf32>, vector<8x8xf32>, vector<8x8xf32> -> vector<8x8xf32>
    %cst_204 = arith.constant dense<0xFF800000> : vector<8xf32>
    %527 = vector.multi_reduction <maximumf>, %526, %cst_204 [1] : vector<8x8xf32> to vector<8xf32>
    %528 = vector.shape_cast %527 : vector<8xf32> to vector<8x1xf32>
    %529 = vector.broadcast %528 : vector<8x1xf32> to vector<8x8xf32>
    %530 = arith.subf %526, %529 : vector<8x8xf32>
    %531 = math.exp %530 : vector<8x8xf32>
    %cst_205 = arith.constant dense<0.000000e+00> : vector<8xf32>
    %532 = vector.multi_reduction <add>, %531, %cst_205 [1] : vector<8x8xf32> to vector<8xf32>
    %533 = vector.shape_cast %532 : vector<8xf32> to vector<8x1xf32>
    %534 = tpu.reciprocal %533 {approx = true} : vector<8x1xf32> -> vector<8x1xf32>
    %535 = vector.broadcast %534 : vector<8x1xf32> to vector<8x8xf32>
    %536 = arith.mulf %531, %535 : vector<8x8xf32>
    %cst_206 = arith.constant dense<0.000000e+00> : vector<8x8xf32>
    %537 = tpu.matmul %536, %519, %cst_206 {dimension_numbers = #tpu.dot_dimension_numbers<[1], [0], [0], [1], [0, 0, 1, 1], [], []>} : vector<8x8xf32>, vector<8x8xf32>, vector<8x8xf32> -> vector<8x8xf32>
    %cst_207 = arith.constant dense<0.000000e+00> : vector<8x8xf32>
    %538 = tpu.matmul %537, %428, %cst_207 {dimension_numbers = #tpu.dot_dimension_numbers<[1], [0], [0], [1], [0, 0, 1, 1], [], []>} : vector<8x8xf32>, vector<8x8xf32>, vector<8x8xf32> -> vector<8x8xf32>
    %539 = vector.broadcast %429 : vector<1x8xf32> to vector<8x8xf32>
    %540 = arith.addf %538, %539 : vector<8x8xf32>
    %541 = arith.addf %523, %540 : vector<8x8xf32>
    %542 = vector.extract_strided_slice %77 {offsets = [8, 16], sizes = [8, 8], strides = [1, 1]} : vector<16x32xf32> to vector<8x8xf32>
    %cst_208 = arith.constant 0.353553385 : f32
    %543 = vector.broadcast %cst_208 : f32 to vector<8x8xf32>
    %544 = arith.mulf %520, %543 : vector<8x8xf32>
    %cst_209 = arith.constant dense<0.000000e+00> : vector<8x8xf32>
    %545 = tpu.matmul %544, %521, %cst_209 {dimension_numbers = #tpu.dot_dimension_numbers<[1], [1], [0], [0], [0, 0, 1, 0], [], []>} : vector<8x8xf32>, vector<8x8xf32>, vector<8x8xf32> -> vector<8x8xf32>
    %cst_210 = arith.constant dense<0xFF800000> : vector<8xf32>
    %546 = vector.multi_reduction <maximumf>, %545, %cst_210 [1] : vector<8x8xf32> to vector<8xf32>
    %547 = vector.shape_cast %546 : vector<8xf32> to vector<8x1xf32>
    %548 = vector.broadcast %547 : vector<8x1xf32> to vector<8x8xf32>
    %549 = arith.subf %545, %548 : vector<8x8xf32>
    %550 = math.exp %549 : vector<8x8xf32>
    %cst_211 = arith.constant dense<0.000000e+00> : vector<8xf32>
    %551 = vector.multi_reduction <add>, %550, %cst_211 [1] : vector<8x8xf32> to vector<8xf32>
    %552 = vector.shape_cast %551 : vector<8xf32> to vector<8x1xf32>
    %553 = tpu.reciprocal %552 {approx = true} : vector<8x1xf32> -> vector<8x1xf32>
    %554 = vector.broadcast %553 : vector<8x1xf32> to vector<8x8xf32>
    %555 = arith.mulf %550, %554 : vector<8x8xf32>
    %cst_212 = arith.constant dense<0.000000e+00> : vector<8x8xf32>
    %556 = tpu.matmul %555, %522, %cst_212 {dimension_numbers = #tpu.dot_dimension_numbers<[1], [0], [0], [1], [0, 0, 1, 1], [], []>} : vector<8x8xf32>, vector<8x8xf32>, vector<8x8xf32> -> vector<8x8xf32>
    %cst_213 = arith.constant dense<0.000000e+00> : vector<8x8xf32>
    %557 = tpu.matmul %556, %430, %cst_213 {dimension_numbers = #tpu.dot_dimension_numbers<[1], [0], [0], [1], [0, 0, 1, 1], [], []>} : vector<8x8xf32>, vector<8x8xf32>, vector<8x8xf32> -> vector<8x8xf32>
    %558 = vector.broadcast %431 : vector<1x8xf32> to vector<8x8xf32>
    %559 = arith.addf %557, %558 : vector<8x8xf32>
    %560 = arith.addf %542, %559 : vector<8x8xf32>
    %cst_214 = arith.constant dense<0.000000e+00> : vector<8xf32>
    %561 = vector.multi_reduction <add>, %541, %cst_214 [1] : vector<8x8xf32> to vector<8xf32>
    %562 = vector.shape_cast %561 : vector<8xf32> to vector<8x1xf32>
    %cst_215 = arith.constant dense<0.000000e+00> : vector<8xf32>
    %563 = vector.multi_reduction <add>, %560, %cst_215 [1] : vector<8x8xf32> to vector<8xf32>
    %564 = vector.shape_cast %563 : vector<8xf32> to vector<8x1xf32>
    %565 = arith.addf %562, %564 : vector<8x1xf32>
    %cst_216 = arith.constant 6.250000e-02 : f32
    %566 = vector.broadcast %cst_216 : f32 to vector<8x1xf32>
    %567 = arith.mulf %565, %566 : vector<8x1xf32>
    %568 = vector.broadcast %567 : vector<8x1xf32> to vector<8x8xf32>
    %569 = arith.subf %541, %568 : vector<8x8xf32>
    %570 = vector.broadcast %567 : vector<8x1xf32> to vector<8x8xf32>
    %571 = arith.subf %560, %570 : vector<8x8xf32>
    %572 = arith.mulf %569, %569 : vector<8x8xf32>
    %cst_217 = arith.constant dense<0.000000e+00> : vector<8xf32>
    %573 = vector.multi_reduction <add>, %572, %cst_217 [1] : vector<8x8xf32> to vector<8xf32>
    %574 = vector.shape_cast %573 : vector<8xf32> to vector<8x1xf32>
    %575 = arith.mulf %571, %571 : vector<8x8xf32>
    %cst_218 = arith.constant dense<0.000000e+00> : vector<8xf32>
    %576 = vector.multi_reduction <add>, %575, %cst_218 [1] : vector<8x8xf32> to vector<8xf32>
    %577 = vector.shape_cast %576 : vector<8xf32> to vector<8x1xf32>
    %578 = arith.addf %574, %577 : vector<8x1xf32>
    %cst_219 = arith.constant 6.250000e-02 : f32
    %579 = vector.broadcast %cst_219 : f32 to vector<8x1xf32>
    %580 = arith.mulf %578, %579 : vector<8x1xf32>
    %cst_220 = arith.constant 9.99999974E-6 : f32
    %581 = vector.broadcast %cst_220 : f32 to vector<8x1xf32>
    %582 = arith.addf %580, %581 : vector<8x1xf32>
    %583 = math.rsqrt %582 : vector<8x1xf32>
    %584 = vector.broadcast %583 : vector<8x1xf32> to vector<8x8xf32>
    %585 = arith.mulf %569, %584 : vector<8x8xf32>
    %586 = vector.broadcast %432 : vector<1x8xf32> to vector<8x8xf32>
    %587 = arith.mulf %585, %586 : vector<8x8xf32>
    %588 = vector.broadcast %434 : vector<1x8xf32> to vector<8x8xf32>
    %589 = arith.addf %587, %588 : vector<8x8xf32>
    %c8_221 = arith.constant 8 : index
    %c32_222 = arith.constant 32 : index
    %590 = vector.load %arg21[%c8_221, %c32_222] : memref<16x64xf32, #tpu.memory_space<vmem>>, vector<8x8xf32>
    tpu.vector_store %arg21[%c8_221, %c32_222], %589 {strides = array<i32>} : memref<16x64xf32, #tpu.memory_space<vmem>>, vector<8x8xf32>,
    %591 = vector.broadcast %583 : vector<8x1xf32> to vector<8x8xf32>
    %592 = arith.mulf %571, %591 : vector<8x8xf32>
    %593 = vector.broadcast %433 : vector<1x8xf32> to vector<8x8xf32>
    %594 = arith.mulf %592, %593 : vector<8x8xf32>
    %595 = vector.broadcast %435 : vector<1x8xf32> to vector<8x8xf32>
    %596 = arith.addf %594, %595 : vector<8x8xf32>
    %c8_223 = arith.constant 8 : index
    %c40_224 = arith.constant 40 : index
    %597 = vector.load %arg21[%c8_223, %c40_224] : memref<16x64xf32, #tpu.memory_space<vmem>>, vector<8x8xf32>
    tpu.vector_store %arg21[%c8_223, %c40_224], %596 {strides = array<i32>} : memref<16x64xf32, #tpu.memory_space<vmem>>, vector<8x8xf32>,
    %c24_225 = arith.constant 24 : index
    %c0_226 = arith.constant 0 : index
    %598 = vector.load %arg15[%c24_225, %c0_226] : memref<32x8xf32, #tpu.memory_space<vmem>>, vector<8x8xf32>
    %c3 = arith.constant 3 : index
    %c0_227 = arith.constant 0 : index
    %599 = vector.load %arg16[%c3, %c0_227] : memref<4x8xf32, #tpu.memory_space<vmem>>, vector<1x8xf32>
    %c24_228 = arith.constant 24 : index
    %c0_229 = arith.constant 0 : index
    %600 = vector.load %arg17[%c24_228, %c0_229] : memref<32x8xf32, #tpu.memory_space<vmem>>, vector<8x8xf32>
    %c3_230 = arith.constant 3 : index
    %c0_231 = arith.constant 0 : index
    %601 = vector.load %arg18[%c3_230, %c0_231] : memref<4x8xf32, #tpu.memory_space<vmem>>, vector<1x8xf32>
    %c3_232 = arith.constant 3 : index
    %c0_233 = arith.constant 0 : index
    %602 = vector.load %arg19[%c3_232, %c0_233] : memref<4x16xf32, #tpu.memory_space<vmem>>, vector<1x8xf32>
    %c3_234 = arith.constant 3 : index
    %c8_235 = arith.constant 8 : index
    %603 = vector.load %arg19[%c3_234, %c8_235] : memref<4x16xf32, #tpu.memory_space<vmem>>, vector<1x8xf32>
    %c3_236 = arith.constant 3 : index
    %c0_237 = arith.constant 0 : index
    %604 = vector.load %arg20[%c3_236, %c0_237] : memref<4x16xf32, #tpu.memory_space<vmem>>, vector<1x8xf32>
    %c3_238 = arith.constant 3 : index
    %c8_239 = arith.constant 8 : index
    %605 = vector.load %arg20[%c3_238, %c8_239] : memref<4x16xf32, #tpu.memory_space<vmem>>, vector<1x8xf32>
    %606 = vector.extract_strided_slice %82 {offsets = [0, 24], sizes = [8, 8], strides = [1, 1]} : vector<16x96xf32> to vector<8x8xf32>
    %607 = vector.extract_strided_slice %87 {offsets = [0, 56], sizes = [8, 8], strides = [1, 1]} : vector<16x96xf32> to vector<8x8xf32>
    %608 = vector.extract_strided_slice %87 {offsets = [0, 88], sizes = [8, 8], strides = [1, 1]} : vector<16x96xf32> to vector<8x8xf32>
    %609 = vector.extract_strided_slice %87 {offsets = [0, 24], sizes = [8, 8], strides = [1, 1]} : vector<16x96xf32> to vector<8x8xf32>
    %610 = vector.extract_strided_slice %82 {offsets = [0, 56], sizes = [8, 8], strides = [1, 1]} : vector<16x96xf32> to vector<8x8xf32>
    %611 = vector.extract_strided_slice %82 {offsets = [0, 88], sizes = [8, 8], strides = [1, 1]} : vector<16x96xf32> to vector<8x8xf32>
    %612 = vector.extract_strided_slice %38 {offsets = [0, 24], sizes = [8, 8], strides = [1, 1]} : vector<16x32xf32> to vector<8x8xf32>
    %cst_240 = arith.constant 0.353553385 : f32
    %613 = vector.broadcast %cst_240 : f32 to vector<8x8xf32>
    %614 = arith.mulf %606, %613 : vector<8x8xf32>
    %cst_241 = arith.constant dense<0.000000e+00> : vector<8x8xf32>
    %615 = tpu.matmul %614, %607, %cst_241 {dimension_numbers = #tpu.dot_dimension_numbers<[1], [1], [0], [0], [0, 0, 1, 0], [], []>} : vector<8x8xf32>, vector<8x8xf32>, vector<8x8xf32> -> vector<8x8xf32>
    %cst_242 = arith.constant dense<0xFF800000> : vector<8xf32>
    %616 = vector.multi_reduction <maximumf>, %615, %cst_242 [1] : vector<8x8xf32> to vector<8xf32>
    %617 = vector.shape_cast %616 : vector<8xf32> to vector<8x1xf32>
    %618 = vector.broadcast %617 : vector<8x1xf32> to vector<8x8xf32>
    %619 = arith.subf %615, %618 : vector<8x8xf32>
    %620 = math.exp %619 : vector<8x8xf32>
    %cst_243 = arith.constant dense<0.000000e+00> : vector<8xf32>
    %621 = vector.multi_reduction <add>, %620, %cst_243 [1] : vector<8x8xf32> to vector<8xf32>
    %622 = vector.shape_cast %621 : vector<8xf32> to vector<8x1xf32>
    %623 = tpu.reciprocal %622 {approx = true} : vector<8x1xf32> -> vector<8x1xf32>
    %624 = vector.broadcast %623 : vector<8x1xf32> to vector<8x8xf32>
    %625 = arith.mulf %620, %624 : vector<8x8xf32>
    %cst_244 = arith.constant dense<0.000000e+00> : vector<8x8xf32>
    %626 = tpu.matmul %625, %608, %cst_244 {dimension_numbers = #tpu.dot_dimension_numbers<[1], [0], [0], [1], [0, 0, 1, 1], [], []>} : vector<8x8xf32>, vector<8x8xf32>, vector<8x8xf32> -> vector<8x8xf32>
    %cst_245 = arith.constant dense<0.000000e+00> : vector<8x8xf32>
    %627 = tpu.matmul %626, %598, %cst_245 {dimension_numbers = #tpu.dot_dimension_numbers<[1], [0], [0], [1], [0, 0, 1, 1], [], []>} : vector<8x8xf32>, vector<8x8xf32>, vector<8x8xf32> -> vector<8x8xf32>
    %628 = vector.broadcast %599 : vector<1x8xf32> to vector<8x8xf32>
    %629 = arith.addf %627, %628 : vector<8x8xf32>
    %630 = arith.addf %612, %629 : vector<8x8xf32>
    %631 = vector.extract_strided_slice %77 {offsets = [0, 24], sizes = [8, 8], strides = [1, 1]} : vector<16x32xf32> to vector<8x8xf32>
    %cst_246 = arith.constant 0.353553385 : f32
    %632 = vector.broadcast %cst_246 : f32 to vector<8x8xf32>
    %633 = arith.mulf %609, %632 : vector<8x8xf32>
    %cst_247 = arith.constant dense<0.000000e+00> : vector<8x8xf32>
    %634 = tpu.matmul %633, %610, %cst_247 {dimension_numbers = #tpu.dot_dimension_numbers<[1], [1], [0], [0], [0, 0, 1, 0], [], []>} : vector<8x8xf32>, vector<8x8xf32>, vector<8x8xf32> -> vector<8x8xf32>
    %cst_248 = arith.constant dense<0xFF800000> : vector<8xf32>
    %635 = vector.multi_reduction <maximumf>, %634, %cst_248 [1] : vector<8x8xf32> to vector<8xf32>
    %636 = vector.shape_cast %635 : vector<8xf32> to vector<8x1xf32>
    %637 = vector.broadcast %636 : vector<8x1xf32> to vector<8x8xf32>
    %638 = arith.subf %634, %637 : vector<8x8xf32>
    %639 = math.exp %638 : vector<8x8xf32>
    %cst_249 = arith.constant dense<0.000000e+00> : vector<8xf32>
    %640 = vector.multi_reduction <add>, %639, %cst_249 [1] : vector<8x8xf32> to vector<8xf32>
    %641 = vector.shape_cast %640 : vector<8xf32> to vector<8x1xf32>
    %642 = tpu.reciprocal %641 {approx = true} : vector<8x1xf32> -> vector<8x1xf32>
    %643 = vector.broadcast %642 : vector<8x1xf32> to vector<8x8xf32>
    %644 = arith.mulf %639, %643 : vector<8x8xf32>
    %cst_250 = arith.constant dense<0.000000e+00> : vector<8x8xf32>
    %645 = tpu.matmul %644, %611, %cst_250 {dimension_numbers = #tpu.dot_dimension_numbers<[1], [0], [0], [1], [0, 0, 1, 1], [], []>} : vector<8x8xf32>, vector<8x8xf32>, vector<8x8xf32> -> vector<8x8xf32>
    %cst_251 = arith.constant dense<0.000000e+00> : vector<8x8xf32>
    %646 = tpu.matmul %645, %600, %cst_251 {dimension_numbers = #tpu.dot_dimension_numbers<[1], [0], [0], [1], [0, 0, 1, 1], [], []>} : vector<8x8xf32>, vector<8x8xf32>, vector<8x8xf32> -> vector<8x8xf32>
    %647 = vector.broadcast %601 : vector<1x8xf32> to vector<8x8xf32>
    %648 = arith.addf %646, %647 : vector<8x8xf32>
    %649 = arith.addf %631, %648 : vector<8x8xf32>
    %cst_252 = arith.constant dense<0.000000e+00> : vector<8xf32>
    %650 = vector.multi_reduction <add>, %630, %cst_252 [1] : vector<8x8xf32> to vector<8xf32>
    %651 = vector.shape_cast %650 : vector<8xf32> to vector<8x1xf32>
    %cst_253 = arith.constant dense<0.000000e+00> : vector<8xf32>
    %652 = vector.multi_reduction <add>, %649, %cst_253 [1] : vector<8x8xf32> to vector<8xf32>
    %653 = vector.shape_cast %652 : vector<8xf32> to vector<8x1xf32>
    %654 = arith.addf %651, %653 : vector<8x1xf32>
    %cst_254 = arith.constant 6.250000e-02 : f32
    %655 = vector.broadcast %cst_254 : f32 to vector<8x1xf32>
    %656 = arith.mulf %654, %655 : vector<8x1xf32>
    %657 = vector.broadcast %656 : vector<8x1xf32> to vector<8x8xf32>
    %658 = arith.subf %630, %657 : vector<8x8xf32>
    %659 = vector.broadcast %656 : vector<8x1xf32> to vector<8x8xf32>
    %660 = arith.subf %649, %659 : vector<8x8xf32>
    %661 = arith.mulf %658, %658 : vector<8x8xf32>
    %cst_255 = arith.constant dense<0.000000e+00> : vector<8xf32>
    %662 = vector.multi_reduction <add>, %661, %cst_255 [1] : vector<8x8xf32> to vector<8xf32>
    %663 = vector.shape_cast %662 : vector<8xf32> to vector<8x1xf32>
    %664 = arith.mulf %660, %660 : vector<8x8xf32>
    %cst_256 = arith.constant dense<0.000000e+00> : vector<8xf32>
    %665 = vector.multi_reduction <add>, %664, %cst_256 [1] : vector<8x8xf32> to vector<8xf32>
    %666 = vector.shape_cast %665 : vector<8xf32> to vector<8x1xf32>
    %667 = arith.addf %663, %666 : vector<8x1xf32>
    %cst_257 = arith.constant 6.250000e-02 : f32
    %668 = vector.broadcast %cst_257 : f32 to vector<8x1xf32>
    %669 = arith.mulf %667, %668 : vector<8x1xf32>
    %cst_258 = arith.constant 9.99999974E-6 : f32
    %670 = vector.broadcast %cst_258 : f32 to vector<8x1xf32>
    %671 = arith.addf %669, %670 : vector<8x1xf32>
    %672 = math.rsqrt %671 : vector<8x1xf32>
    %673 = vector.broadcast %672 : vector<8x1xf32> to vector<8x8xf32>
    %674 = arith.mulf %658, %673 : vector<8x8xf32>
    %675 = vector.broadcast %602 : vector<1x8xf32> to vector<8x8xf32>
    %676 = arith.mulf %674, %675 : vector<8x8xf32>
    %677 = vector.broadcast %604 : vector<1x8xf32> to vector<8x8xf32>
    %678 = arith.addf %676, %677 : vector<8x8xf32>
    %c0_259 = arith.constant 0 : index
    %c48 = arith.constant 48 : index
    %679 = vector.load %arg21[%c0_259, %c48] : memref<16x64xf32, #tpu.memory_space<vmem>>, vector<8x8xf32>
    tpu.vector_store %arg21[%c0_259, %c48], %678 {strides = array<i32>} : memref<16x64xf32, #tpu.memory_space<vmem>>, vector<8x8xf32>,
    %680 = vector.broadcast %672 : vector<8x1xf32> to vector<8x8xf32>
    %681 = arith.mulf %660, %680 : vector<8x8xf32>
    %682 = vector.broadcast %603 : vector<1x8xf32> to vector<8x8xf32>
    %683 = arith.mulf %681, %682 : vector<8x8xf32>
    %684 = vector.broadcast %605 : vector<1x8xf32> to vector<8x8xf32>
    %685 = arith.addf %683, %684 : vector<8x8xf32>
    %c0_260 = arith.constant 0 : index
    %c56 = arith.constant 56 : index
    %686 = vector.load %arg21[%c0_260, %c56] : memref<16x64xf32, #tpu.memory_space<vmem>>, vector<8x8xf32>
    tpu.vector_store %arg21[%c0_260, %c56], %685 {strides = array<i32>} : memref<16x64xf32, #tpu.memory_space<vmem>>, vector<8x8xf32>,
    %687 = vector.extract_strided_slice %82 {offsets = [8, 24], sizes = [8, 8], strides = [1, 1]} : vector<16x96xf32> to vector<8x8xf32>
    %688 = vector.extract_strided_slice %87 {offsets = [8, 56], sizes = [8, 8], strides = [1, 1]} : vector<16x96xf32> to vector<8x8xf32>
    %689 = vector.extract_strided_slice %87 {offsets = [8, 88], sizes = [8, 8], strides = [1, 1]} : vector<16x96xf32> to vector<8x8xf32>
    %690 = vector.extract_strided_slice %87 {offsets = [8, 24], sizes = [8, 8], strides = [1, 1]} : vector<16x96xf32> to vector<8x8xf32>
    %691 = vector.extract_strided_slice %82 {offsets = [8, 56], sizes = [8, 8], strides = [1, 1]} : vector<16x96xf32> to vector<8x8xf32>
    %692 = vector.extract_strided_slice %82 {offsets = [8, 88], sizes = [8, 8], strides = [1, 1]} : vector<16x96xf32> to vector<8x8xf32>
    %693 = vector.extract_strided_slice %38 {offsets = [8, 24], sizes = [8, 8], strides = [1, 1]} : vector<16x32xf32> to vector<8x8xf32>
    %cst_261 = arith.constant 0.353553385 : f32
    %694 = vector.broadcast %cst_261 : f32 to vector<8x8xf32>
    %695 = arith.mulf %687, %694 : vector<8x8xf32>
    %cst_262 = arith.constant dense<0.000000e+00> : vector<8x8xf32>
    %696 = tpu.matmul %695, %688, %cst_262 {dimension_numbers = #tpu.dot_dimension_numbers<[1], [1], [0], [0], [0, 0, 1, 0], [], []>} : vector<8x8xf32>, vector<8x8xf32>, vector<8x8xf32> -> vector<8x8xf32>
    %cst_263 = arith.constant dense<0xFF800000> : vector<8xf32>
    %697 = vector.multi_reduction <maximumf>, %696, %cst_263 [1] : vector<8x8xf32> to vector<8xf32>
    %698 = vector.shape_cast %697 : vector<8xf32> to vector<8x1xf32>
    %699 = vector.broadcast %698 : vector<8x1xf32> to vector<8x8xf32>
    %700 = arith.subf %696, %699 : vector<8x8xf32>
    %701 = math.exp %700 : vector<8x8xf32>
    %cst_264 = arith.constant dense<0.000000e+00> : vector<8xf32>
    %702 = vector.multi_reduction <add>, %701, %cst_264 [1] : vector<8x8xf32> to vector<8xf32>
    %703 = vector.shape_cast %702 : vector<8xf32> to vector<8x1xf32>
    %704 = tpu.reciprocal %703 {approx = true} : vector<8x1xf32> -> vector<8x1xf32>
    %705 = vector.broadcast %704 : vector<8x1xf32> to vector<8x8xf32>
    %706 = arith.mulf %701, %705 : vector<8x8xf32>
    %cst_265 = arith.constant dense<0.000000e+00> : vector<8x8xf32>
    %707 = tpu.matmul %706, %689, %cst_265 {dimension_numbers = #tpu.dot_dimension_numbers<[1], [0], [0], [1], [0, 0, 1, 1], [], []>} : vector<8x8xf32>, vector<8x8xf32>, vector<8x8xf32> -> vector<8x8xf32>
    %cst_266 = arith.constant dense<0.000000e+00> : vector<8x8xf32>
    %708 = tpu.matmul %707, %598, %cst_266 {dimension_numbers = #tpu.dot_dimension_numbers<[1], [0], [0], [1], [0, 0, 1, 1], [], []>} : vector<8x8xf32>, vector<8x8xf32>, vector<8x8xf32> -> vector<8x8xf32>
    %709 = vector.broadcast %599 : vector<1x8xf32> to vector<8x8xf32>
    %710 = arith.addf %708, %709 : vector<8x8xf32>
    %711 = arith.addf %693, %710 : vector<8x8xf32>
    %712 = vector.extract_strided_slice %77 {offsets = [8, 24], sizes = [8, 8], strides = [1, 1]} : vector<16x32xf32> to vector<8x8xf32>
    %cst_267 = arith.constant 0.353553385 : f32
    %713 = vector.broadcast %cst_267 : f32 to vector<8x8xf32>
    %714 = arith.mulf %690, %713 : vector<8x8xf32>
    %cst_268 = arith.constant dense<0.000000e+00> : vector<8x8xf32>
    %715 = tpu.matmul %714, %691, %cst_268 {dimension_numbers = #tpu.dot_dimension_numbers<[1], [1], [0], [0], [0, 0, 1, 0], [], []>} : vector<8x8xf32>, vector<8x8xf32>, vector<8x8xf32> -> vector<8x8xf32>
    %cst_269 = arith.constant dense<0xFF800000> : vector<8xf32>
    %716 = vector.multi_reduction <maximumf>, %715, %cst_269 [1] : vector<8x8xf32> to vector<8xf32>
    %717 = vector.shape_cast %716 : vector<8xf32> to vector<8x1xf32>
    %718 = vector.broadcast %717 : vector<8x1xf32> to vector<8x8xf32>
    %719 = arith.subf %715, %718 : vector<8x8xf32>
    %720 = math.exp %719 : vector<8x8xf32>
    %cst_270 = arith.constant dense<0.000000e+00> : vector<8xf32>
    %721 = vector.multi_reduction <add>, %720, %cst_270 [1] : vector<8x8xf32> to vector<8xf32>
    %722 = vector.shape_cast %721 : vector<8xf32> to vector<8x1xf32>
    %723 = tpu.reciprocal %722 {approx = true} : vector<8x1xf32> -> vector<8x1xf32>
    %724 = vector.broadcast %723 : vector<8x1xf32> to vector<8x8xf32>
    %725 = arith.mulf %720, %724 : vector<8x8xf32>
    %cst_271 = arith.constant dense<0.000000e+00> : vector<8x8xf32>
    %726 = tpu.matmul %725, %692, %cst_271 {dimension_numbers = #tpu.dot_dimension_numbers<[1], [0], [0], [1], [0, 0, 1, 1], [], []>} : vector<8x8xf32>, vector<8x8xf32>, vector<8x8xf32> -> vector<8x8xf32>
    %cst_272 = arith.constant dense<0.000000e+00> : vector<8x8xf32>
    %727 = tpu.matmul %726, %600, %cst_272 {dimension_numbers = #tpu.dot_dimension_numbers<[1], [0], [0], [1], [0, 0, 1, 1], [], []>} : vector<8x8xf32>, vector<8x8xf32>, vector<8x8xf32> -> vector<8x8xf32>
    %728 = vector.broadcast %601 : vector<1x8xf32> to vector<8x8xf32>
    %729 = arith.addf %727, %728 : vector<8x8xf32>
    %730 = arith.addf %712, %729 : vector<8x8xf32>
    %cst_273 = arith.constant dense<0.000000e+00> : vector<8xf32>
    %731 = vector.multi_reduction <add>, %711, %cst_273 [1] : vector<8x8xf32> to vector<8xf32>
    %732 = vector.shape_cast %731 : vector<8xf32> to vector<8x1xf32>
    %cst_274 = arith.constant dense<0.000000e+00> : vector<8xf32>
    %733 = vector.multi_reduction <add>, %730, %cst_274 [1] : vector<8x8xf32> to vector<8xf32>
    %734 = vector.shape_cast %733 : vector<8xf32> to vector<8x1xf32>
    %735 = arith.addf %732, %734 : vector<8x1xf32>
    %cst_275 = arith.constant 6.250000e-02 : f32
    %736 = vector.broadcast %cst_275 : f32 to vector<8x1xf32>
    %737 = arith.mulf %735, %736 : vector<8x1xf32>
    %738 = vector.broadcast %737 : vector<8x1xf32> to vector<8x8xf32>
    %739 = arith.subf %711, %738 : vector<8x8xf32>
    %740 = vector.broadcast %737 : vector<8x1xf32> to vector<8x8xf32>
    %741 = arith.subf %730, %740 : vector<8x8xf32>
    %742 = arith.mulf %739, %739 : vector<8x8xf32>
    %cst_276 = arith.constant dense<0.000000e+00> : vector<8xf32>
    %743 = vector.multi_reduction <add>, %742, %cst_276 [1] : vector<8x8xf32> to vector<8xf32>
    %744 = vector.shape_cast %743 : vector<8xf32> to vector<8x1xf32>
    %745 = arith.mulf %741, %741 : vector<8x8xf32>
    %cst_277 = arith.constant dense<0.000000e+00> : vector<8xf32>
    %746 = vector.multi_reduction <add>, %745, %cst_277 [1] : vector<8x8xf32> to vector<8xf32>
    %747 = vector.shape_cast %746 : vector<8xf32> to vector<8x1xf32>
    %748 = arith.addf %744, %747 : vector<8x1xf32>
    %cst_278 = arith.constant 6.250000e-02 : f32
    %749 = vector.broadcast %cst_278 : f32 to vector<8x1xf32>
    %750 = arith.mulf %748, %749 : vector<8x1xf32>
    %cst_279 = arith.constant 9.99999974E-6 : f32
    %751 = vector.broadcast %cst_279 : f32 to vector<8x1xf32>
    %752 = arith.addf %750, %751 : vector<8x1xf32>
    %753 = math.rsqrt %752 : vector<8x1xf32>
    %754 = vector.broadcast %753 : vector<8x1xf32> to vector<8x8xf32>
    %755 = arith.mulf %739, %754 : vector<8x8xf32>
    %756 = vector.broadcast %602 : vector<1x8xf32> to vector<8x8xf32>
    %757 = arith.mulf %755, %756 : vector<8x8xf32>
    %758 = vector.broadcast %604 : vector<1x8xf32> to vector<8x8xf32>
    %759 = arith.addf %757, %758 : vector<8x8xf32>
    %c8_280 = arith.constant 8 : index
    %c48_281 = arith.constant 48 : index
    %760 = vector.load %arg21[%c8_280, %c48_281] : memref<16x64xf32, #tpu.memory_space<vmem>>, vector<8x8xf32>
    tpu.vector_store %arg21[%c8_280, %c48_281], %759 {strides = array<i32>} : memref<16x64xf32, #tpu.memory_space<vmem>>, vector<8x8xf32>,
    %761 = vector.broadcast %753 : vector<8x1xf32> to vector<8x8xf32>
    %762 = arith.mulf %741, %761 : vector<8x8xf32>
    %763 = vector.broadcast %603 : vector<1x8xf32> to vector<8x8xf32>
    %764 = arith.mulf %762, %763 : vector<8x8xf32>
    %765 = vector.broadcast %605 : vector<1x8xf32> to vector<8x8xf32>
    %766 = arith.addf %764, %765 : vector<8x8xf32>
    %c8_282 = arith.constant 8 : index
    %c56_283 = arith.constant 56 : index
    %767 = vector.load %arg21[%c8_282, %c56_283] : memref<16x64xf32, #tpu.memory_space<vmem>>, vector<8x8xf32>
    tpu.vector_store %arg21[%c8_282, %c56_283], %766 {strides = array<i32>} : memref<16x64xf32, #tpu.memory_space<vmem>>, vector<8x8xf32>,
    return
  }
  func.func @transform_0(%arg0: i32) -> (i32, i32) {
    %c0_i32 = arith.constant 0 : i32
    %c0_i32_0 = arith.constant 0 : i32
    %c0_i32_1 = arith.constant 0 : i32
    return %c0_i32, %c0_i32_0 : i32, i32
  }
  func.func @transform_1(%arg0: i32) -> (i32, i32) {
    %c0_i32 = arith.constant 0 : i32
    %c0_i32_0 = arith.constant 0 : i32
    %c0_i32_1 = arith.constant 0 : i32
    return %c0_i32, %c0_i32_0 : i32, i32
  }
  func.func @transform_2(%arg0: i32) -> (i32, i32) {
    %c0_i32 = arith.constant 0 : i32
    %c0_i32_0 = arith.constant 0 : i32
    %c0_i32_1 = arith.constant 0 : i32
    return %c0_i32, %c0_i32_0 : i32, i32
  }
  func.func @transform_3(%arg0: i32) -> (i32, i32) {
    %c0_i32 = arith.constant 0 : i32
    %c0_i32_0 = arith.constant 0 : i32
    %c0_i32_1 = arith.constant 0 : i32
    return %c0_i32, %c0_i32_0 : i32, i32
  }
  func.func @transform_4(%arg0: i32) -> (i32, i32) {
    %c0_i32 = arith.constant 0 : i32
    %c0_i32_0 = arith.constant 0 : i32
    %c0_i32_1 = arith.constant 0 : i32
    return %c0_i32, %c0_i32_0 : i32, i32
  }
  func.func @transform_5(%arg0: i32) -> (i32, i32) {
    %c0_i32 = arith.constant 0 : i32
    %c0_i32_0 = arith.constant 0 : i32
    %c0_i32_1 = arith.constant 0 : i32
    return %c0_i32, %c0_i32_0 : i32, i32
  }
  func.func @transform_6(%arg0: i32) -> (i32, i32) {
    %c0_i32 = arith.constant 0 : i32
    %c0_i32_0 = arith.constant 0 : i32
    %c0_i32_1 = arith.constant 0 : i32
    return %c0_i32, %c0_i32_0 : i32, i32
  }
  func.func @transform_7(%arg0: i32) -> (i32, i32) {
    %c0_i32 = arith.constant 0 : i32
    %c0_i32_0 = arith.constant 0 : i32
    %c0_i32_1 = arith.constant 0 : i32
    return %c0_i32, %c0_i32_0 : i32, i32
  }
  func.func @transform_8(%arg0: i32) -> (i32, i32) {
    %c0_i32 = arith.constant 0 : i32
    %c0_i32_0 = arith.constant 0 : i32
    %c0_i32_1 = arith.constant 0 : i32
    return %c0_i32, %c0_i32_0 : i32, i32
  }
  func.func @transform_9(%arg0: i32) -> (i32, i32) {
    %c0_i32 = arith.constant 0 : i32
    %c0_i32_0 = arith.constant 0 : i32
    %c0_i32_1 = arith.constant 0 : i32
    return %c0_i32, %c0_i32_0 : i32, i32
  }
  func.func @transform_10(%arg0: i32) -> (i32, i32) {
    %c0_i32 = arith.constant 0 : i32
    %c0_i32_0 = arith.constant 0 : i32
    %c0_i32_1 = arith.constant 0 : i32
    return %c0_i32, %c0_i32_0 : i32, i32
  }
  func.func @transform_11(%arg0: i32) -> (i32, i32) {
    %c0_i32 = arith.constant 0 : i32
    %c0_i32_0 = arith.constant 0 : i32
    %c0_i32_1 = arith.constant 0 : i32
    return %c0_i32, %c0_i32_0 : i32, i32
  }
  func.func @transform_12(%arg0: i32) -> (i32, i32) {
    %c0_i32 = arith.constant 0 : i32
    %c0_i32_0 = arith.constant 0 : i32
    %c0_i32_1 = arith.constant 0 : i32
    return %c0_i32, %c0_i32_0 : i32, i32
  }
  func.func @transform_13(%arg0: i32) -> (i32, i32) {
    %c0_i32 = arith.constant 0 : i32
    %c0_i32_0 = arith.constant 0 : i32
    %c0_i32_1 = arith.constant 0 : i32
    return %c0_i32, %c0_i32_0 : i32, i32
  }
  func.func @transform_14(%arg0: i32) -> (i32, i32) {
    %c0_i32 = arith.constant 0 : i32
    %c0_i32_0 = arith.constant 0 : i32
    %c0_i32_1 = arith.constant 0 : i32
    return %c0_i32, %c0_i32_0 : i32, i32
  }
  func.func @transform_15(%arg0: i32) -> (i32, i32) {
    %c0_i32 = arith.constant 0 : i32
    %c0_i32_0 = arith.constant 0 : i32
    %c0_i32_1 = arith.constant 0 : i32
    return %c0_i32, %c0_i32_0 : i32, i32
  }
  func.func @transform_16(%arg0: i32) -> (i32, i32) {
    %c0_i32 = arith.constant 0 : i32
    %c0_i32_0 = arith.constant 0 : i32
    %c0_i32_1 = arith.constant 0 : i32
    return %c0_i32, %c0_i32_0 : i32, i32
  }
  func.func @transform_17(%arg0: i32) -> (i32, i32) {
    %c0_i32 = arith.constant 0 : i32
    %c0_i32_0 = arith.constant 0 : i32
    %c0_i32_1 = arith.constant 0 : i32
    return %c0_i32, %c0_i32_0 : i32, i32
  }
  func.func @transform_18(%arg0: i32) -> (i32, i32) {
    %c0_i32 = arith.constant 0 : i32
    %c0_i32_0 = arith.constant 0 : i32
    %c0_i32_1 = arith.constant 0 : i32
    return %c0_i32, %c0_i32_0 : i32, i32
  }
  func.func @transform_19(%arg0: i32) -> (i32, i32) {
    %c0_i32 = arith.constant 0 : i32
    %c0_i32_0 = arith.constant 0 : i32
    %c0_i32_1 = arith.constant 0 : i32
    return %c0_i32, %c0_i32_0 : i32, i32
  }
  func.func @transform_20(%arg0: i32) -> (i32, i32) {
    %c0_i32 = arith.constant 0 : i32
    %c0_i32_0 = arith.constant 0 : i32
    %c0_i32_1 = arith.constant 0 : i32
    return %c0_i32, %c0_i32_0 : i32, i32
  }
}

</mosaic_0001>

<llo_original>
// kernel: multi_head_cross_attention.1
$region0: #{multi_head_cross_attention.1}
  #allocation0 [shape = 'u32[]', space=smem, size = 0x4, offset = 0x4, fixed_abs, tag = 'smem constant byte address 0x4 - core index']
  #allocation1 [shape = 'u32[72,128]{1,0:T(1,128)}', space=vmem, size = 0x9000, scoped, tag = 'internal scratch']
  %s0 = inlined_call_operand.hbm [shape: f32[16,16], index: 0, kind: input, shape index: {}]
  %s1 = inlined_call_operand.hbm [shape: f32[16,24], index: 1, kind: input, shape index: {}]
  %s2 = inlined_call_operand.vmem [shape: f32[16,32], index: 2, kind: input, shape index: {}]
  %s3 = inlined_call_operand.hbm [shape: f32[1,32], index: 3, kind: input, shape index: {}]
  %s4 = inlined_call_operand.hbm [shape: f32[1,32], index: 4, kind: input, shape index: {}]
  %s5 = inlined_call_operand.hbm [shape: f32[1,32], index: 5, kind: input, shape index: {}]
  %s6 = inlined_call_operand.hbm [shape: f32[24,32], index: 6, kind: input, shape index: {}]
  %s7 = inlined_call_operand.hbm [shape: f32[1,32], index: 7, kind: input, shape index: {}]
  %s8 = inlined_call_operand.hbm [shape: f32[1,32], index: 8, kind: input, shape index: {}]
  %s9 = inlined_call_operand.hbm [shape: f32[1,32], index: 9, kind: input, shape index: {}]
  %s10 = inlined_call_operand.vmem [shape: f32[32,96], index: 10, kind: input, shape index: {}]
  %s11 = inlined_call_operand.hbm [shape: f32[1,96], index: 11, kind: input, shape index: {}]
  %s12 = inlined_call_operand.vmem [shape: f32[32,96], index: 12, kind: input, shape index: {}]
  %s13 = inlined_call_operand.hbm [shape: f32[1,96], index: 13, kind: input, shape index: {}]
  %s14 = inlined_call_operand.vmem [shape: f32[32,8], index: 14, kind: input, shape index: {}]
  %s15 = inlined_call_operand.hbm [shape: f32[4,8], index: 15, kind: input, shape index: {}]
  %s16 = inlined_call_operand.vmem [shape: f32[32,8], index: 16, kind: input, shape index: {}]
  %s17 = inlined_call_operand.hbm [shape: f32[4,8], index: 17, kind: input, shape index: {}]
  %s18 = inlined_call_operand.hbm [shape: f32[4,16], index: 18, kind: input, shape index: {}]
  %s19 = inlined_call_operand.hbm [shape: f32[4,16], index: 19, kind: input, shape index: {}]
  %s20 = inlined_call_operand.vmem [shape: f32[16,64], index: 20, kind: output, shape index: {}]
  %s21 = sld [smem:[#allocation0]]
  $region150: #{multi_head_cross_attention.1} parent=0
    _
  %s23 = ssub.s32 1, %s21
  %s24 = scalar_select 0, %s23, %s21
  $region1: #{multi_head_cross_attention.1} parent=0
    #allocation2 [shape = 'u8[8192]{0}', space=vmem, size = 0x2000, scoped, tag = 'input window, operand 0, single buffered']
    #allocation3 [shape = 's32[1]{0}', space=sflag, size = 0x4, scoped, tag = 'scoped memory for multi_head_cross_attention.1']
    #allocation4 [shape = 'u8[8192]{0}', space=vmem, size = 0x2000, scoped, tag = 'input window, operand 1, single buffered']
    #allocation5 [shape = 's32[1]{0}', space=sflag, size = 0x4, scoped, tag = 'scoped memory for multi_head_cross_attention.1']
    #allocation6 [shape = 'u8[512]{0}', space=vmem, size = 0x400, scoped, tag = 'input window, operand 3, single buffered']
    #allocation7 [shape = 'u8[512]{0}', space=vmem, size = 0x400, scoped, tag = 'input window, operand 4, single buffered']
    #allocation8 [shape = 's32[1]{0}', space=sflag, size = 0x4, scoped, tag = 'scoped memory for multi_head_cross_attention.1']
    #allocation9 [shape = 'u8[512]{0}', space=vmem, size = 0x400, scoped, tag = 'input window, operand 5, single buffered']
    #allocation10 [shape = 'u8[12288]{0}', space=vmem, size = 0x3000, scoped, tag = 'input window, operand 6, single buffered']
    #allocation11 [shape = 's32[1]{0}', space=sflag, size = 0x4, scoped, tag = 'scoped memory for multi_head_cross_attention.1']
    #allocation12 [shape = 'u8[512]{0}', space=vmem, size = 0x400, scoped, tag = 'input window, operand 7, single buffered']
    #allocation13 [shape = 'u8[512]{0}', space=vmem, size = 0x400, scoped, tag = 'input window, operand 8, single buffered']
    #allocation14 [shape = 's32[1]{0}', space=sflag, size = 0x4, scoped, tag = 'scoped memory for multi_head_cross_attention.1']
    #allocation15 [shape = 'u8[512]{0}', space=vmem, size = 0x400, scoped, tag = 'input window, operand 9, single buffered']
    #allocation16 [shape = 'u8[512]{0}', space=vmem, size = 0x400, scoped, tag = 'input window, operand 11, single buffered']
    #allocation17 [shape = 's32[1]{0}', space=sflag, size = 0x4, scoped, tag = 'scoped memory for multi_head_cross_attention.1']
    #allocation18 [shape = 'u8[512]{0}', space=vmem, size = 0x400, scoped, tag = 'input window, operand 13, single buffered']
    #allocation19 [shape = 'u8[2048]{0}', space=vmem, size = 0x800, scoped, tag = 'input window, operand 15, single buffered']
    #allocation20 [shape = 's32[1]{0}', space=sflag, size = 0x4, scoped, tag = 'scoped memory for multi_head_cross_attention.1']
    #allocation21 [shape = 'u8[2048]{0}', space=vmem, size = 0x800, scoped, tag = 'input window, operand 17, single buffered']
    #allocation22 [shape = 'u8[2048]{0}', space=vmem, size = 0x800, scoped, tag = 'input window, operand 18, single buffered']
    #allocation23 [shape = 's32[1]{0}', space=sflag, size = 0x4, scoped, tag = 'scoped memory for multi_head_cross_attention.1']
    #allocation24 [shape = 'u8[2048]{0}', space=vmem, size = 0x800, scoped, tag = 'input window, operand 19, single buffered']
    %25 = vsyncpa [#allocation3], 0
    %26 = vsyncpa [#allocation5], 0
    %27 = vsyncpa [#allocation8], 0
    %28 = vsyncpa [#allocation11], 0
    %29 = vsyncpa [#allocation14], 0
    %30 = vsyncpa [#allocation17], 0
    %31 = vsyncpa [#allocation20], 0
    %32 = vsyncpa [#allocation23], 0
    // Predicated region
    $region2: #{multi_head_cross_attention.1} parent=1 // pred_check
      _
    $region3: #{multi_head_cross_attention.1} parent=1 // pred_check_branch
      %34 = sbr.rel (0) target = $region5
    $region4: #{multi_head_cross_attention.1} parent=1 // pred_region
      %36 = vsyncadd [#allocation3], 0
      %s37 = sshll.u32 %s0, 4
      %s38 = int_to_ptr.hbm [resolvable:$true] %s37
      %s39 = sshll.u32 [#allocation2], 4
      %s40 = int_to_ptr.vmem [resolvable:$true] %s39
      %45 = dma.hbm_to_vmem [thread:$0]  %s38, 256, %s40, [#allocation3], 128, 128, 8
    $region5: #{multi_head_cross_attention.1} parent=1 // pred_fallthru
      _
    // Predicated region
    $region6: #{multi_head_cross_attention.1} parent=1 // pred_check
      _
    $region7: #{multi_head_cross_attention.1} parent=1 // pred_check_branch
      %47 = sbr.rel (0) target = $region9
    $region8: #{multi_head_cross_attention.1} parent=1 // pred_region
      %49 = vsyncadd [#allocation5], 0
      %s50 = sshll.u32 %s1, 4
      %s51 = int_to_ptr.hbm [resolvable:$true] %s50
      %s52 = sshll.u32 [#allocation4], 4
      %s53 = int_to_ptr.vmem [resolvable:$true] %s52
      %58 = dma.hbm_to_vmem [thread:$0]  %s51, 256, %s53, [#allocation5], 128, 128, 8
    $region9: #{multi_head_cross_attention.1} parent=1 // pred_fallthru
      _
    // Predicated region
    $region10: #{multi_head_cross_attention.1} parent=1 // pred_check
      _
    $region11: #{multi_head_cross_attention.1} parent=1 // pred_check_branch
      %60 = sbr.rel (0) target = $region13
    $region12: #{multi_head_cross_attention.1} parent=1 // pred_region
      _
    $region13: #{multi_head_cross_attention.1} parent=1 // pred_fallthru
      _
    // Predicated region
    $region14: #{multi_head_cross_attention.1} parent=1 // pred_check
      _
    $region15: #{multi_head_cross_attention.1} parent=1 // pred_check_branch
      %62 = sbr.rel (0) target = $region17
    $region16: #{multi_head_cross_attention.1} parent=1 // pred_region
      %64 = vsyncadd [#allocation5], 0
      %s66 = sshll.u32 %s3, 4
      %s67 = int_to_ptr.hbm [resolvable:$true] %s66
      %s68 = sshll.u32 [#allocation6], 4
      %s69 = int_to_ptr.vmem [resolvable:$true] %s68
      %71 = dma.hbm_to_vmem [thread:$0]  %s67, 16, %s69, [#allocation5]
    $region17: #{multi_head_cross_attention.1} parent=1 // pred_fallthru
      _
    // Predicated region
    $region18: #{multi_head_cross_attention.1} parent=1 // pred_check
      _
    $region19: #{multi_head_cross_attention.1} parent=1 // pred_check_branch
      %73 = sbr.rel (0) target = $region21
    $region20: #{multi_head_cross_attention.1} parent=1 // pred_region
      %75 = vsyncadd [#allocation8], 0
      %s77 = sshll.u32 %s4, 4
      %s78 = int_to_ptr.hbm [resolvable:$true] %s77
      %s79 = sshll.u32 [#allocation7], 4
      %s80 = int_to_ptr.vmem [resolvable:$true] %s79
      %82 = dma.hbm_to_vmem [thread:$0]  %s78, 16, %s80, [#allocation8]
    $region21: #{multi_head_cross_attention.1} parent=1 // pred_fallthru
      _
    // Predicated region
    $region22: #{multi_head_cross_attention.1} parent=1 // pred_check
      _
    $region23: #{multi_head_cross_attention.1} parent=1 // pred_check_branch
      %84 = sbr.rel (0) target = $region25
    $region24: #{multi_head_cross_attention.1} parent=1 // pred_region
      %86 = vsyncadd [#allocation8], 0
      %s88 = sshll.u32 %s5, 4
      %s89 = int_to_ptr.hbm [resolvable:$true] %s88
      %s90 = sshll.u32 [#allocation9], 4
      %s91 = int_to_ptr.vmem [resolvable:$true] %s90
      %93 = dma.hbm_to_vmem [thread:$0]  %s89, 16, %s91, [#allocation8]
    $region25: #{multi_head_cross_attention.1} parent=1 // pred_fallthru
      _
    // Predicated region
    $region26: #{multi_head_cross_attention.1} parent=1 // pred_check
      _
    $region27: #{multi_head_cross_attention.1} parent=1 // pred_check_branch
      %95 = sbr.rel (0) target = $region29
    $region28: #{multi_head_cross_attention.1} parent=1 // pred_region
      %97 = vsyncadd [#allocation11], 0
      %s98 = sshll.u32 %s6, 4
      %s99 = int_to_ptr.hbm [resolvable:$true] %s98
      %s100 = sshll.u32 [#allocation10], 4
      %s101 = int_to_ptr.vmem [resolvable:$true] %s100
      %106 = dma.hbm_to_vmem [thread:$0]  %s99, 384, %s101, [#allocation11], 128, 128, 8
    $region29: #{multi_head_cross_attention.1} parent=1 // pred_fallthru
      _
    // Predicated region
    $region30: #{multi_head_cross_attention.1} parent=1 // pred_check
      _
    $region31: #{multi_head_cross_attention.1} parent=1 // pred_check_branch
      %108 = sbr.rel (0) target = $region33
    $region32: #{multi_head_cross_attention.1} parent=1 // pred_region
      %110 = vsyncadd [#allocation11], 0
      %s112 = sshll.u32 %s7, 4
      %s113 = int_to_ptr.hbm [resolvable:$true] %s112
      %s114 = sshll.u32 [#allocation12], 4
      %s115 = int_to_ptr.vmem [resolvable:$true] %s114
      %117 = dma.hbm_to_vmem [thread:$0]  %s113, 16, %s115, [#allocation11]
    $region33: #{multi_head_cross_attention.1} parent=1 // pred_fallthru
      _
    // Predicated region
    $region34: #{multi_head_cross_attention.1} parent=1 // pred_check
      _
    $region35: #{multi_head_cross_attention.1} parent=1 // pred_check_branch
      %119 = sbr.rel (0) target = $region37
    $region36: #{multi_head_cross_attention.1} parent=1 // pred_region
      %121 = vsyncadd [#allocation14], 0
      %s123 = sshll.u32 %s8, 4
      %s124 = int_to_ptr.hbm [resolvable:$true] %s123
      %s125 = sshll.u32 [#allocation13], 4
      %s126 = int_to_ptr.vmem [resolvable:$true] %s125
      %128 = dma.hbm_to_vmem [thread:$0]  %s124, 16, %s126, [#allocation14]
    $region37: #{multi_head_cross_attention.1} parent=1 // pred_fallthru
      _
    // Predicated region
    $region38: #{multi_head_cross_attention.1} parent=1 // pred_check
      _
    $region39: #{multi_head_cross_attention.1} parent=1 // pred_check_branch
      %130 = sbr.rel (0) target = $region41
    $region40: #{multi_head_cross_attention.1} parent=1 // pred_region
      %132 = vsyncadd [#allocation14], 0
      %s134 = sshll.u32 %s9, 4
      %s135 = int_to_ptr.hbm [resolvable:$true] %s134
      %s136 = sshll.u32 [#allocation15], 4
      %s137 = int_to_ptr.vmem [resolvable:$true] %s136
      %139 = dma.hbm_to_vmem [thread:$0]  %s135, 16, %s137, [#allocation14]
    $region41: #{multi_head_cross_attention.1} parent=1 // pred_fallthru
      _
    // Predicated region
    $region42: #{multi_head_cross_attention.1} parent=1 // pred_check
      _
    $region43: #{multi_head_cross_attention.1} parent=1 // pred_check_branch
      %141 = sbr.rel (0) target = $region45
    $region44: #{multi_head_cross_attention.1} parent=1 // pred_region
      _
    $region45: #{multi_head_cross_attention.1} parent=1 // pred_fallthru
      _
    // Predicated region
    $region46: #{multi_head_cross_attention.1} parent=1 // pred_check
      _
    $region47: #{multi_head_cross_attention.1} parent=1 // pred_check_branch
      %143 = sbr.rel (0) target = $region49
    $region48: #{multi_head_cross_attention.1} parent=1 // pred_region
      %145 = vsyncadd [#allocation17], 0
      %s147 = sshll.u32 %s11, 4
      %s148 = int_to_ptr.hbm [resolvable:$true] %s147
      %s149 = sshll.u32 [#allocation16], 4
      %s150 = int_to_ptr.vmem [resolvable:$true] %s149
      %152 = dma.hbm_to_vmem [thread:$0]  %s148, 16, %s150, [#allocation17]
    $region49: #{multi_head_cross_attention.1} parent=1 // pred_fallthru
      _
    // Predicated region
    $region50: #{multi_head_cross_attention.1} parent=1 // pred_check
      _
    $region51: #{multi_head_cross_attention.1} parent=1 // pred_check_branch
      %154 = sbr.rel (0) target = $region53
    $region52: #{multi_head_cross_attention.1} parent=1 // pred_region
      _
    $region53: #{multi_head_cross_attention.1} parent=1 // pred_fallthru
      _
    // Predicated region
    $region54: #{multi_head_cross_attention.1} parent=1 // pred_check
      _
    $region55: #{multi_head_cross_attention.1} parent=1 // pred_check_branch
      %156 = sbr.rel (0) target = $region57
    $region56: #{multi_head_cross_attention.1} parent=1 // pred_region
      %158 = vsyncadd [#allocation17], 0
      %s160 = sshll.u32 %s13, 4
      %s161 = int_to_ptr.hbm [resolvable:$true] %s160
      %s162 = sshll.u32 [#allocation18], 4
      %s163 = int_to_ptr.vmem [resolvable:$true] %s162
      %165 = dma.hbm_to_vmem [thread:$0]  %s161, 16, %s163, [#allocation17]
    $region57: #{multi_head_cross_attention.1} parent=1 // pred_fallthru
      _
    // Predicated region
    $region58: #{multi_head_cross_attention.1} parent=1 // pred_check
      _
    $region59: #{multi_head_cross_attention.1} parent=1 // pred_check_branch
      %167 = sbr.rel (0) target = $region61
    $region60: #{multi_head_cross_attention.1} parent=1 // pred_region
      _
    $region61: #{multi_head_cross_attention.1} parent=1 // pred_fallthru
      _
    // Predicated region
    $region62: #{multi_head_cross_attention.1} parent=1 // pred_check
      _
    $region63: #{multi_head_cross_attention.1} parent=1 // pred_check_branch
      %169 = sbr.rel (0) target = $region65
    $region64: #{multi_head_cross_attention.1} parent=1 // pred_region
      %171 = vsyncadd [#allocation20], 0
      %s173 = sshll.u32 %s15, 4
      %s174 = int_to_ptr.hbm [resolvable:$true] %s173
      %s175 = sshll.u32 [#allocation19], 4
      %s176 = int_to_ptr.vmem [resolvable:$true] %s175
      %178 = dma.hbm_to_vmem [thread:$0]  %s174, 64, %s176, [#allocation20]
    $region65: #{multi_head_cross_attention.1} parent=1 // pred_fallthru
      _
    // Predicated region
    $region66: #{multi_head_cross_attention.1} parent=1 // pred_check
      _
    $region67: #{multi_head_cross_attention.1} parent=1 // pred_check_branch
      %180 = sbr.rel (0) target = $region69
    $region68: #{multi_head_cross_attention.1} parent=1 // pred_region
      _
    $region69: #{multi_head_cross_attention.1} parent=1 // pred_fallthru
      _
    // Predicated region
    $region70: #{multi_head_cross_attention.1} parent=1 // pred_check
      _
    $region71: #{multi_head_cross_attention.1} parent=1 // pred_check_branch
      %182 = sbr.rel (0) target = $region73
    $region72: #{multi_head_cross_attention.1} parent=1 // pred_region
      %184 = vsyncadd [#allocation20], 0
      %s186 = sshll.u32 %s17, 4
      %s187 = int_to_ptr.hbm [resolvable:$true] %s186
      %s188 = sshll.u32 [#allocation21], 4
      %s189 = int_to_ptr.vmem [resolvable:$true] %s188
      %191 = dma.hbm_to_vmem [thread:$0]  %s187, 64, %s189, [#allocation20]
    $region73: #{multi_head_cross_attention.1} parent=1 // pred_fallthru
      _
    // Predicated region
    $region74: #{multi_head_cross_attention.1} parent=1 // pred_check
      _
    $region75: #{multi_head_cross_attention.1} parent=1 // pred_check_branch
      %193 = sbr.rel (0) target = $region77
    $region76: #{multi_head_cross_attention.1} parent=1 // pred_region
      %195 = vsyncadd [#allocation23], 0
      %s197 = sshll.u32 %s18, 4
      %s198 = int_to_ptr.hbm [resolvable:$true] %s197
      %s199 = sshll.u32 [#allocation22], 4
      %s200 = int_to_ptr.vmem [resolvable:$true] %s199
      %202 = dma.hbm_to_vmem [thread:$0]  %s198, 64, %s200, [#allocation23]
    $region77: #{multi_head_cross_attention.1} parent=1 // pred_fallthru
      _
    // Predicated region
    $region78: #{multi_head_cross_attention.1} parent=1 // pred_check
      _
    $region79: #{multi_head_cross_attention.1} parent=1 // pred_check_branch
      %204 = sbr.rel (0) target = $region81
    $region80: #{multi_head_cross_attention.1} parent=1 // pred_region
      %206 = vsyncadd [#allocation23], 0
      %s208 = sshll.u32 %s19, 4
      %s209 = int_to_ptr.hbm [resolvable:$true] %s208
      %s210 = sshll.u32 [#allocation24], 4
      %s211 = int_to_ptr.vmem [resolvable:$true] %s210
      %213 = dma.hbm_to_vmem [thread:$0]  %s209, 64, %s211, [#allocation23]
    $region81: #{multi_head_cross_attention.1} parent=1 // pred_fallthru
      _
    // Predicated region
    $region82: #{multi_head_cross_attention.1} parent=1 // pred_check
      _
    $region83: #{multi_head_cross_attention.1} parent=1 // pred_check_branch
      %215 = sbr.rel (0) target = $region85
    $region84: #{multi_head_cross_attention.1} parent=1 // pred_region
      %217 = dma.done [#allocation3], 256
    $region85: #{multi_head_cross_attention.1} parent=1 // pred_fallthru
      _
    // Predicated region
    $region86: #{multi_head_cross_attention.1} parent=1 // pred_check
      _
    $region87: #{multi_head_cross_attention.1} parent=1 // pred_check_branch
      %219 = sbr.rel (0) target = $region89
    $region88: #{multi_head_cross_attention.1} parent=1 // pred_region
      %221 = dma.done [#allocation5], 256
    $region89: #{multi_head_cross_attention.1} parent=1 // pred_fallthru
      _
    // Predicated region
    $region90: #{multi_head_cross_attention.1} parent=1 // pred_check
      _
    $region91: #{multi_head_cross_attention.1} parent=1 // pred_check_branch
      %223 = sbr.rel (0) target = $region93
    $region92: #{multi_head_cross_attention.1} parent=1 // pred_region
      %225 = dma.done [#allocation5], 16
    $region93: #{multi_head_cross_attention.1} parent=1 // pred_fallthru
      _
    // Predicated region
    $region94: #{multi_head_cross_attention.1} parent=1 // pred_check
      _
    $region95: #{multi_head_cross_attention.1} parent=1 // pred_check_branch
      %227 = sbr.rel (0) target = $region97
    $region96: #{multi_head_cross_attention.1} parent=1 // pred_region
      %229 = dma.done [#allocation8], 16
    $region97: #{multi_head_cross_attention.1} parent=1 // pred_fallthru
      _
    // Predicated region
    $region98: #{multi_head_cross_attention.1} parent=1 // pred_check
      _
    $region99: #{multi_head_cross_attention.1} parent=1 // pred_check_branch
      %231 = sbr.rel (0) target = $region101
    $region100: #{multi_head_cross_attention.1} parent=1 // pred_region
      %233 = dma.done [#allocation8], 16
    $region101: #{multi_head_cross_attention.1} parent=1 // pred_fallthru
      _
    // Predicated region
    $region102: #{multi_head_cross_attention.1} parent=1 // pred_check
      _
    $region103: #{multi_head_cross_attention.1} parent=1 // pred_check_branch
      %235 = sbr.rel (0) target = $region105
    $region104: #{multi_head_cross_attention.1} parent=1 // pred_region
      %237 = dma.done [#allocation11], 384
    $region105: #{multi_head_cross_attention.1} parent=1 // pred_fallthru
      _
    // Predicated region
    $region106: #{multi_head_cross_attention.1} parent=1 // pred_check
      _
    $region107: #{multi_head_cross_attention.1} parent=1 // pred_check_branch
      %239 = sbr.rel (0) target = $region109
    $region108: #{multi_head_cross_attention.1} parent=1 // pred_region
      %241 = dma.done [#allocation11], 16
    $region109: #{multi_head_cross_attention.1} parent=1 // pred_fallthru
      _
    // Predicated region
    $region110: #{multi_head_cross_attention.1} parent=1 // pred_check
      _
    $region111: #{multi_head_cross_attention.1} parent=1 // pred_check_branch
      %243 = sbr.rel (0) target = $region113
    $region112: #{multi_head_cross_attention.1} parent=1 // pred_region
      %245 = dma.done [#allocation14], 16
    $region113: #{multi_head_cross_attention.1} parent=1 // pred_fallthru
      _
    // Predicated region
    $region114: #{multi_head_cross_attention.1} parent=1 // pred_check
      _
    $region115: #{multi_head_cross_attention.1} parent=1 // pred_check_branch
      %247 = sbr.rel (0) target = $region117
    $region116: #{multi_head_cross_attention.1} parent=1 // pred_region
      %249 = dma.done [#allocation14], 16
    $region117: #{multi_head_cross_attention.1} parent=1 // pred_fallthru
      _
    // Predicated region
    $region118: #{multi_head_cross_attention.1} parent=1 // pred_check
      _
    $region119: #{multi_head_cross_attention.1} parent=1 // pred_check_branch
      %251 = sbr.rel (0) target = $region121
    $region120: #{multi_head_cross_attention.1} parent=1 // pred_region
      %253 = dma.done [#allocation17], 16
    $region121: #{multi_head_cross_attention.1} parent=1 // pred_fallthru
      _
    // Predicated region
    $region122: #{multi_head_cross_attention.1} parent=1 // pred_check
      _
    $region123: #{multi_head_cross_attention.1} parent=1 // pred_check_branch
      %255 = sbr.rel (0) target = $region125
    $region124: #{multi_head_cross_attention.1} parent=1 // pred_region
      %257 = dma.done [#allocation17], 16
    $region125: #{multi_head_cross_attention.1} parent=1 // pred_fallthru
      _
    // Predicated region
    $region126: #{multi_head_cross_attention.1} parent=1 // pred_check
      _
    $region127: #{multi_head_cross_attention.1} parent=1 // pred_check_branch
      %259 = sbr.rel (0) target = $region129
    $region128: #{multi_head_cross_attention.1} parent=1 // pred_region
      %261 = dma.done [#allocation20], 64
    $region129: #{multi_head_cross_attention.1} parent=1 // pred_fallthru
      _
    // Predicated region
    $region130: #{multi_head_cross_attention.1} parent=1 // pred_check
      _
    $region131: #{multi_head_cross_attention.1} parent=1 // pred_check_branch
      %263 = sbr.rel (0) target = $region133
    $region132: #{multi_head_cross_attention.1} parent=1 // pred_region
      %265 = dma.done [#allocation20], 64
    $region133: #{multi_head_cross_attention.1} parent=1 // pred_fallthru
      _
    // Predicated region
    $region134: #{multi_head_cross_attention.1} parent=1 // pred_check
      _
    $region135: #{multi_head_cross_attention.1} parent=1 // pred_check_branch
      %267 = sbr.rel (0) target = $region137
    $region136: #{multi_head_cross_attention.1} parent=1 // pred_region
      %269 = dma.done [#allocation23], 64
    $region137: #{multi_head_cross_attention.1} parent=1 // pred_fallthru
      _
    // Predicated region
    $region138: #{multi_head_cross_attention.1} parent=1 // pred_check
      _
    $region139: #{multi_head_cross_attention.1} parent=1 // pred_check_branch
      %271 = sbr.rel (0) target = $region141
    $region140: #{multi_head_cross_attention.1} parent=1 // pred_region
      %273 = dma.done [#allocation23], 64
    $region141: #{multi_head_cross_attention.1} parent=1 // pred_fallthru
      _
    %v274 = vld [vmem:[#allocation2] sm:$0xff]
    %v275 = vld [vmem:[#allocation2 + $0x8] sm:$0xff]
    %v276 = vld [vmem:[%s2] sm:$0xff]
    %v277 = vld [vmem:[%s2 + $0x8] sm:$0xff]
    %v278 = vld [vmem:[#allocation6] sm:$0x1]
    %v279 = vld [vmem:[#allocation7] sm:$0x1]
    %v280 = vld [vmem:[#allocation9] sm:$0x1]
    %v282 = vperm.slane %v278, 0
    %vm284 = vcmask 130048
    %v286 = vsel %vm284, %v274, 0
    %v289 = vsel %vm284, %v275, 0
    %291 = vmatpush.msra.mxu0 0.0
    %292 = vmatpush.msra.mxu0 0.0
    %293 = vmatpush.msra.mxu0 0.0
    %294 = vmatpush.msra.mxu0 0.0
    %295 = vmatpush.msra.mxu0 0.0
    %296 = vmatpush.msra.mxu0 0.0
    %297 = vmatpush.msra.mxu0 0.0
    %298 = vmatpush.msra.mxu0 0.0
    %299 = vmatpush.msra.mxu0 0.0
    %300 = vmatpush.msra.mxu0 0.0
    %301 = vmatpush.msra.mxu0 0.0
    %302 = vmatpush.msra.mxu0 0.0
    %303 = vmatpush.msra.mxu0 0.0
    %304 = vmatpush.msra.mxu0 0.0
    %305 = vmatpush.msra.mxu0 %v277
    %306 = vmatpush.msra.mxu0 %v276
    %307 = vmatmul.f32.gmra.mxu0 %v286
    %v308 = vpop.f32.mrf.mxu0
    %v309 = vadd.f32 %v282, %v308
    %310 = vmatmul.f32.gmra.mxu0 %v289
    %v311 = vpop.f32.mrf.mxu0
    %v312 = vadd.f32 %v282, %v311
    %313 = vdwg.mxu0
    %vm314 = vcmask 261120
    %v315 = vsel %vm314, %v309, 0.0
    %316 = vadd.xlane.f32.xlu0 %v315
    %v317 = vpop.xlane.xlu0 %316
    %v318 = vsel %vm314, %v312, 0.0
    %319 = vadd.xlane.f32.xlu0 %v318
    %v320 = vpop.xlane.xlu0 %319
    %v321 = vrcp.pop 32.0
    %v322 = vmul.f32 32.0, %v321
    %v323 = vsub.f32 1.0, %v322
    %v324 = vmul.f32 %v321, %v323
    %v325 = vadd.f32 %v321, %v324
    %vm326 = vweird.f32 %v321
    %v327 = vsel %vm326, %v321, %v325
    %v328 = vmul.f32 %v317, %v327
    %v329 = vmul.f32 %v320, %v327
    %v330 = vsub.f32 %v309, %v328
    %v331 = vsub.f32 %v312, %v329
    %v332 = vmul.f32 %v330, %v330
    %v333 = vmul.f32 %v331, %v331
    %v334 = vsel %vm314, %v332, 0.0
    %335 = vadd.xlane.f32.xlu0 %v334
    %v336 = vpop.xlane.xlu0 %335
    %v337 = vsel %vm314, %v333, 0.0
    %338 = vadd.xlane.f32.xlu0 %v337
    %v339 = vpop.xlane.xlu0 %338
    %v340 = vmul.f32 %v336, %v327
    %v341 = vmul.f32 %v339, %v327
    %v342 = vadd.f32 %v340, 1e-05
    %v343 = vadd.f32 %v341, 1e-05
    %v344 = vrsqrt.pop %v342
    %v345 = vmul.f32 %v344, %v342
    %v346 = vmul.f32 %v345, %v344
    %v347 = vmul.f32 0.5, %v346
    %v348 = vsub.f32 1.5, %v347
    %v349 = vmul.f32 %v344, %v348
    %vm350 = vweird.f32 %v342
    %vm351 = vweird.f32 %v344
    %vm352 = vmor %vm350, %vm351
    %v353 = vsel %vm352, %v344, %v349
    %v354 = vrsqrt.pop %v343
    %v355 = vmul.f32 %v354, %v343
    %v356 = vmul.f32 %v355, %v354
    %v357 = vmul.f32 0.5, %v356
    %v358 = vsub.f32 1.5, %v357
    %v359 = vmul.f32 %v354, %v358
    %vm360 = vweird.f32 %v343
    %vm361 = vweird.f32 %v354
    %vm362 = vmor %vm360, %vm361
    %v363 = vsel %vm362, %v354, %v359
    %v364 = vmul.f32 %v330, %v353
    %v365 = vmul.f32 %v331, %v363
    %v367 = vperm.slane %v279, 0
    %v369 = vmul.f32 %v364, %v367
    %v370 = vmul.f32 %v365, %v367
    %v372 = vperm.slane %v280, 0
    %v374 = vadd.f32 %v369, %v372
    %v375 = vadd.f32 %v370, %v372
    %v376 = vmul.f32 %v374, %v374
    %v377 = vmul.f32 %v375, %v375
    %v378 = vsel %vm314, %v376, 0.0
    %379 = vadd.xlane.f32.xlu0 %v378
    %v380 = vpop.xlane.xlu0 %379
    %v381 = vsel %vm314, %v377, 0.0
    %382 = vadd.xlane.f32.xlu0 %v381
    %v383 = vpop.xlane.xlu0 %382
    %v384 = vrsqrt.pop %v380
    %v385 = vmul.f32 %v384, %v380
    %v386 = vmul.f32 %v385, %v384
    %v387 = vmul.f32 0.5, %v386
    %v388 = vsub.f32 1.5, %v387
    %v389 = vmul.f32 %v384, %v388
    %v390 = vmul.f32 %v380, %v389
    %vm391 = vcmp.eq.f32.partialorder %v380, inf
    %v392 = vsel %vm391, %v380, %v390
    %vm393 = vcmp.eq.f32.partialorder %v380, 0.0
    %v394 = vand.u32 %v380, 2147483648
    %v395 = vsel %vm393, %v394, %v392
    %v396 = vrsqrt.pop %v383
    %v397 = vmul.f32 %v396, %v383
    %v398 = vmul.f32 %v397, %v396
    %v399 = vmul.f32 0.5, %v398
    %v400 = vsub.f32 1.5, %v399
    %v401 = vmul.f32 %v396, %v400
    %v402 = vmul.f32 %v383, %v401
    %vm403 = vcmp.eq.f32.partialorder %v383, inf
    %v404 = vsel %vm403, %v383, %v402
    %vm405 = vcmp.eq.f32.partialorder %v383, 0.0
    %v406 = vand.u32 %v383, 2147483648
    %v407 = vsel %vm405, %v406, %v404
    %v408 = vmax.f32 %v395, 1e-12
    %v409 = vmax.f32 %v407, 1e-12
    %v410 = vrcp.pop %v408
    %v411 = vrcp.pop %v409
    %v412 = vmul.f32 %v374, %v410
    %v413 = vmul.f32 %v375, %v411
    %v414 = vmul.f32 %v412, 0.35355338
    %v415 = vmul.f32 %v413, 0.35355338
    %v416 = vld [vmem:[#allocation4] sm:$0xff]
    %v417 = vld [vmem:[#allocation4 + $0x8] sm:$0xff]
    %v418 = vld [vmem:[#allocation10] sm:$0xff]
    %v419 = vld [vmem:[#allocation10 + $0x8] sm:$0xff]
    %v420 = vld [vmem:[#allocation10 + $0x10] sm:$0xff]
    %v421 = vld [vmem:[#allocation12] sm:$0x1]
    %v422 = vld [vmem:[#allocation13] sm:$0x1]
    %v423 = vld [vmem:[#allocation15] sm:$0x1]
    %v425 = vperm.slane %v421, 0
    %vm427 = vcmask 195584
    %v429 = vsel %vm427, %v416, 0
    %v432 = vsel %vm427, %v417, 0
    %434 = vmatpush.msra.mxu0 0.0
    %435 = vmatpush.msra.mxu0 0.0
    %436 = vmatpush.msra.mxu0 0.0
    %437 = vmatpush.msra.mxu0 0.0
    %438 = vmatpush.msra.mxu0 0.0
    %439 = vmatpush.msra.mxu0 0.0
    %440 = vmatpush.msra.mxu0 0.0
    %441 = vmatpush.msra.mxu0 0.0
    %442 = vmatpush.msra.mxu0 0.0
    %443 = vmatpush.msra.mxu0 0.0
    %444 = vmatpush.msra.mxu0 0.0
    %445 = vmatpush.msra.mxu0 0.0
    %446 = vmatpush.msra.mxu0 0.0
    %447 = vmatpush.msra.mxu0 %v420
    %448 = vmatpush.msra.mxu0 %v419
    %449 = vmatpush.msra.mxu0 %v418
    %450 = vmatmul.f32.gmra.mxu0 %v429
    %v451 = vpop.f32.mrf.mxu0
    %v452 = vadd.f32 %v425, %v451
    %453 = vmatmul.f32.gmra.mxu0 %v432
    %v454 = vpop.f32.mrf.mxu0
    %v455 = vadd.f32 %v425, %v454
    %456 = vdwg.mxu0
    %v457 = vsel %vm314, %v452, 0.0
    %458 = vadd.xlane.f32.xlu0 %v457
    %v459 = vpop.xlane.xlu0 %458
    %v460 = vsel %vm314, %v455, 0.0
    %461 = vadd.xlane.f32.xlu0 %v460
    %v462 = vpop.xlane.xlu0 %461
    %v463 = vmul.f32 %v459, %v327
    %v464 = vmul.f32 %v462, %v327
    %v465 = vsub.f32 %v452, %v463
    %v466 = vsub.f32 %v455, %v464
    %v467 = vmul.f32 %v465, %v465
    %v468 = vmul.f32 %v466, %v466
    %v469 = vsel %vm314, %v467, 0.0
    %470 = vadd.xlane.f32.xlu0 %v469
    %v471 = vpop.xlane.xlu0 %470
    %v472 = vsel %vm314, %v468, 0.0
    %473 = vadd.xlane.f32.xlu0 %v472
    %v474 = vpop.xlane.xlu0 %473
    %v475 = vmul.f32 %v471, %v327
    %v476 = vmul.f32 %v474, %v327
    %v477 = vadd.f32 %v475, 1e-05
    %v478 = vadd.f32 %v476, 1e-05
    %v479 = vrsqrt.pop %v477
    %v480 = vmul.f32 %v479, %v477
    %v481 = vmul.f32 %v480, %v479
    %v482 = vmul.f32 0.5, %v481
    %v483 = vsub.f32 1.5, %v482
    %v484 = vmul.f32 %v479, %v483
    %vm485 = vweird.f32 %v477
    %vm486 = vweird.f32 %v479
    %vm487 = vmor %vm485, %vm486
    %v488 = vsel %vm487, %v479, %v484
    %v489 = vrsqrt.pop %v478
    %v490 = vmul.f32 %v489, %v478
    %v491 = vmul.f32 %v490, %v489
    %v492 = vmul.f32 0.5, %v491
    %v493 = vsub.f32 1.5, %v492
    %v494 = vmul.f32 %v489, %v493
    %vm495 = vweird.f32 %v478
    %vm496 = vweird.f32 %v489
    %vm497 = vmor %vm495, %vm496
    %v498 = vsel %vm497, %v489, %v494
    %v499 = vmul.f32 %v465, %v488
    %v500 = vmul.f32 %v466, %v498
    %v502 = vperm.slane %v422, 0
    %v504 = vmul.f32 %v499, %v502
    %v505 = vmul.f32 %v500, %v502
    %v507 = vperm.slane %v423, 0
    %v509 = vadd.f32 %v504, %v507
    %v510 = vadd.f32 %v505, %v507
    %v511 = vmul.f32 %v509, %v509
    %v512 = vmul.f32 %v510, %v510
    %v513 = vsel %vm314, %v511, 0.0
    %514 = vadd.xlane.f32.xlu0 %v513
    %v515 = vpop.xlane.xlu0 %514
    %v516 = vsel %vm314, %v512, 0.0
    %517 = vadd.xlane.f32.xlu0 %v516
    %v518 = vpop.xlane.xlu0 %517
    %v519 = vrsqrt.pop %v515
    %v520 = vmul.f32 %v519, %v515
    %v521 = vmul.f32 %v520, %v519
    %v522 = vmul.f32 0.5, %v521
    %v523 = vsub.f32 1.5, %v522
    %v524 = vmul.f32 %v519, %v523
    %v525 = vmul.f32 %v515, %v524
    %vm526 = vcmp.eq.f32.partialorder %v515, inf
    %v527 = vsel %vm526, %v515, %v525
    %vm528 = vcmp.eq.f32.partialorder %v515, 0.0
    %v529 = vand.u32 %v515, 2147483648
    %v530 = vsel %vm528, %v529, %v527
    %v531 = vrsqrt.pop %v518
    %v532 = vmul.f32 %v531, %v518
    %v533 = vmul.f32 %v532, %v531
    %v534 = vmul.f32 0.5, %v533
    %v535 = vsub.f32 1.5, %v534
    %v536 = vmul.f32 %v531, %v535
    %v537 = vmul.f32 %v518, %v536
    %vm538 = vcmp.eq.f32.partialorder %v518, inf
    %v539 = vsel %vm538, %v518, %v537
    %vm540 = vcmp.eq.f32.partialorder %v518, 0.0
    %v541 = vand.u32 %v518, 2147483648
    %v542 = vsel %vm540, %v541, %v539
    %v543 = vmax.f32 %v530, 1e-12
    %v544 = vmax.f32 %v542, 1e-12
    %v545 = vrcp.pop %v543
    %v546 = vrcp.pop %v544
    %v547 = vmul.f32 %v509, %v545
    %v548 = vmul.f32 %v510, %v546
    %v549 = vmul.f32 %v547, 0.35355338
    %v550 = vmul.f32 %v548, 0.35355338
    %v551 = vld [vmem:[%s10] sm:$0xff]
    %v552 = vld [vmem:[%s10 + $0x8] sm:$0xff]
    %v553 = vld [vmem:[%s10 + $0x10] sm:$0xff]
    %v554 = vld [vmem:[%s10 + $0x18] sm:$0xff]
    %v555 = vld [vmem:[#allocation16] sm:$0x1]
    %v557 = vperm.slane %v555, 0
    %v560 = vsel %vm314, %v414, 0
    %v563 = vsel %vm314, %v415, 0
    %565 = vmatpush.msra.mxu0 0.0
    %566 = vmatpush.msra.mxu0 0.0
    %567 = vmatpush.msra.mxu0 0.0
    %568 = vmatpush.msra.mxu0 0.0
    %569 = vmatpush.msra.mxu0 0.0
    %570 = vmatpush.msra.mxu0 0.0
    %571 = vmatpush.msra.mxu0 0.0
    %572 = vmatpush.msra.mxu0 0.0
    %573 = vmatpush.msra.mxu0 0.0
    %574 = vmatpush.msra.mxu0 0.0
    %575 = vmatpush.msra.mxu0 0.0
    %576 = vmatpush.msra.mxu0 0.0
    %577 = vmatpush.msra.mxu0 %v554
    %578 = vmatpush.msra.mxu0 %v553
    %579 = vmatpush.msra.mxu0 %v552
    %580 = vmatpush.msra.mxu0 %v551
    %581 = vmatmul.f32.gmra.mxu0 %v560
    %v582 = vpop.f32.mrf.mxu0
    %v583 = vadd.f32 %v557, %v582
    %584 = vmatmul.f32.gmra.mxu0 %v563
    %v585 = vpop.f32.mrf.mxu0
    %v586 = vadd.f32 %v557, %v585
    %587 = vdwg.mxu0
    %v588 = vld [vmem:[%s12] sm:$0xff]
    %v589 = vld [vmem:[%s12 + $0x8] sm:$0xff]
    %v590 = vld [vmem:[%s12 + $0x10] sm:$0xff]
    %v591 = vld [vmem:[%s12 + $0x18] sm:$0xff]
    %v592 = vld [vmem:[#allocation18] sm:$0x1]
    %v594 = vperm.slane %v592, 0
    %v597 = vsel %vm314, %v549, 0
    %v600 = vsel %vm314, %v550, 0
    %602 = vmatpush.msra.mxu0 0.0
    %603 = vmatpush.msra.mxu0 0.0
    %604 = vmatpush.msra.mxu0 0.0
    %605 = vmatpush.msra.mxu0 0.0
    %606 = vmatpush.msra.mxu0 0.0
    %607 = vmatpush.msra.mxu0 0.0
    %608 = vmatpush.msra.mxu0 0.0
    %609 = vmatpush.msra.mxu0 0.0
    %610 = vmatpush.msra.mxu0 0.0
    %611 = vmatpush.msra.mxu0 0.0
    %612 = vmatpush.msra.mxu0 0.0
    %613 = vmatpush.msra.mxu0 0.0
    %614 = vmatpush.msra.mxu0 %v591
    %615 = vmatpush.msra.mxu0 %v590
    %616 = vmatpush.msra.mxu0 %v589
    %617 = vmatpush.msra.mxu0 %v588
    %618 = vmatmul.f32.gmra.mxu0 %v597
    %v619 = vpop.f32.mrf.mxu0
    %v620 = vadd.f32 %v594, %v619
    %621 = vmatmul.f32.gmra.mxu0 %v600
    %v622 = vpop.f32.mrf.mxu0
    %v623 = vadd.f32 %v594, %v622
    %624 = vdwg.mxu0
    %v625 = vld [vmem:[%s14] sm:$0xff]
    %v626 = vld [vmem:[#allocation19] sm:$0x1]
    %v627 = vld [vmem:[%s16] sm:$0xff]
    %v628 = vld [vmem:[#allocation21] sm:$0x1]
    %v629 = vld [vmem:[#allocation22] sm:$0x1]
    %v630 = vld [vmem:[#allocation24] sm:$0x1]
    %v631 = vmul.f32 %v583, 0.35355338
    %633 = vrot.lane.b32.xlu0 %v620, 96
    %v634 = vpop.permute.xlu0 %633
    %vm635 = vcmask 64512
    %v637 = vsel %vm635, %v631, 0
    %v639 = vsel %vm635, %v634, 0
    %641 = vmatpush.xpose.msra.mxu0 0.0
    %642 = vmatpush.xpose.msra.mxu0 0.0
    %643 = vmatpush.xpose.msra.mxu0 0.0
    %644 = vmatpush.xpose.msra.mxu0 0.0
    %645 = vmatpush.xpose.msra.mxu0 0.0
    %646 = vmatpush.xpose.msra.mxu0 0.0
    %647 = vmatpush.xpose.msra.mxu0 0.0
    %648 = vmatpush.xpose.msra.mxu0 0.0
    %649 = vmatpush.xpose.msra.mxu0 0.0
    %650 = vmatpush.xpose.msra.mxu0 0.0
    %651 = vmatpush.xpose.msra.mxu0 0.0
    %652 = vmatpush.xpose.msra.mxu0 0.0
    %653 = vmatpush.xpose.msra.mxu0 0.0
    %654 = vmatpush.xpose.msra.mxu0 0.0
    %655 = vmatpush.xpose.msra.mxu0 0.0
    %656 = vmatpush.xpose.msra.mxu0 %v639
    %657 = vmatmul.f32.gmra.mxu0 %v637
    %v658 = vpop.f32.mrf.mxu0
    %v659 = vadd.f32 0.0, %v658
    %660 = vdwg.mxu0
    %v661 = vsel %vm635, %v659, -inf
    %662 = vmax.xlane.f32.xlu0 %v661
    %v663 = vpop.xlane.xlu0 %662
    %v664 = vsub.f32 %v659, %v663
    %v665 = vmul.f32 %v664, 1.442695
    %v666 = vpow.pop %v665
    %v667 = vsel %vm635, %v666, 0.0
    %668 = vadd.xlane.f32.xlu0 %v667
    %v669 = vpop.xlane.xlu0 %668
    %v670 = vrcp.pop %v669
    %v671 = vmul.f32 %v666, %v670
    %672 = vrot.lane.b32.xlu0 %v620, 64
    %v673 = vpop.permute.xlu0 %672
    %v676 = vsel %vm635, %v671, 0
    %678 = vmatpush.msra.mxu0 0.0
    %679 = vmatpush.msra.mxu0 0.0
    %680 = vmatpush.msra.mxu0 0.0
    %681 = vmatpush.msra.mxu0 0.0
    %682 = vmatpush.msra.mxu0 0.0
    %683 = vmatpush.msra.mxu0 0.0
    %684 = vmatpush.msra.mxu0 0.0
    %685 = vmatpush.msra.mxu0 0.0
    %686 = vmatpush.msra.mxu0 0.0
    %687 = vmatpush.msra.mxu0 0.0
    %688 = vmatpush.msra.mxu0 0.0
    %689 = vmatpush.msra.mxu0 0.0
    %690 = vmatpush.msra.mxu0 0.0
    %691 = vmatpush.msra.mxu0 0.0
    %692 = vmatpush.msra.mxu0 0.0
    %693 = vmatpush.msra.mxu0 %v673
    %694 = vmatmul.f32.gmra.mxu0 %v676
    %v695 = vpop.f32.mrf.mxu0
    %v696 = vadd.f32 0.0, %v695
    %697 = vdwg.mxu0
    %v698 = vperm.slane %v626, 0
    %v700 = vsel %vm635, %v696, 0
    %702 = vmatpush.msra.mxu0 0.0
    %703 = vmatpush.msra.mxu0 0.0
    %704 = vmatpush.msra.mxu0 0.0
    %705 = vmatpush.msra.mxu0 0.0
    %706 = vmatpush.msra.mxu0 0.0
    %707 = vmatpush.msra.mxu0 0.0
    %708 = vmatpush.msra.mxu0 0.0
    %709 = vmatpush.msra.mxu0 0.0
    %710 = vmatpush.msra.mxu0 0.0
    %711 = vmatpush.msra.mxu0 0.0
    %712 = vmatpush.msra.mxu0 0.0
    %713 = vmatpush.msra.mxu0 0.0
    %714 = vmatpush.msra.mxu0 0.0
    %715 = vmatpush.msra.mxu0 0.0
    %716 = vmatpush.msra.mxu0 0.0
    %717 = vmatpush.msra.mxu0 %v625
    %718 = vmatmul.f32.gmra.mxu0 %v700
    %v719 = vpop.f32.mrf.mxu0
    %v720 = vadd.f32 %v698, %v719
    %721 = vdwg.mxu0
    %v722 = vadd.f32 %v414, %v720
    %v723 = vmul.f32 %v620, 0.35355338
    %725 = vrot.lane.b32.xlu0 %v583, 96
    %v726 = vpop.permute.xlu0 %725
    %v728 = vsel %vm635, %v723, 0
    %v730 = vsel %vm635, %v726, 0
    %732 = vmatpush.xpose.msra.mxu0 0.0
    %733 = vmatpush.xpose.msra.mxu0 0.0
    %734 = vmatpush.xpose.msra.mxu0 0.0
    %735 = vmatpush.xpose.msra.mxu0 0.0
    %736 = vmatpush.xpose.msra.mxu0 0.0
    %737 = vmatpush.xpose.msra.mxu0 0.0
    %738 = vmatpush.xpose.msra.mxu0 0.0
    %739 = vmatpush.xpose.msra.mxu0 0.0
    %740 = vmatpush.xpose.msra.mxu0 0.0
    %741 = vmatpush.xpose.msra.mxu0 0.0
    %742 = vmatpush.xpose.msra.mxu0 0.0
    %743 = vmatpush.xpose.msra.mxu0 0.0
    %744 = vmatpush.xpose.msra.mxu0 0.0
    %745 = vmatpush.xpose.msra.mxu0 0.0
    %746 = vmatpush.xpose.msra.mxu0 0.0
    %747 = vmatpush.xpose.msra.mxu0 %v730
    %748 = vmatmul.f32.gmra.mxu0 %v728
    %v749 = vpop.f32.mrf.mxu0
    %v750 = vadd.f32 0.0, %v749
    %751 = vdwg.mxu0
    %v752 = vsel %vm635, %v750, -inf
    %753 = vmax.xlane.f32.xlu0 %v752
    %v754 = vpop.xlane.xlu0 %753
    %v755 = vsub.f32 %v750, %v754
    %v756 = vmul.f32 %v755, 1.442695
    %v757 = vpow.pop %v756
    %v758 = vsel %vm635, %v757, 0.0
    %759 = vadd.xlane.f32.xlu0 %v758
    %v760 = vpop.xlane.xlu0 %759
    %v761 = vrcp.pop %v760
    %v762 = vmul.f32 %v757, %v761
    %763 = vrot.lane.b32.xlu0 %v583, 64
    %v764 = vpop.permute.xlu0 %763
    %v767 = vsel %vm635, %v762, 0
    %769 = vmatpush.msra.mxu0 0.0
    %770 = vmatpush.msra.mxu0 0.0
    %771 = vmatpush.msra.mxu0 0.0
    %772 = vmatpush.msra.mxu0 0.0
    %773 = vmatpush.msra.mxu0 0.0
    %774 = vmatpush.msra.mxu0 0.0
    %775 = vmatpush.msra.mxu0 0.0
    %776 = vmatpush.msra.mxu0 0.0
    %777 = vmatpush.msra.mxu0 0.0
    %778 = vmatpush.msra.mxu0 0.0
    %779 = vmatpush.msra.mxu0 0.0
    %780 = vmatpush.msra.mxu0 0.0
    %781 = vmatpush.msra.mxu0 0.0
    %782 = vmatpush.msra.mxu0 0.0
    %783 = vmatpush.msra.mxu0 0.0
    %784 = vmatpush.msra.mxu0 %v764
    %785 = vmatmul.f32.gmra.mxu0 %v767
    %v786 = vpop.f32.mrf.mxu0
    %v787 = vadd.f32 0.0, %v786
    %788 = vdwg.mxu0
    %v789 = vperm.slane %v628, 0
    %v791 = vsel %vm635, %v787, 0
    %793 = vmatpush.msra.mxu0 0.0
    %794 = vmatpush.msra.mxu0 0.0
    %795 = vmatpush.msra.mxu0 0.0
    %796 = vmatpush.msra.mxu0 0.0
    %797 = vmatpush.msra.mxu0 0.0
    %798 = vmatpush.msra.mxu0 0.0
    %799 = vmatpush.msra.mxu0 0.0
    %800 = vmatpush.msra.mxu0 0.0
    %801 = vmatpush.msra.mxu0 0.0
    %802 = vmatpush.msra.mxu0 0.0
    %803 = vmatpush.msra.mxu0 0.0
    %804 = vmatpush.msra.mxu0 0.0
    %805 = vmatpush.msra.mxu0 0.0
    %806 = vmatpush.msra.mxu0 0.0
    %807 = vmatpush.msra.mxu0 0.0
    %808 = vmatpush.msra.mxu0 %v627
    %809 = vmatmul.f32.gmra.mxu0 %v791
    %v810 = vpop.f32.mrf.mxu0
    %v811 = vadd.f32 %v789, %v810
    %812 = vdwg.mxu0
    %v813 = vadd.f32 %v549, %v811
    %v814 = vsel %vm635, %v722, 0.0
    %815 = vadd.xlane.f32.xlu0 %v814
    %v816 = vpop.xlane.xlu0 %815
    %v817 = vsel %vm635, %v813, 0.0
    %818 = vadd.xlane.f32.xlu0 %v817
    %v819 = vpop.xlane.xlu0 %818
    %v820 = vadd.f32 %v816, %v819
    %v821 = vmul.f32 %v820, 0.0625
    %v822 = vsub.f32 %v722, %v821
    %v823 = vsub.f32 %v813, %v821
    %v824 = vmul.f32 %v822, %v822
    %v825 = vsel %vm635, %v824, 0.0
    %826 = vadd.xlane.f32.xlu0 %v825
    %v827 = vpop.xlane.xlu0 %826
    %v828 = vmul.f32 %v823, %v823
    %v829 = vsel %vm635, %v828, 0.0
    %830 = vadd.xlane.f32.xlu0 %v829
    %v831 = vpop.xlane.xlu0 %830
    %v832 = vadd.f32 %v827, %v831
    %v833 = vmul.f32 %v832, 0.0625
    %v834 = vadd.f32 %v833, 1e-05
    %v835 = vrsqrt.pop %v834
    %v836 = vmul.f32 %v835, %v834
    %v837 = vmul.f32 %v836, %v835
    %v838 = vmul.f32 0.5, %v837
    %v839 = vsub.f32 1.5, %v838
    %v840 = vmul.f32 %v835, %v839
    %vm841 = vweird.f32 %v834
    %vm842 = vweird.f32 %v835
    %vm843 = vmor %vm841, %vm842
    %v844 = vsel %vm843, %v835, %v840
    %v845 = vmul.f32 %v822, %v844
    %v846 = vperm.slane %v629, 0
    %v847 = vmul.f32 %v845, %v846
    %v848 = vperm.slane %v630, 0
    %v849 = vadd.f32 %v847, %v848
    %850 = vst.msk [vmem:[%s20] sm:$0xff] %vm635, %v849
    %v851 = vmul.f32 %v823, %v844
    %853 = vrot.lane.b32.xlu0 %v846, 120
    %v854 = vpop.permute.xlu0 %853
    %v856 = vmul.f32 %v851, %v854
    %858 = vrot.lane.b32.xlu0 %v848, 120
    %v859 = vpop.permute.xlu0 %858
    %v861 = vadd.f32 %v856, %v859
    %863 = vrot.lane.b32.xlu0 %v861, 8
    %v864 = vpop.permute.xlu0 %863
    %vm866 = vcmask 130112
    %867 = vst.msk [vmem:[%s20] sm:$0xff] %vm866, %v864
    %v868 = vmul.f32 %v586, 0.35355338
    %870 = vrot.lane.b32.xlu0 %v623, 96
    %v871 = vpop.permute.xlu0 %870
    %v873 = vsel %vm635, %v868, 0
    %v875 = vsel %vm635, %v871, 0
    %877 = vmatpush.xpose.msra.mxu0 0.0
    %878 = vmatpush.xpose.msra.mxu0 0.0
    %879 = vmatpush.xpose.msra.mxu0 0.0
    %880 = vmatpush.xpose.msra.mxu0 0.0
    %881 = vmatpush.xpose.msra.mxu0 0.0
    %882 = vmatpush.xpose.msra.mxu0 0.0
    %883 = vmatpush.xpose.msra.mxu0 0.0
    %884 = vmatpush.xpose.msra.mxu0 0.0
    %885 = vmatpush.xpose.msra.mxu0 0.0
    %886 = vmatpush.xpose.msra.mxu0 0.0
    %887 = vmatpush.xpose.msra.mxu0 0.0
    %888 = vmatpush.xpose.msra.mxu0 0.0
    %889 = vmatpush.xpose.msra.mxu0 0.0
    %890 = vmatpush.xpose.msra.mxu0 0.0
    %891 = vmatpush.xpose.msra.mxu0 0.0
    %892 = vmatpush.xpose.msra.mxu0 %v875
    %893 = vmatmul.f32.gmra.mxu0 %v873
    %v894 = vpop.f32.mrf.mxu0
    %v895 = vadd.f32 0.0, %v894
    %896 = vdwg.mxu0
    %v897 = vsel %vm635, %v895, -inf
    %898 = vmax.xlane.f32.xlu0 %v897
    %v899 = vpop.xlane.xlu0 %898
    %v900 = vsub.f32 %v895, %v899
    %v901 = vmul.f32 %v900, 1.442695
    %v902 = vpow.pop %v901
    %v903 = vsel %vm635, %v902, 0.0
    %904 = vadd.xlane.f32.xlu0 %v903
    %v905 = vpop.xlane.xlu0 %904
    %v906 = vrcp.pop %v905
    %v907 = vmul.f32 %v902, %v906
    %908 = vrot.lane.b32.xlu0 %v623, 64
    %v909 = vpop.permute.xlu0 %908
    %v912 = vsel %vm635, %v907, 0
    %914 = vmatpush.msra.mxu0 0.0
    %915 = vmatpush.msra.mxu0 0.0
    %916 = vmatpush.msra.mxu0 0.0
    %917 = vmatpush.msra.mxu0 0.0
    %918 = vmatpush.msra.mxu0 0.0
    %919 = vmatpush.msra.mxu0 0.0
    %920 = vmatpush.msra.mxu0 0.0
    %921 = vmatpush.msra.mxu0 0.0
    %922 = vmatpush.msra.mxu0 0.0
    %923 = vmatpush.msra.mxu0 0.0
    %924 = vmatpush.msra.mxu0 0.0
    %925 = vmatpush.msra.mxu0 0.0
    %926 = vmatpush.msra.mxu0 0.0
    %927 = vmatpush.msra.mxu0 0.0
    %928 = vmatpush.msra.mxu0 0.0
    %929 = vmatpush.msra.mxu0 %v909
    %930 = vmatmul.f32.gmra.mxu0 %v912
    %v931 = vpop.f32.mrf.mxu0
    %v932 = vadd.f32 0.0, %v931
    %933 = vdwg.mxu0
    %v935 = vsel %vm635, %v932, 0
    %937 = vmatpush.msra.mxu0 0.0
    %938 = vmatpush.msra.mxu0 0.0
    %939 = vmatpush.msra.mxu0 0.0
    %940 = vmatpush.msra.mxu0 0.0
    %941 = vmatpush.msra.mxu0 0.0
    %942 = vmatpush.msra.mxu0 0.0
    %943 = vmatpush.msra.mxu0 0.0
    %944 = vmatpush.msra.mxu0 0.0
    %945 = vmatpush.msra.mxu0 0.0
    %946 = vmatpush.msra.mxu0 0.0
    %947 = vmatpush.msra.mxu0 0.0
    %948 = vmatpush.msra.mxu0 0.0
    %949 = vmatpush.msra.mxu0 0.0
    %950 = vmatpush.msra.mxu0 0.0
    %951 = vmatpush.msra.mxu0 0.0
    %952 = vmatpush.msra.mxu0 %v625
    %953 = vmatmul.f32.gmra.mxu0 %v935
    %v954 = vpop.f32.mrf.mxu0
    %v955 = vadd.f32 %v698, %v954
    %956 = vdwg.mxu0
    %v957 = vadd.f32 %v415, %v955
    %v958 = vmul.f32 %v623, 0.35355338
    %960 = vrot.lane.b32.xlu0 %v586, 96
    %v961 = vpop.permute.xlu0 %960
    %v963 = vsel %vm635, %v958, 0
    %v965 = vsel %vm635, %v961, 0
    %967 = vmatpush.xpose.msra.mxu0 0.0
    %968 = vmatpush.xpose.msra.mxu0 0.0
    %969 = vmatpush.xpose.msra.mxu0 0.0
    %970 = vmatpush.xpose.msra.mxu0 0.0
    %971 = vmatpush.xpose.msra.mxu0 0.0
    %972 = vmatpush.xpose.msra.mxu0 0.0
    %973 = vmatpush.xpose.msra.mxu0 0.0
    %974 = vmatpush.xpose.msra.mxu0 0.0
    %975 = vmatpush.xpose.msra.mxu0 0.0
    %976 = vmatpush.xpose.msra.mxu0 0.0
    %977 = vmatpush.xpose.msra.mxu0 0.0
    %978 = vmatpush.xpose.msra.mxu0 0.0
    %979 = vmatpush.xpose.msra.mxu0 0.0
    %980 = vmatpush.xpose.msra.mxu0 0.0
    %981 = vmatpush.xpose.msra.mxu0 0.0
    %982 = vmatpush.xpose.msra.mxu0 %v965
    %983 = vmatmul.f32.gmra.mxu0 %v963
    %v984 = vpop.f32.mrf.mxu0
    %v985 = vadd.f32 0.0, %v984
    %986 = vdwg.mxu0
    %v987 = vsel %vm635, %v985, -inf
    %988 = vmax.xlane.f32.xlu0 %v987
    %v989 = vpop.xlane.xlu0 %988
    %v990 = vsub.f32 %v985, %v989
    %v991 = vmul.f32 %v990, 1.442695
    %v992 = vpow.pop %v991
    %v993 = vsel %vm635, %v992, 0.0
    %994 = vadd.xlane.f32.xlu0 %v993
    %v995 = vpop.xlane.xlu0 %994
    %v996 = vrcp.pop %v995
    %v997 = vmul.f32 %v992, %v996
    %998 = vrot.lane.b32.xlu0 %v586, 64
    %v999 = vpop.permute.xlu0 %998
    %v1002 = vsel %vm635, %v997, 0
    %1004 = vmatpush.msra.mxu0 0.0
    %1005 = vmatpush.msra.mxu0 0.0
    %1006 = vmatpush.msra.mxu0 0.0
    %1007 = vmatpush.msra.mxu0 0.0
    %1008 = vmatpush.msra.mxu0 0.0
    %1009 = vmatpush.msra.mxu0 0.0
    %1010 = vmatpush.msra.mxu0 0.0
    %1011 = vmatpush.msra.mxu0 0.0
    %1012 = vmatpush.msra.mxu0 0.0
    %1013 = vmatpush.msra.mxu0 0.0
    %1014 = vmatpush.msra.mxu0 0.0
    %1015 = vmatpush.msra.mxu0 0.0
    %1016 = vmatpush.msra.mxu0 0.0
    %1017 = vmatpush.msra.mxu0 0.0
    %1018 = vmatpush.msra.mxu0 0.0
    %1019 = vmatpush.msra.mxu0 %v999
    %1020 = vmatmul.f32.gmra.mxu0 %v1002
    %v1021 = vpop.f32.mrf.mxu0
    %v1022 = vadd.f32 0.0, %v1021
    %1023 = vdwg.mxu0
    %v1025 = vsel %vm635, %v1022, 0
    %1027 = vmatpush.msra.mxu0 0.0
    %1028 = vmatpush.msra.mxu0 0.0
    %1029 = vmatpush.msra.mxu0 0.0
    %1030 = vmatpush.msra.mxu0 0.0
    %1031 = vmatpush.msra.mxu0 0.0
    %1032 = vmatpush.msra.mxu0 0.0
    %1033 = vmatpush.msra.mxu0 0.0
    %1034 = vmatpush.msra.mxu0 0.0
    %1035 = vmatpush.msra.mxu0 0.0
    %1036 = vmatpush.msra.mxu0 0.0
    %1037 = vmatpush.msra.mxu0 0.0
    %1038 = vmatpush.msra.mxu0 0.0
    %1039 = vmatpush.msra.mxu0 0.0
    %1040 = vmatpush.msra.mxu0 0.0
    %1041 = vmatpush.msra.mxu0 0.0
    %1042 = vmatpush.msra.mxu0 %v627
    %1043 = vmatmul.f32.gmra.mxu0 %v1025
    %v1044 = vpop.f32.mrf.mxu0
    %v1045 = vadd.f32 %v789, %v1044
    %1046 = vdwg.mxu0
    %v1047 = vadd.f32 %v550, %v1045
    %v1048 = vsel %vm635, %v957, 0.0
    %1049 = vadd.xlane.f32.xlu0 %v1048
    %v1050 = vpop.xlane.xlu0 %1049
    %v1051 = vsel %vm635, %v1047, 0.0
    %1052 = vadd.xlane.f32.xlu0 %v1051
    %v1053 = vpop.xlane.xlu0 %1052
    %v1054 = vadd.f32 %v1050, %v1053
    %v1055 = vmul.f32 %v1054, 0.0625
    %v1056 = vsub.f32 %v957, %v1055
    %v1057 = vsub.f32 %v1047, %v1055
    %v1058 = vmul.f32 %v1056, %v1056
    %v1059 = vsel %vm635, %v1058, 0.0
    %1060 = vadd.xlane.f32.xlu0 %v1059
    %v1061 = vpop.xlane.xlu0 %1060
    %v1062 = vmul.f32 %v1057, %v1057
    %v1063 = vsel %vm635, %v1062, 0.0
    %1064 = vadd.xlane.f32.xlu0 %v1063
    %v1065 = vpop.xlane.xlu0 %1064
    %v1066 = vadd.f32 %v1061, %v1065
    %v1067 = vmul.f32 %v1066, 0.0625
    %v1068 = vadd.f32 %v1067, 1e-05
    %v1069 = vrsqrt.pop %v1068
    %v1070 = vmul.f32 %v1069, %v1068
    %v1071 = vmul.f32 %v1070, %v1069
    %v1072 = vmul.f32 0.5, %v1071
    %v1073 = vsub.f32 1.5, %v1072
    %v1074 = vmul.f32 %v1069, %v1073
    %vm1075 = vweird.f32 %v1068
    %vm1076 = vweird.f32 %v1069
    %vm1077 = vmor %vm1075, %vm1076
    %v1078 = vsel %vm1077, %v1069, %v1074
    %v1079 = vmul.f32 %v1056, %v1078
    %v1080 = vmul.f32 %v1079, %v846
    %v1081 = vadd.f32 %v1080, %v848
    %1082 = vst.msk [vmem:[%s20 + $0x8] sm:$0xff] %vm635, %v1081
    %v1083 = vmul.f32 %v1057, %v1078
    %v1084 = vmul.f32 %v1083, %v854
    %v1085 = vadd.f32 %v1084, %v859
    %1087 = vrot.lane.b32.xlu0 %v1085, 8
    %v1088 = vpop.permute.xlu0 %1087
    %1090 = vst.msk [vmem:[%s20 + $0x8] sm:$0xff] %vm866, %v1088
    %v1091 = vld [vmem:[%s14 + $0x8] sm:$0xff]
    %v1092 = vld [vmem:[#allocation19 + $0x1] sm:$0x1]
    %v1093 = vld [vmem:[%s16 + $0x8] sm:$0xff]
    %v1094 = vld [vmem:[#allocation21 + $0x1] sm:$0x1]
    %v1095 = vld [vmem:[#allocation22 + $0x1] sm:$0x1]
    %v1096 = vld [vmem:[#allocation24 + $0x1] sm:$0x1]
    %1097 = vrot.lane.b32.xlu0 %v631, 120
    %v1098 = vpop.permute.xlu0 %1097
    %1099 = vrot.lane.b32.xlu0 %v620, 88
    %v1100 = vpop.permute.xlu0 %1099
    %v1101 = vsel %vm635, %v1098, 0
    %v1103 = vsel %vm635, %v1100, 0
    %1105 = vmatpush.xpose.msra.mxu0 0.0
    %1106 = vmatpush.xpose.msra.mxu0 0.0
    %1107 = vmatpush.xpose.msra.mxu0 0.0
    %1108 = vmatpush.xpose.msra.mxu0 0.0
    %1109 = vmatpush.xpose.msra.mxu0 0.0
    %1110 = vmatpush.xpose.msra.mxu0 0.0
    %1111 = vmatpush.xpose.msra.mxu0 0.0
    %1112 = vmatpush.xpose.msra.mxu0 0.0
    %1113 = vmatpush.xpose.msra.mxu0 0.0
    %1114 = vmatpush.xpose.msra.mxu0 0.0
    %1115 = vmatpush.xpose.msra.mxu0 0.0
    %1116 = vmatpush.xpose.msra.mxu0 0.0
    %1117 = vmatpush.xpose.msra.mxu0 0.0
    %1118 = vmatpush.xpose.msra.mxu0 0.0
    %1119 = vmatpush.xpose.msra.mxu0 0.0
    %1120 = vmatpush.xpose.msra.mxu0 %v1103
    %1121 = vmatmul.f32.gmra.mxu0 %v1101
    %v1122 = vpop.f32.mrf.mxu0
    %v1123 = vadd.f32 0.0, %v1122
    %1124 = vdwg.mxu0
    %v1125 = vsel %vm635, %v1123, -inf
    %1126 = vmax.xlane.f32.xlu0 %v1125
    %v1127 = vpop.xlane.xlu0 %1126
    %v1128 = vsub.f32 %v1123, %v1127
    %v1129 = vmul.f32 %v1128, 1.442695
    %v1130 = vpow.pop %v1129
    %v1131 = vsel %vm635, %v1130, 0.0
    %1132 = vadd.xlane.f32.xlu0 %v1131
    %v1133 = vpop.xlane.xlu0 %1132
    %v1134 = vrcp.pop %v1133
    %v1135 = vmul.f32 %v1130, %v1134
    %1136 = vrot.lane.b32.xlu0 %v620, 56
    %v1137 = vpop.permute.xlu0 %1136
    %v1140 = vsel %vm635, %v1135, 0
    %1142 = vmatpush.msra.mxu0 0.0
    %1143 = vmatpush.msra.mxu0 0.0
    %1144 = vmatpush.msra.mxu0 0.0
    %1145 = vmatpush.msra.mxu0 0.0
    %1146 = vmatpush.msra.mxu0 0.0
    %1147 = vmatpush.msra.mxu0 0.0
    %1148 = vmatpush.msra.mxu0 0.0
    %1149 = vmatpush.msra.mxu0 0.0
    %1150 = vmatpush.msra.mxu0 0.0
    %1151 = vmatpush.msra.mxu0 0.0
    %1152 = vmatpush.msra.mxu0 0.0
    %1153 = vmatpush.msra.mxu0 0.0
    %1154 = vmatpush.msra.mxu0 0.0
    %1155 = vmatpush.msra.mxu0 0.0
    %1156 = vmatpush.msra.mxu0 0.0
    %1157 = vmatpush.msra.mxu0 %v1137
    %1158 = vmatmul.f32.gmra.mxu0 %v1140
    %v1159 = vpop.f32.mrf.mxu0
    %v1160 = vadd.f32 0.0, %v1159
    %1161 = vdwg.mxu0
    %v1162 = vperm.slane %v1092, 0
    %v1164 = vsel %vm635, %v1160, 0
    %1166 = vmatpush.msra.mxu0 0.0
    %1167 = vmatpush.msra.mxu0 0.0
    %1168 = vmatpush.msra.mxu0 0.0
    %1169 = vmatpush.msra.mxu0 0.0
    %1170 = vmatpush.msra.mxu0 0.0
    %1171 = vmatpush.msra.mxu0 0.0
    %1172 = vmatpush.msra.mxu0 0.0
    %1173 = vmatpush.msra.mxu0 0.0
    %1174 = vmatpush.msra.mxu0 0.0
    %1175 = vmatpush.msra.mxu0 0.0
    %1176 = vmatpush.msra.mxu0 0.0
    %1177 = vmatpush.msra.mxu0 0.0
    %1178 = vmatpush.msra.mxu0 0.0
    %1179 = vmatpush.msra.mxu0 0.0
    %1180 = vmatpush.msra.mxu0 0.0
    %1181 = vmatpush.msra.mxu0 %v1091
    %1182 = vmatmul.f32.gmra.mxu0 %v1164
    %v1183 = vpop.f32.mrf.mxu0
    %v1184 = vadd.f32 %v1162, %v1183
    %1185 = vdwg.mxu0
    %1187 = vrot.lane.b32.xlu0 %v1184, 8
    %v1188 = vpop.permute.xlu0 %1187
    %v1190 = vadd.f32 %v414, %v1188
    %1191 = vrot.lane.b32.xlu0 %v723, 120
    %v1192 = vpop.permute.xlu0 %1191
    %1193 = vrot.lane.b32.xlu0 %v583, 88
    %v1194 = vpop.permute.xlu0 %1193
    %v1195 = vsel %vm635, %v1192, 0
    %v1197 = vsel %vm635, %v1194, 0
    %1199 = vmatpush.xpose.msra.mxu0 0.0
    %1200 = vmatpush.xpose.msra.mxu0 0.0
    %1201 = vmatpush.xpose.msra.mxu0 0.0
    %1202 = vmatpush.xpose.msra.mxu0 0.0
    %1203 = vmatpush.xpose.msra.mxu0 0.0
    %1204 = vmatpush.xpose.msra.mxu0 0.0
    %1205 = vmatpush.xpose.msra.mxu0 0.0
    %1206 = vmatpush.xpose.msra.mxu0 0.0
    %1207 = vmatpush.xpose.msra.mxu0 0.0
    %1208 = vmatpush.xpose.msra.mxu0 0.0
    %1209 = vmatpush.xpose.msra.mxu0 0.0
    %1210 = vmatpush.xpose.msra.mxu0 0.0
    %1211 = vmatpush.xpose.msra.mxu0 0.0
    %1212 = vmatpush.xpose.msra.mxu0 0.0
    %1213 = vmatpush.xpose.msra.mxu0 0.0
    %1214 = vmatpush.xpose.msra.mxu0 %v1197
    %1215 = vmatmul.f32.gmra.mxu0 %v1195
    %v1216 = vpop.f32.mrf.mxu0
    %v1217 = vadd.f32 0.0, %v1216
    %1218 = vdwg.mxu0
    %v1219 = vsel %vm635, %v1217, -inf
    %1220 = vmax.xlane.f32.xlu0 %v1219
    %v1221 = vpop.xlane.xlu0 %1220
    %v1222 = vsub.f32 %v1217, %v1221
    %v1223 = vmul.f32 %v1222, 1.442695
    %v1224 = vpow.pop %v1223
    %v1225 = vsel %vm635, %v1224, 0.0
    %1226 = vadd.xlane.f32.xlu0 %v1225
    %v1227 = vpop.xlane.xlu0 %1226
    %v1228 = vrcp.pop %v1227
    %v1229 = vmul.f32 %v1224, %v1228
    %1230 = vrot.lane.b32.xlu0 %v583, 56
    %v1231 = vpop.permute.xlu0 %1230
    %v1234 = vsel %vm635, %v1229, 0
    %1236 = vmatpush.msra.mxu0 0.0
    %1237 = vmatpush.msra.mxu0 0.0
    %1238 = vmatpush.msra.mxu0 0.0
    %1239 = vmatpush.msra.mxu0 0.0
    %1240 = vmatpush.msra.mxu0 0.0
    %1241 = vmatpush.msra.mxu0 0.0
    %1242 = vmatpush.msra.mxu0 0.0
    %1243 = vmatpush.msra.mxu0 0.0
    %1244 = vmatpush.msra.mxu0 0.0
    %1245 = vmatpush.msra.mxu0 0.0
    %1246 = vmatpush.msra.mxu0 0.0
    %1247 = vmatpush.msra.mxu0 0.0
    %1248 = vmatpush.msra.mxu0 0.0
    %1249 = vmatpush.msra.mxu0 0.0
    %1250 = vmatpush.msra.mxu0 0.0
    %1251 = vmatpush.msra.mxu0 %v1231
    %1252 = vmatmul.f32.gmra.mxu0 %v1234
    %v1253 = vpop.f32.mrf.mxu0
    %v1254 = vadd.f32 0.0, %v1253
    %1255 = vdwg.mxu0
    %v1256 = vperm.slane %v1094, 0
    %v1258 = vsel %vm635, %v1254, 0
    %1260 = vmatpush.msra.mxu0 0.0
    %1261 = vmatpush.msra.mxu0 0.0
    %1262 = vmatpush.msra.mxu0 0.0
    %1263 = vmatpush.msra.mxu0 0.0
    %1264 = vmatpush.msra.mxu0 0.0
    %1265 = vmatpush.msra.mxu0 0.0
    %1266 = vmatpush.msra.mxu0 0.0
    %1267 = vmatpush.msra.mxu0 0.0
    %1268 = vmatpush.msra.mxu0 0.0
    %1269 = vmatpush.msra.mxu0 0.0
    %1270 = vmatpush.msra.mxu0 0.0
    %1271 = vmatpush.msra.mxu0 0.0
    %1272 = vmatpush.msra.mxu0 0.0
    %1273 = vmatpush.msra.mxu0 0.0
    %1274 = vmatpush.msra.mxu0 0.0
    %1275 = vmatpush.msra.mxu0 %v1093
    %1276 = vmatmul.f32.gmra.mxu0 %v1258
    %v1277 = vpop.f32.mrf.mxu0
    %v1278 = vadd.f32 %v1256, %v1277
    %1279 = vdwg.mxu0
    %1281 = vrot.lane.b32.xlu0 %v1278, 8
    %v1282 = vpop.permute.xlu0 %1281
    %v1284 = vadd.f32 %v549, %v1282
    %1286 = vrot.lane.b32.xlu0 %v1190, 120
    %v1287 = vpop.permute.xlu0 %1286
    %v1289 = vsel %vm635, %v1287, 0.0
    %1290 = vadd.xlane.f32.xlu0 %v1289
    %v1291 = vpop.xlane.xlu0 %1290
    %1293 = vrot.lane.b32.xlu0 %v1284, 120
    %v1294 = vpop.permute.xlu0 %1293
    %v1296 = vsel %vm635, %v1294, 0.0
    %1297 = vadd.xlane.f32.xlu0 %v1296
    %v1298 = vpop.xlane.xlu0 %1297
    %v1299 = vadd.f32 %v1291, %v1298
    %v1300 = vmul.f32 %v1299, 0.0625
    %v1301 = vsub.f32 %v1190, %v1300
    %v1302 = vsub.f32 %v1284, %v1300
    %v1303 = vmul.f32 %v1301, %v1301
    %1305 = vrot.lane.b32.xlu0 %v1303, 120
    %v1306 = vpop.permute.xlu0 %1305
    %v1308 = vsel %vm635, %v1306, 0.0
    %1309 = vadd.xlane.f32.xlu0 %v1308
    %v1310 = vpop.xlane.xlu0 %1309
    %v1311 = vmul.f32 %v1302, %v1302
    %1313 = vrot.lane.b32.xlu0 %v1311, 120
    %v1314 = vpop.permute.xlu0 %1313
    %v1316 = vsel %vm635, %v1314, 0.0
    %1317 = vadd.xlane.f32.xlu0 %v1316
    %v1318 = vpop.xlane.xlu0 %1317
    %v1319 = vadd.f32 %v1310, %v1318
    %v1320 = vmul.f32 %v1319, 0.0625
    %v1321 = vadd.f32 %v1320, 1e-05
    %v1322 = vrsqrt.pop %v1321
    %v1323 = vmul.f32 %v1322, %v1321
    %v1324 = vmul.f32 %v1323, %v1322
    %v1325 = vmul.f32 0.5, %v1324
    %v1326 = vsub.f32 1.5, %v1325
    %v1327 = vmul.f32 %v1322, %v1326
    %vm1328 = vweird.f32 %v1321
    %vm1329 = vweird.f32 %v1322
    %vm1330 = vmor %vm1328, %vm1329
    %v1331 = vsel %vm1330, %v1322, %v1327
    %v1332 = vmul.f32 %v1301, %v1331
    %v1333 = vperm.slane %v1095, 0
    %1335 = vrot.lane.b32.xlu0 %v1333, 8
    %v1336 = vpop.permute.xlu0 %1335
    %v1338 = vmul.f32 %v1332, %v1336
    %v1339 = vperm.slane %v1096, 0
    %1341 = vrot.lane.b32.xlu0 %v1339, 8
    %v1342 = vpop.permute.xlu0 %1341
    %v1344 = vadd.f32 %v1338, %v1342
    %1346 = vrot.lane.b32.xlu0 %v1344, 8
    %v1347 = vpop.permute.xlu0 %1346
    %vm1349 = vcmask 195712
    %1350 = vst.msk [vmem:[%s20] sm:$0xff] %vm1349, %v1347
    %v1351 = vmul.f32 %v1302, %v1331
    %v1352 = vmul.f32 %v1351, %v1333
    %v1353 = vadd.f32 %v1352, %v1339
    %1355 = vrot.lane.b32.xlu0 %v1353, 16
    %v1356 = vpop.permute.xlu0 %1355
    %vm1358 = vcmask 261312
    %1359 = vst.msk [vmem:[%s20] sm:$0xff] %vm1358, %v1356
    %1360 = vrot.lane.b32.xlu0 %v868, 120
    %v1361 = vpop.permute.xlu0 %1360
    %1362 = vrot.lane.b32.xlu0 %v623, 88
    %v1363 = vpop.permute.xlu0 %1362
    %v1364 = vsel %vm635, %v1361, 0
    %v1366 = vsel %vm635, %v1363, 0
    %1368 = vmatpush.xpose.msra.mxu0 0.0
    %1369 = vmatpush.xpose.msra.mxu0 0.0
    %1370 = vmatpush.xpose.msra.mxu0 0.0
    %1371 = vmatpush.xpose.msra.mxu0 0.0
    %1372 = vmatpush.xpose.msra.mxu0 0.0
    %1373 = vmatpush.xpose.msra.mxu0 0.0
    %1374 = vmatpush.xpose.msra.mxu0 0.0
    %1375 = vmatpush.xpose.msra.mxu0 0.0
    %1376 = vmatpush.xpose.msra.mxu0 0.0
    %1377 = vmatpush.xpose.msra.mxu0 0.0
    %1378 = vmatpush.xpose.msra.mxu0 0.0
    %1379 = vmatpush.xpose.msra.mxu0 0.0
    %1380 = vmatpush.xpose.msra.mxu0 0.0
    %1381 = vmatpush.xpose.msra.mxu0 0.0
    %1382 = vmatpush.xpose.msra.mxu0 0.0
    %1383 = vmatpush.xpose.msra.mxu0 %v1366
    %1384 = vmatmul.f32.gmra.mxu0 %v1364
    %v1385 = vpop.f32.mrf.mxu0
    %v1386 = vadd.f32 0.0, %v1385
    %1387 = vdwg.mxu0
    %v1388 = vsel %vm635, %v1386, -inf
    %1389 = vmax.xlane.f32.xlu0 %v1388
    %v1390 = vpop.xlane.xlu0 %1389
    %v1391 = vsub.f32 %v1386, %v1390
    %v1392 = vmul.f32 %v1391, 1.442695
    %v1393 = vpow.pop %v1392
    %v1394 = vsel %vm635, %v1393, 0.0
    %1395 = vadd.xlane.f32.xlu0 %v1394
    %v1396 = vpop.xlane.xlu0 %1395
    %v1397 = vrcp.pop %v1396
    %v1398 = vmul.f32 %v1393, %v1397
    %1399 = vrot.lane.b32.xlu0 %v623, 56
    %v1400 = vpop.permute.xlu0 %1399
    %v1403 = vsel %vm635, %v1398, 0
    %1405 = vmatpush.msra.mxu0 0.0
    %1406 = vmatpush.msra.mxu0 0.0
    %1407 = vmatpush.msra.mxu0 0.0
    %1408 = vmatpush.msra.mxu0 0.0
    %1409 = vmatpush.msra.mxu0 0.0
    %1410 = vmatpush.msra.mxu0 0.0
    %1411 = vmatpush.msra.mxu0 0.0
    %1412 = vmatpush.msra.mxu0 0.0
    %1413 = vmatpush.msra.mxu0 0.0
    %1414 = vmatpush.msra.mxu0 0.0
    %1415 = vmatpush.msra.mxu0 0.0
    %1416 = vmatpush.msra.mxu0 0.0
    %1417 = vmatpush.msra.mxu0 0.0
    %1418 = vmatpush.msra.mxu0 0.0
    %1419 = vmatpush.msra.mxu0 0.0
    %1420 = vmatpush.msra.mxu0 %v1400
    %1421 = vmatmul.f32.gmra.mxu0 %v1403
    %v1422 = vpop.f32.mrf.mxu0
    %v1423 = vadd.f32 0.0, %v1422
    %1424 = vdwg.mxu0
    %v1426 = vsel %vm635, %v1423, 0
    %1428 = vmatpush.msra.mxu0 0.0
    %1429 = vmatpush.msra.mxu0 0.0
    %1430 = vmatpush.msra.mxu0 0.0
    %1431 = vmatpush.msra.mxu0 0.0
    %1432 = vmatpush.msra.mxu0 0.0
    %1433 = vmatpush.msra.mxu0 0.0
    %1434 = vmatpush.msra.mxu0 0.0
    %1435 = vmatpush.msra.mxu0 0.0
    %1436 = vmatpush.msra.mxu0 0.0
    %1437 = vmatpush.msra.mxu0 0.0
    %1438 = vmatpush.msra.mxu0 0.0
    %1439 = vmatpush.msra.mxu0 0.0
    %1440 = vmatpush.msra.mxu0 0.0
    %1441 = vmatpush.msra.mxu0 0.0
    %1442 = vmatpush.msra.mxu0 0.0
    %1443 = vmatpush.msra.mxu0 %v1091
    %1444 = vmatmul.f32.gmra.mxu0 %v1426
    %v1445 = vpop.f32.mrf.mxu0
    %v1446 = vadd.f32 %v1162, %v1445
    %1447 = vdwg.mxu0
    %1449 = vrot.lane.b32.xlu0 %v1446, 8
    %v1450 = vpop.permute.xlu0 %1449
    %v1452 = vadd.f32 %v415, %v1450
    %1453 = vrot.lane.b32.xlu0 %v958, 120
    %v1454 = vpop.permute.xlu0 %1453
    %1455 = vrot.lane.b32.xlu0 %v586, 88
    %v1456 = vpop.permute.xlu0 %1455
    %v1457 = vsel %vm635, %v1454, 0
    %v1459 = vsel %vm635, %v1456, 0
    %1461 = vmatpush.xpose.msra.mxu0 0.0
    %1462 = vmatpush.xpose.msra.mxu0 0.0
    %1463 = vmatpush.xpose.msra.mxu0 0.0
    %1464 = vmatpush.xpose.msra.mxu0 0.0
    %1465 = vmatpush.xpose.msra.mxu0 0.0
    %1466 = vmatpush.xpose.msra.mxu0 0.0
    %1467 = vmatpush.xpose.msra.mxu0 0.0
    %1468 = vmatpush.xpose.msra.mxu0 0.0
    %1469 = vmatpush.xpose.msra.mxu0 0.0
    %1470 = vmatpush.xpose.msra.mxu0 0.0
    %1471 = vmatpush.xpose.msra.mxu0 0.0
    %1472 = vmatpush.xpose.msra.mxu0 0.0
    %1473 = vmatpush.xpose.msra.mxu0 0.0
    %1474 = vmatpush.xpose.msra.mxu0 0.0
    %1475 = vmatpush.xpose.msra.mxu0 0.0
    %1476 = vmatpush.xpose.msra.mxu0 %v1459
    %1477 = vmatmul.f32.gmra.mxu0 %v1457
    %v1478 = vpop.f32.mrf.mxu0
    %v1479 = vadd.f32 0.0, %v1478
    %1480 = vdwg.mxu0
    %v1481 = vsel %vm635, %v1479, -inf
    %1482 = vmax.xlane.f32.xlu0 %v1481
    %v1483 = vpop.xlane.xlu0 %1482
    %v1484 = vsub.f32 %v1479, %v1483
    %v1485 = vmul.f32 %v1484, 1.442695
    %v1486 = vpow.pop %v1485
    %v1487 = vsel %vm635, %v1486, 0.0
    %1488 = vadd.xlane.f32.xlu0 %v1487
    %v1489 = vpop.xlane.xlu0 %1488
    %v1490 = vrcp.pop %v1489
    %v1491 = vmul.f32 %v1486, %v1490
    %1492 = vrot.lane.b32.xlu0 %v586, 56
    %v1493 = vpop.permute.xlu0 %1492
    %v1496 = vsel %vm635, %v1491, 0
    %1498 = vmatpush.msra.mxu0 0.0
    %1499 = vmatpush.msra.mxu0 0.0
    %1500 = vmatpush.msra.mxu0 0.0
    %1501 = vmatpush.msra.mxu0 0.0
    %1502 = vmatpush.msra.mxu0 0.0
    %1503 = vmatpush.msra.mxu0 0.0
    %1504 = vmatpush.msra.mxu0 0.0
    %1505 = vmatpush.msra.mxu0 0.0
    %1506 = vmatpush.msra.mxu0 0.0
    %1507 = vmatpush.msra.mxu0 0.0
    %1508 = vmatpush.msra.mxu0 0.0
    %1509 = vmatpush.msra.mxu0 0.0
    %1510 = vmatpush.msra.mxu0 0.0
    %1511 = vmatpush.msra.mxu0 0.0
    %1512 = vmatpush.msra.mxu0 0.0
    %1513 = vmatpush.msra.mxu0 %v1493
    %1514 = vmatmul.f32.gmra.mxu0 %v1496
    %v1515 = vpop.f32.mrf.mxu0
    %v1516 = vadd.f32 0.0, %v1515
    %1517 = vdwg.mxu0
    %v1519 = vsel %vm635, %v1516, 0
    %1521 = vmatpush.msra.mxu0 0.0
    %1522 = vmatpush.msra.mxu0 0.0
    %1523 = vmatpush.msra.mxu0 0.0
    %1524 = vmatpush.msra.mxu0 0.0
    %1525 = vmatpush.msra.mxu0 0.0
    %1526 = vmatpush.msra.mxu0 0.0
    %1527 = vmatpush.msra.mxu0 0.0
    %1528 = vmatpush.msra.mxu0 0.0
    %1529 = vmatpush.msra.mxu0 0.0
    %1530 = vmatpush.msra.mxu0 0.0
    %1531 = vmatpush.msra.mxu0 0.0
    %1532 = vmatpush.msra.mxu0 0.0
    %1533 = vmatpush.msra.mxu0 0.0
    %1534 = vmatpush.msra.mxu0 0.0
    %1535 = vmatpush.msra.mxu0 0.0
    %1536 = vmatpush.msra.mxu0 %v1093
    %1537 = vmatmul.f32.gmra.mxu0 %v1519
    %v1538 = vpop.f32.mrf.mxu0
    %v1539 = vadd.f32 %v1256, %v1538
    %1540 = vdwg.mxu0
    %1542 = vrot.lane.b32.xlu0 %v1539, 8
    %v1543 = vpop.permute.xlu0 %1542
    %v1545 = vadd.f32 %v550, %v1543
    %1547 = vrot.lane.b32.xlu0 %v1452, 120
    %v1548 = vpop.permute.xlu0 %1547
    %v1550 = vsel %vm635, %v1548, 0.0
    %1551 = vadd.xlane.f32.xlu0 %v1550
    %v1552 = vpop.xlane.xlu0 %1551
    %1554 = vrot.lane.b32.xlu0 %v1545, 120
    %v1555 = vpop.permute.xlu0 %1554
    %v1557 = vsel %vm635, %v1555, 0.0
    %1558 = vadd.xlane.f32.xlu0 %v1557
    %v1559 = vpop.xlane.xlu0 %1558
    %v1560 = vadd.f32 %v1552, %v1559
    %v1561 = vmul.f32 %v1560, 0.0625
    %v1562 = vsub.f32 %v1452, %v1561
    %v1563 = vsub.f32 %v1545, %v1561
    %v1564 = vmul.f32 %v1562, %v1562
    %1566 = vrot.lane.b32.xlu0 %v1564, 120
    %v1567 = vpop.permute.xlu0 %1566
    %v1569 = vsel %vm635, %v1567, 0.0
    %1570 = vadd.xlane.f32.xlu0 %v1569
    %v1571 = vpop.xlane.xlu0 %1570
    %v1572 = vmul.f32 %v1563, %v1563
    %1574 = vrot.lane.b32.xlu0 %v1572, 120
    %v1575 = vpop.permute.xlu0 %1574
    %v1577 = vsel %vm635, %v1575, 0.0
    %1578 = vadd.xlane.f32.xlu0 %v1577
    %v1579 = vpop.xlane.xlu0 %1578
    %v1580 = vadd.f32 %v1571, %v1579
    %v1581 = vmul.f32 %v1580, 0.0625
    %v1582 = vadd.f32 %v1581, 1e-05
    %v1583 = vrsqrt.pop %v1582
    %v1584 = vmul.f32 %v1583, %v1582
    %v1585 = vmul.f32 %v1584, %v1583
    %v1586 = vmul.f32 0.5, %v1585
    %v1587 = vsub.f32 1.5, %v1586
    %v1588 = vmul.f32 %v1583, %v1587
    %vm1589 = vweird.f32 %v1582
    %vm1590 = vweird.f32 %v1583
    %vm1591 = vmor %vm1589, %vm1590
    %v1592 = vsel %vm1591, %v1583, %v1588
    %v1593 = vmul.f32 %v1562, %v1592
    %v1594 = vmul.f32 %v1593, %v1336
    %v1595 = vadd.f32 %v1594, %v1342
    %1597 = vrot.lane.b32.xlu0 %v1595, 8
    %v1598 = vpop.permute.xlu0 %1597
    %1600 = vst.msk [vmem:[%s20 + $0x8] sm:$0xff] %vm1349, %v1598
    %v1601 = vmul.f32 %v1563, %v1592
    %v1602 = vmul.f32 %v1601, %v1333
    %v1603 = vadd.f32 %v1602, %v1339
    %1605 = vrot.lane.b32.xlu0 %v1603, 16
    %v1606 = vpop.permute.xlu0 %1605
    %1608 = vst.msk [vmem:[%s20 + $0x8] sm:$0xff] %vm1358, %v1606
    %v1609 = vld [vmem:[%s14 + $0x10] sm:$0xff]
    %v1610 = vld [vmem:[#allocation19 + $0x2] sm:$0x1]
    %v1611 = vld [vmem:[%s16 + $0x10] sm:$0xff]
    %v1612 = vld [vmem:[#allocation21 + $0x2] sm:$0x1]
    %v1613 = vld [vmem:[#allocation22 + $0x2] sm:$0x1]
    %v1614 = vld [vmem:[#allocation24 + $0x2] sm:$0x1]
    %1615 = vrot.lane.b32.xlu0 %v631, 112
    %v1616 = vpop.permute.xlu0 %1615
    %1617 = vrot.lane.b32.xlu0 %v620, 80
    %v1618 = vpop.permute.xlu0 %1617
    %v1619 = vsel %vm635, %v1616, 0
    %v1621 = vsel %vm635, %v1618, 0
    %1623 = vmatpush.xpose.msra.mxu0 0.0
    %1624 = vmatpush.xpose.msra.mxu0 0.0
    %1625 = vmatpush.xpose.msra.mxu0 0.0
    %1626 = vmatpush.xpose.msra.mxu0 0.0
    %1627 = vmatpush.xpose.msra.mxu0 0.0
    %1628 = vmatpush.xpose.msra.mxu0 0.0
    %1629 = vmatpush.xpose.msra.mxu0 0.0
    %1630 = vmatpush.xpose.msra.mxu0 0.0
    %1631 = vmatpush.xpose.msra.mxu0 0.0
    %1632 = vmatpush.xpose.msra.mxu0 0.0
    %1633 = vmatpush.xpose.msra.mxu0 0.0
    %1634 = vmatpush.xpose.msra.mxu0 0.0
    %1635 = vmatpush.xpose.msra.mxu0 0.0
    %1636 = vmatpush.xpose.msra.mxu0 0.0
    %1637 = vmatpush.xpose.msra.mxu0 0.0
    %1638 = vmatpush.xpose.msra.mxu0 %v1621
    %1639 = vmatmul.f32.gmra.mxu0 %v1619
    %v1640 = vpop.f32.mrf.mxu0
    %v1641 = vadd.f32 0.0, %v1640
    %1642 = vdwg.mxu0
    %v1643 = vsel %vm635, %v1641, -inf
    %1644 = vmax.xlane.f32.xlu0 %v1643
    %v1645 = vpop.xlane.xlu0 %1644
    %v1646 = vsub.f32 %v1641, %v1645
    %v1647 = vmul.f32 %v1646, 1.442695
    %v1648 = vpow.pop %v1647
    %v1649 = vsel %vm635, %v1648, 0.0
    %1650 = vadd.xlane.f32.xlu0 %v1649
    %v1651 = vpop.xlane.xlu0 %1650
    %v1652 = vrcp.pop %v1651
    %v1653 = vmul.f32 %v1648, %v1652
    %1654 = vrot.lane.b32.xlu0 %v620, 48
    %v1655 = vpop.permute.xlu0 %1654
    %v1658 = vsel %vm635, %v1653, 0
    %1660 = vmatpush.msra.mxu0 0.0
    %1661 = vmatpush.msra.mxu0 0.0
    %1662 = vmatpush.msra.mxu0 0.0
    %1663 = vmatpush.msra.mxu0 0.0
    %1664 = vmatpush.msra.mxu0 0.0
    %1665 = vmatpush.msra.mxu0 0.0
    %1666 = vmatpush.msra.mxu0 0.0
    %1667 = vmatpush.msra.mxu0 0.0
    %1668 = vmatpush.msra.mxu0 0.0
    %1669 = vmatpush.msra.mxu0 0.0
    %1670 = vmatpush.msra.mxu0 0.0
    %1671 = vmatpush.msra.mxu0 0.0
    %1672 = vmatpush.msra.mxu0 0.0
    %1673 = vmatpush.msra.mxu0 0.0
    %1674 = vmatpush.msra.mxu0 0.0
    %1675 = vmatpush.msra.mxu0 %v1655
    %1676 = vmatmul.f32.gmra.mxu0 %v1658
    %v1677 = vpop.f32.mrf.mxu0
    %v1678 = vadd.f32 0.0, %v1677
    %1679 = vdwg.mxu0
    %v1680 = vperm.slane %v1610, 0
    %v1682 = vsel %vm635, %v1678, 0
    %1684 = vmatpush.msra.mxu0 0.0
    %1685 = vmatpush.msra.mxu0 0.0
    %1686 = vmatpush.msra.mxu0 0.0
    %1687 = vmatpush.msra.mxu0 0.0
    %1688 = vmatpush.msra.mxu0 0.0
    %1689 = vmatpush.msra.mxu0 0.0
    %1690 = vmatpush.msra.mxu0 0.0
    %1691 = vmatpush.msra.mxu0 0.0
    %1692 = vmatpush.msra.mxu0 0.0
    %1693 = vmatpush.msra.mxu0 0.0
    %1694 = vmatpush.msra.mxu0 0.0
    %1695 = vmatpush.msra.mxu0 0.0
    %1696 = vmatpush.msra.mxu0 0.0
    %1697 = vmatpush.msra.mxu0 0.0
    %1698 = vmatpush.msra.mxu0 0.0
    %1699 = vmatpush.msra.mxu0 %v1609
    %1700 = vmatmul.f32.gmra.mxu0 %v1682
    %v1701 = vpop.f32.mrf.mxu0
    %v1702 = vadd.f32 %v1680, %v1701
    %1703 = vdwg.mxu0
    %1705 = vrot.lane.b32.xlu0 %v1702, 16
    %v1706 = vpop.permute.xlu0 %1705
    %v1708 = vadd.f32 %v414, %v1706
    %1709 = vrot.lane.b32.xlu0 %v723, 112
    %v1710 = vpop.permute.xlu0 %1709
    %1711 = vrot.lane.b32.xlu0 %v583, 80
    %v1712 = vpop.permute.xlu0 %1711
    %v1713 = vsel %vm635, %v1710, 0
    %v1715 = vsel %vm635, %v1712, 0
    %1717 = vmatpush.xpose.msra.mxu0 0.0
    %1718 = vmatpush.xpose.msra.mxu0 0.0
    %1719 = vmatpush.xpose.msra.mxu0 0.0
    %1720 = vmatpush.xpose.msra.mxu0 0.0
    %1721 = vmatpush.xpose.msra.mxu0 0.0
    %1722 = vmatpush.xpose.msra.mxu0 0.0
    %1723 = vmatpush.xpose.msra.mxu0 0.0
    %1724 = vmatpush.xpose.msra.mxu0 0.0
    %1725 = vmatpush.xpose.msra.mxu0 0.0
    %1726 = vmatpush.xpose.msra.mxu0 0.0
    %1727 = vmatpush.xpose.msra.mxu0 0.0
    %1728 = vmatpush.xpose.msra.mxu0 0.0
    %1729 = vmatpush.xpose.msra.mxu0 0.0
    %1730 = vmatpush.xpose.msra.mxu0 0.0
    %1731 = vmatpush.xpose.msra.mxu0 0.0
    %1732 = vmatpush.xpose.msra.mxu0 %v1715
    %1733 = vmatmul.f32.gmra.mxu0 %v1713
    %v1734 = vpop.f32.mrf.mxu0
    %v1735 = vadd.f32 0.0, %v1734
    %1736 = vdwg.mxu0
    %v1737 = vsel %vm635, %v1735, -inf
    %1738 = vmax.xlane.f32.xlu0 %v1737
    %v1739 = vpop.xlane.xlu0 %1738
    %v1740 = vsub.f32 %v1735, %v1739
    %v1741 = vmul.f32 %v1740, 1.442695
    %v1742 = vpow.pop %v1741
    %v1743 = vsel %vm635, %v1742, 0.0
    %1744 = vadd.xlane.f32.xlu0 %v1743
    %v1745 = vpop.xlane.xlu0 %1744
    %v1746 = vrcp.pop %v1745
    %v1747 = vmul.f32 %v1742, %v1746
    %1748 = vrot.lane.b32.xlu0 %v583, 48
    %v1749 = vpop.permute.xlu0 %1748
    %v1752 = vsel %vm635, %v1747, 0
    %1754 = vmatpush.msra.mxu0 0.0
    %1755 = vmatpush.msra.mxu0 0.0
    %1756 = vmatpush.msra.mxu0 0.0
    %1757 = vmatpush.msra.mxu0 0.0
    %1758 = vmatpush.msra.mxu0 0.0
    %1759 = vmatpush.msra.mxu0 0.0
    %1760 = vmatpush.msra.mxu0 0.0
    %1761 = vmatpush.msra.mxu0 0.0
    %1762 = vmatpush.msra.mxu0 0.0
    %1763 = vmatpush.msra.mxu0 0.0
    %1764 = vmatpush.msra.mxu0 0.0
    %1765 = vmatpush.msra.mxu0 0.0
    %1766 = vmatpush.msra.mxu0 0.0
    %1767 = vmatpush.msra.mxu0 0.0
    %1768 = vmatpush.msra.mxu0 0.0
    %1769 = vmatpush.msra.mxu0 %v1749
    %1770 = vmatmul.f32.gmra.mxu0 %v1752
    %v1771 = vpop.f32.mrf.mxu0
    %v1772 = vadd.f32 0.0, %v1771
    %1773 = vdwg.mxu0
    %v1774 = vperm.slane %v1612, 0
    %v1776 = vsel %vm635, %v1772, 0
    %1778 = vmatpush.msra.mxu0 0.0
    %1779 = vmatpush.msra.mxu0 0.0
    %1780 = vmatpush.msra.mxu0 0.0
    %1781 = vmatpush.msra.mxu0 0.0
    %1782 = vmatpush.msra.mxu0 0.0
    %1783 = vmatpush.msra.mxu0 0.0
    %1784 = vmatpush.msra.mxu0 0.0
    %1785 = vmatpush.msra.mxu0 0.0
    %1786 = vmatpush.msra.mxu0 0.0
    %1787 = vmatpush.msra.mxu0 0.0
    %1788 = vmatpush.msra.mxu0 0.0
    %1789 = vmatpush.msra.mxu0 0.0
    %1790 = vmatpush.msra.mxu0 0.0
    %1791 = vmatpush.msra.mxu0 0.0
    %1792 = vmatpush.msra.mxu0 0.0
    %1793 = vmatpush.msra.mxu0 %v1611
    %1794 = vmatmul.f32.gmra.mxu0 %v1776
    %v1795 = vpop.f32.mrf.mxu0
    %v1796 = vadd.f32 %v1774, %v1795
    %1797 = vdwg.mxu0
    %1799 = vrot.lane.b32.xlu0 %v1796, 16
    %v1800 = vpop.permute.xlu0 %1799
    %v1802 = vadd.f32 %v549, %v1800
    %1804 = vrot.lane.b32.xlu0 %v1708, 112
    %v1805 = vpop.permute.xlu0 %1804
    %v1807 = vsel %vm635, %v1805, 0.0
    %1808 = vadd.xlane.f32.xlu0 %v1807
    %v1809 = vpop.xlane.xlu0 %1808
    %1811 = vrot.lane.b32.xlu0 %v1802, 112
    %v1812 = vpop.permute.xlu0 %1811
    %v1814 = vsel %vm635, %v1812, 0.0
    %1815 = vadd.xlane.f32.xlu0 %v1814
    %v1816 = vpop.xlane.xlu0 %1815
    %v1817 = vadd.f32 %v1809, %v1816
    %v1818 = vmul.f32 %v1817, 0.0625
    %v1819 = vsub.f32 %v1708, %v1818
    %v1820 = vsub.f32 %v1802, %v1818
    %v1821 = vmul.f32 %v1819, %v1819
    %1823 = vrot.lane.b32.xlu0 %v1821, 112
    %v1824 = vpop.permute.xlu0 %1823
    %v1826 = vsel %vm635, %v1824, 0.0
    %1827 = vadd.xlane.f32.xlu0 %v1826
    %v1828 = vpop.xlane.xlu0 %1827
    %v1829 = vmul.f32 %v1820, %v1820
    %1831 = vrot.lane.b32.xlu0 %v1829, 112
    %v1832 = vpop.permute.xlu0 %1831
    %v1834 = vsel %vm635, %v1832, 0.0
    %1835 = vadd.xlane.f32.xlu0 %v1834
    %v1836 = vpop.xlane.xlu0 %1835
    %v1837 = vadd.f32 %v1828, %v1836
    %v1838 = vmul.f32 %v1837, 0.0625
    %v1839 = vadd.f32 %v1838, 1e-05
    %v1840 = vrsqrt.pop %v1839
    %v1841 = vmul.f32 %v1840, %v1839
    %v1842 = vmul.f32 %v1841, %v1840
    %v1843 = vmul.f32 0.5, %v1842
    %v1844 = vsub.f32 1.5, %v1843
    %v1845 = vmul.f32 %v1840, %v1844
    %vm1846 = vweird.f32 %v1839
    %vm1847 = vweird.f32 %v1840
    %vm1848 = vmor %vm1846, %vm1847
    %v1849 = vsel %vm1848, %v1840, %v1845
    %v1850 = vmul.f32 %v1819, %v1849
    %v1851 = vperm.slane %v1613, 0
    %1853 = vrot.lane.b32.xlu0 %v1851, 16
    %v1854 = vpop.permute.xlu0 %1853
    %v1856 = vmul.f32 %v1850, %v1854
    %v1857 = vperm.slane %v1614, 0
    %1859 = vrot.lane.b32.xlu0 %v1857, 16
    %v1860 = vpop.permute.xlu0 %1859
    %v1862 = vadd.f32 %v1856, %v1860
    %1864 = vrot.lane.b32.xlu0 %v1862, 16
    %v1865 = vpop.permute.xlu0 %1864
    %vm1867 = vcmask 326912
    %1868 = vst.msk [vmem:[%s20] sm:$0xff] %vm1867, %v1865
    %v1869 = vmul.f32 %v1820, %v1849
    %1870 = vrot.lane.b32.xlu0 %v1851, 8
    %v1871 = vpop.permute.xlu0 %1870
    %v1873 = vmul.f32 %v1869, %v1871
    %1874 = vrot.lane.b32.xlu0 %v1857, 8
    %v1875 = vpop.permute.xlu0 %1874
    %v1877 = vadd.f32 %v1873, %v1875
    %1879 = vrot.lane.b32.xlu0 %v1877, 24
    %v1880 = vpop.permute.xlu0 %1879
    %vm1882 = vcmask 392512
    %1883 = vst.msk [vmem:[%s20] sm:$0xff] %vm1882, %v1880
    %1884 = vrot.lane.b32.xlu0 %v868, 112
    %v1885 = vpop.permute.xlu0 %1884
    %1886 = vrot.lane.b32.xlu0 %v623, 80
    %v1887 = vpop.permute.xlu0 %1886
    %v1888 = vsel %vm635, %v1885, 0
    %v1890 = vsel %vm635, %v1887, 0
    %1892 = vmatpush.xpose.msra.mxu0 0.0
    %1893 = vmatpush.xpose.msra.mxu0 0.0
    %1894 = vmatpush.xpose.msra.mxu0 0.0
    %1895 = vmatpush.xpose.msra.mxu0 0.0
    %1896 = vmatpush.xpose.msra.mxu0 0.0
    %1897 = vmatpush.xpose.msra.mxu0 0.0
    %1898 = vmatpush.xpose.msra.mxu0 0.0
    %1899 = vmatpush.xpose.msra.mxu0 0.0
    %1900 = vmatpush.xpose.msra.mxu0 0.0
    %1901 = vmatpush.xpose.msra.mxu0 0.0
    %1902 = vmatpush.xpose.msra.mxu0 0.0
    %1903 = vmatpush.xpose.msra.mxu0 0.0
    %1904 = vmatpush.xpose.msra.mxu0 0.0
    %1905 = vmatpush.xpose.msra.mxu0 0.0
    %1906 = vmatpush.xpose.msra.mxu0 0.0
    %1907 = vmatpush.xpose.msra.mxu0 %v1890
    %1908 = vmatmul.f32.gmra.mxu0 %v1888
    %v1909 = vpop.f32.mrf.mxu0
    %v1910 = vadd.f32 0.0, %v1909
    %1911 = vdwg.mxu0
    %v1912 = vsel %vm635, %v1910, -inf
    %1913 = vmax.xlane.f32.xlu0 %v1912
    %v1914 = vpop.xlane.xlu0 %1913
    %v1915 = vsub.f32 %v1910, %v1914
    %v1916 = vmul.f32 %v1915, 1.442695
    %v1917 = vpow.pop %v1916
    %v1918 = vsel %vm635, %v1917, 0.0
    %1919 = vadd.xlane.f32.xlu0 %v1918
    %v1920 = vpop.xlane.xlu0 %1919
    %v1921 = vrcp.pop %v1920
    %v1922 = vmul.f32 %v1917, %v1921
    %1923 = vrot.lane.b32.xlu0 %v623, 48
    %v1924 = vpop.permute.xlu0 %1923
    %v1927 = vsel %vm635, %v1922, 0
    %1929 = vmatpush.msra.mxu0 0.0
    %1930 = vmatpush.msra.mxu0 0.0
    %1931 = vmatpush.msra.mxu0 0.0
    %1932 = vmatpush.msra.mxu0 0.0
    %1933 = vmatpush.msra.mxu0 0.0
    %1934 = vmatpush.msra.mxu0 0.0
    %1935 = vmatpush.msra.mxu0 0.0
    %1936 = vmatpush.msra.mxu0 0.0
    %1937 = vmatpush.msra.mxu0 0.0
    %1938 = vmatpush.msra.mxu0 0.0
    %1939 = vmatpush.msra.mxu0 0.0
    %1940 = vmatpush.msra.mxu0 0.0
    %1941 = vmatpush.msra.mxu0 0.0
    %1942 = vmatpush.msra.mxu0 0.0
    %1943 = vmatpush.msra.mxu0 0.0
    %1944 = vmatpush.msra.mxu0 %v1924
    %1945 = vmatmul.f32.gmra.mxu0 %v1927
    %v1946 = vpop.f32.mrf.mxu0
    %v1947 = vadd.f32 0.0, %v1946
    %1948 = vdwg.mxu0
    %v1950 = vsel %vm635, %v1947, 0
    %1952 = vmatpush.msra.mxu0 0.0
    %1953 = vmatpush.msra.mxu0 0.0
    %1954 = vmatpush.msra.mxu0 0.0
    %1955 = vmatpush.msra.mxu0 0.0
    %1956 = vmatpush.msra.mxu0 0.0
    %1957 = vmatpush.msra.mxu0 0.0
    %1958 = vmatpush.msra.mxu0 0.0
    %1959 = vmatpush.msra.mxu0 0.0
    %1960 = vmatpush.msra.mxu0 0.0
    %1961 = vmatpush.msra.mxu0 0.0
    %1962 = vmatpush.msra.mxu0 0.0
    %1963 = vmatpush.msra.mxu0 0.0
    %1964 = vmatpush.msra.mxu0 0.0
    %1965 = vmatpush.msra.mxu0 0.0
    %1966 = vmatpush.msra.mxu0 0.0
    %1967 = vmatpush.msra.mxu0 %v1609
    %1968 = vmatmul.f32.gmra.mxu0 %v1950
    %v1969 = vpop.f32.mrf.mxu0
    %v1970 = vadd.f32 %v1680, %v1969
    %1971 = vdwg.mxu0
    %1973 = vrot.lane.b32.xlu0 %v1970, 16
    %v1974 = vpop.permute.xlu0 %1973
    %v1976 = vadd.f32 %v415, %v1974
    %1977 = vrot.lane.b32.xlu0 %v958, 112
    %v1978 = vpop.permute.xlu0 %1977
    %1979 = vrot.lane.b32.xlu0 %v586, 80
    %v1980 = vpop.permute.xlu0 %1979
    %v1981 = vsel %vm635, %v1978, 0
    %v1983 = vsel %vm635, %v1980, 0
    %1985 = vmatpush.xpose.msra.mxu0 0.0
    %1986 = vmatpush.xpose.msra.mxu0 0.0
    %1987 = vmatpush.xpose.msra.mxu0 0.0
    %1988 = vmatpush.xpose.msra.mxu0 0.0
    %1989 = vmatpush.xpose.msra.mxu0 0.0
    %1990 = vmatpush.xpose.msra.mxu0 0.0
    %1991 = vmatpush.xpose.msra.mxu0 0.0
    %1992 = vmatpush.xpose.msra.mxu0 0.0
    %1993 = vmatpush.xpose.msra.mxu0 0.0
    %1994 = vmatpush.xpose.msra.mxu0 0.0
    %1995 = vmatpush.xpose.msra.mxu0 0.0
    %1996 = vmatpush.xpose.msra.mxu0 0.0
    %1997 = vmatpush.xpose.msra.mxu0 0.0
    %1998 = vmatpush.xpose.msra.mxu0 0.0
    %1999 = vmatpush.xpose.msra.mxu0 0.0
    %2000 = vmatpush.xpose.msra.mxu0 %v1983
    %2001 = vmatmul.f32.gmra.mxu0 %v1981
    %v2002 = vpop.f32.mrf.mxu0
    %v2003 = vadd.f32 0.0, %v2002
    %2004 = vdwg.mxu0
    %v2005 = vsel %vm635, %v2003, -inf
    %2006 = vmax.xlane.f32.xlu0 %v2005
    %v2007 = vpop.xlane.xlu0 %2006
    %v2008 = vsub.f32 %v2003, %v2007
    %v2009 = vmul.f32 %v2008, 1.442695
    %v2010 = vpow.pop %v2009
    %v2011 = vsel %vm635, %v2010, 0.0
    %2012 = vadd.xlane.f32.xlu0 %v2011
    %v2013 = vpop.xlane.xlu0 %2012
    %v2014 = vrcp.pop %v2013
    %v2015 = vmul.f32 %v2010, %v2014
    %2016 = vrot.lane.b32.xlu0 %v586, 48
    %v2017 = vpop.permute.xlu0 %2016
    %v2020 = vsel %vm635, %v2015, 0
    %2022 = vmatpush.msra.mxu0 0.0
    %2023 = vmatpush.msra.mxu0 0.0
    %2024 = vmatpush.msra.mxu0 0.0
    %2025 = vmatpush.msra.mxu0 0.0
    %2026 = vmatpush.msra.mxu0 0.0
    %2027 = vmatpush.msra.mxu0 0.0
    %2028 = vmatpush.msra.mxu0 0.0
    %2029 = vmatpush.msra.mxu0 0.0
    %2030 = vmatpush.msra.mxu0 0.0
    %2031 = vmatpush.msra.mxu0 0.0
    %2032 = vmatpush.msra.mxu0 0.0
    %2033 = vmatpush.msra.mxu0 0.0
    %2034 = vmatpush.msra.mxu0 0.0
    %2035 = vmatpush.msra.mxu0 0.0
    %2036 = vmatpush.msra.mxu0 0.0
    %2037 = vmatpush.msra.mxu0 %v2017
    %2038 = vmatmul.f32.gmra.mxu0 %v2020
    %v2039 = vpop.f32.mrf.mxu0
    %v2040 = vadd.f32 0.0, %v2039
    %2041 = vdwg.mxu0
    %v2043 = vsel %vm635, %v2040, 0
    %2045 = vmatpush.msra.mxu0 0.0
    %2046 = vmatpush.msra.mxu0 0.0
    %2047 = vmatpush.msra.mxu0 0.0
    %2048 = vmatpush.msra.mxu0 0.0
    %2049 = vmatpush.msra.mxu0 0.0
    %2050 = vmatpush.msra.mxu0 0.0
    %2051 = vmatpush.msra.mxu0 0.0
    %2052 = vmatpush.msra.mxu0 0.0
    %2053 = vmatpush.msra.mxu0 0.0
    %2054 = vmatpush.msra.mxu0 0.0
    %2055 = vmatpush.msra.mxu0 0.0
    %2056 = vmatpush.msra.mxu0 0.0
    %2057 = vmatpush.msra.mxu0 0.0
    %2058 = vmatpush.msra.mxu0 0.0
    %2059 = vmatpush.msra.mxu0 0.0
    %2060 = vmatpush.msra.mxu0 %v1611
    %2061 = vmatmul.f32.gmra.mxu0 %v2043
    %v2062 = vpop.f32.mrf.mxu0
    %v2063 = vadd.f32 %v1774, %v2062
    %2064 = vdwg.mxu0
    %2066 = vrot.lane.b32.xlu0 %v2063, 16
    %v2067 = vpop.permute.xlu0 %2066
    %v2069 = vadd.f32 %v550, %v2067
    %2071 = vrot.lane.b32.xlu0 %v1976, 112
    %v2072 = vpop.permute.xlu0 %2071
    %v2074 = vsel %vm635, %v2072, 0.0
    %2075 = vadd.xlane.f32.xlu0 %v2074
    %v2076 = vpop.xlane.xlu0 %2075
    %2078 = vrot.lane.b32.xlu0 %v2069, 112
    %v2079 = vpop.permute.xlu0 %2078
    %v2081 = vsel %vm635, %v2079, 0.0
    %2082 = vadd.xlane.f32.xlu0 %v2081
    %v2083 = vpop.xlane.xlu0 %2082
    %v2084 = vadd.f32 %v2076, %v2083
    %v2085 = vmul.f32 %v2084, 0.0625
    %v2086 = vsub.f32 %v1976, %v2085
    %v2087 = vsub.f32 %v2069, %v2085
    %v2088 = vmul.f32 %v2086, %v2086
    %2090 = vrot.lane.b32.xlu0 %v2088, 112
    %v2091 = vpop.permute.xlu0 %2090
    %v2093 = vsel %vm635, %v2091, 0.0
    %2094 = vadd.xlane.f32.xlu0 %v2093
    %v2095 = vpop.xlane.xlu0 %2094
    %v2096 = vmul.f32 %v2087, %v2087
    %2098 = vrot.lane.b32.xlu0 %v2096, 112
    %v2099 = vpop.permute.xlu0 %2098
    %v2101 = vsel %vm635, %v2099, 0.0
    %2102 = vadd.xlane.f32.xlu0 %v2101
    %v2103 = vpop.xlane.xlu0 %2102
    %v2104 = vadd.f32 %v2095, %v2103
    %v2105 = vmul.f32 %v2104, 0.0625
    %v2106 = vadd.f32 %v2105, 1e-05
    %v2107 = vrsqrt.pop %v2106
    %v2108 = vmul.f32 %v2107, %v2106
    %v2109 = vmul.f32 %v2108, %v2107
    %v2110 = vmul.f32 0.5, %v2109
    %v2111 = vsub.f32 1.5, %v2110
    %v2112 = vmul.f32 %v2107, %v2111
    %vm2113 = vweird.f32 %v2106
    %vm2114 = vweird.f32 %v2107
    %vm2115 = vmor %vm2113, %vm2114
    %v2116 = vsel %vm2115, %v2107, %v2112
    %v2117 = vmul.f32 %v2086, %v2116
    %v2118 = vmul.f32 %v2117, %v1854
    %v2119 = vadd.f32 %v2118, %v1860
    %2121 = vrot.lane.b32.xlu0 %v2119, 16
    %v2122 = vpop.permute.xlu0 %2121
    %2124 = vst.msk [vmem:[%s20 + $0x8] sm:$0xff] %vm1867, %v2122
    %v2125 = vmul.f32 %v2087, %v2116
    %v2126 = vmul.f32 %v2125, %v1871
    %v2127 = vadd.f32 %v2126, %v1875
    %2129 = vrot.lane.b32.xlu0 %v2127, 24
    %v2130 = vpop.permute.xlu0 %2129
    %2132 = vst.msk [vmem:[%s20 + $0x8] sm:$0xff] %vm1882, %v2130
    %v2133 = vld [vmem:[%s14 + $0x18] sm:$0xff]
    %v2134 = vld [vmem:[#allocation19 + $0x3] sm:$0x1]
    %v2135 = vld [vmem:[%s16 + $0x18] sm:$0xff]
    %v2136 = vld [vmem:[#allocation21 + $0x3] sm:$0x1]
    %v2137 = vld [vmem:[#allocation22 + $0x3] sm:$0x1]
    %v2138 = vld [vmem:[#allocation24 + $0x3] sm:$0x1]
    %2139 = vrot.lane.b32.xlu0 %v631, 104
    %v2140 = vpop.permute.xlu0 %2139
    %2141 = vrot.lane.b32.xlu0 %v620, 72
    %v2142 = vpop.permute.xlu0 %2141
    %v2143 = vsel %vm635, %v2140, 0
    %v2145 = vsel %vm635, %v2142, 0
    %2147 = vmatpush.xpose.msra.mxu0 0.0
    %2148 = vmatpush.xpose.msra.mxu0 0.0
    %2149 = vmatpush.xpose.msra.mxu0 0.0
    %2150 = vmatpush.xpose.msra.mxu0 0.0
    %2151 = vmatpush.xpose.msra.mxu0 0.0
    %2152 = vmatpush.xpose.msra.mxu0 0.0
    %2153 = vmatpush.xpose.msra.mxu0 0.0
    %2154 = vmatpush.xpose.msra.mxu0 0.0
    %2155 = vmatpush.xpose.msra.mxu0 0.0
    %2156 = vmatpush.xpose.msra.mxu0 0.0
    %2157 = vmatpush.xpose.msra.mxu0 0.0
    %2158 = vmatpush.xpose.msra.mxu0 0.0
    %2159 = vmatpush.xpose.msra.mxu0 0.0
    %2160 = vmatpush.xpose.msra.mxu0 0.0
    %2161 = vmatpush.xpose.msra.mxu0 0.0
    %2162 = vmatpush.xpose.msra.mxu0 %v2145
    %2163 = vmatmul.f32.gmra.mxu0 %v2143
    %v2164 = vpop.f32.mrf.mxu0
    %v2165 = vadd.f32 0.0, %v2164
    %2166 = vdwg.mxu0
    %v2167 = vsel %vm635, %v2165, -inf
    %2168 = vmax.xlane.f32.xlu0 %v2167
    %v2169 = vpop.xlane.xlu0 %2168
    %v2170 = vsub.f32 %v2165, %v2169
    %v2171 = vmul.f32 %v2170, 1.442695
    %v2172 = vpow.pop %v2171
    %v2173 = vsel %vm635, %v2172, 0.0
    %2174 = vadd.xlane.f32.xlu0 %v2173
    %v2175 = vpop.xlane.xlu0 %2174
    %v2176 = vrcp.pop %v2175
    %v2177 = vmul.f32 %v2172, %v2176
    %2178 = vrot.lane.b32.xlu0 %v620, 40
    %v2179 = vpop.permute.xlu0 %2178
    %v2182 = vsel %vm635, %v2177, 0
    %2184 = vmatpush.msra.mxu0 0.0
    %2185 = vmatpush.msra.mxu0 0.0
    %2186 = vmatpush.msra.mxu0 0.0
    %2187 = vmatpush.msra.mxu0 0.0
    %2188 = vmatpush.msra.mxu0 0.0
    %2189 = vmatpush.msra.mxu0 0.0
    %2190 = vmatpush.msra.mxu0 0.0
    %2191 = vmatpush.msra.mxu0 0.0
    %2192 = vmatpush.msra.mxu0 0.0
    %2193 = vmatpush.msra.mxu0 0.0
    %2194 = vmatpush.msra.mxu0 0.0
    %2195 = vmatpush.msra.mxu0 0.0
    %2196 = vmatpush.msra.mxu0 0.0
    %2197 = vmatpush.msra.mxu0 0.0
    %2198 = vmatpush.msra.mxu0 0.0
    %2199 = vmatpush.msra.mxu0 %v2179
    %2200 = vmatmul.f32.gmra.mxu0 %v2182
    %v2201 = vpop.f32.mrf.mxu0
    %v2202 = vadd.f32 0.0, %v2201
    %2203 = vdwg.mxu0
    %v2204 = vperm.slane %v2134, 0
    %v2206 = vsel %vm635, %v2202, 0
    %2208 = vmatpush.msra.mxu0 0.0
    %2209 = vmatpush.msra.mxu0 0.0
    %2210 = vmatpush.msra.mxu0 0.0
    %2211 = vmatpush.msra.mxu0 0.0
    %2212 = vmatpush.msra.mxu0 0.0
    %2213 = vmatpush.msra.mxu0 0.0
    %2214 = vmatpush.msra.mxu0 0.0
    %2215 = vmatpush.msra.mxu0 0.0
    %2216 = vmatpush.msra.mxu0 0.0
    %2217 = vmatpush.msra.mxu0 0.0
    %2218 = vmatpush.msra.mxu0 0.0
    %2219 = vmatpush.msra.mxu0 0.0
    %2220 = vmatpush.msra.mxu0 0.0
    %2221 = vmatpush.msra.mxu0 0.0
    %2222 = vmatpush.msra.mxu0 0.0
    %2223 = vmatpush.msra.mxu0 %v2133
    %2224 = vmatmul.f32.gmra.mxu0 %v2206
    %v2225 = vpop.f32.mrf.mxu0
    %v2226 = vadd.f32 %v2204, %v2225
    %2227 = vdwg.mxu0
    %2229 = vrot.lane.b32.xlu0 %v2226, 24
    %v2230 = vpop.permute.xlu0 %2229
    %v2232 = vadd.f32 %v414, %v2230
    %2233 = vrot.lane.b32.xlu0 %v723, 104
    %v2234 = vpop.permute.xlu0 %2233
    %2235 = vrot.lane.b32.xlu0 %v583, 72
    %v2236 = vpop.permute.xlu0 %2235
    %v2237 = vsel %vm635, %v2234, 0
    %v2239 = vsel %vm635, %v2236, 0
    %2241 = vmatpush.xpose.msra.mxu0 0.0
    %2242 = vmatpush.xpose.msra.mxu0 0.0
    %2243 = vmatpush.xpose.msra.mxu0 0.0
    %2244 = vmatpush.xpose.msra.mxu0 0.0
    %2245 = vmatpush.xpose.msra.mxu0 0.0
    %2246 = vmatpush.xpose.msra.mxu0 0.0
    %2247 = vmatpush.xpose.msra.mxu0 0.0
    %2248 = vmatpush.xpose.msra.mxu0 0.0
    %2249 = vmatpush.xpose.msra.mxu0 0.0
    %2250 = vmatpush.xpose.msra.mxu0 0.0
    %2251 = vmatpush.xpose.msra.mxu0 0.0
    %2252 = vmatpush.xpose.msra.mxu0 0.0
    %2253 = vmatpush.xpose.msra.mxu0 0.0
    %2254 = vmatpush.xpose.msra.mxu0 0.0
    %2255 = vmatpush.xpose.msra.mxu0 0.0
    %2256 = vmatpush.xpose.msra.mxu0 %v2239
    %2257 = vmatmul.f32.gmra.mxu0 %v2237
    %v2258 = vpop.f32.mrf.mxu0
    %v2259 = vadd.f32 0.0, %v2258
    %2260 = vdwg.mxu0
    %v2261 = vsel %vm635, %v2259, -inf
    %2262 = vmax.xlane.f32.xlu0 %v2261
    %v2263 = vpop.xlane.xlu0 %2262
    %v2264 = vsub.f32 %v2259, %v2263
    %v2265 = vmul.f32 %v2264, 1.442695
    %v2266 = vpow.pop %v2265
    %v2267 = vsel %vm635, %v2266, 0.0
    %2268 = vadd.xlane.f32.xlu0 %v2267
    %v2269 = vpop.xlane.xlu0 %2268
    %v2270 = vrcp.pop %v2269
    %v2271 = vmul.f32 %v2266, %v2270
    %2272 = vrot.lane.b32.xlu0 %v583, 40
    %v2273 = vpop.permute.xlu0 %2272
    %v2276 = vsel %vm635, %v2271, 0
    %2278 = vmatpush.msra.mxu0 0.0
    %2279 = vmatpush.msra.mxu0 0.0
    %2280 = vmatpush.msra.mxu0 0.0
    %2281 = vmatpush.msra.mxu0 0.0
    %2282 = vmatpush.msra.mxu0 0.0
    %2283 = vmatpush.msra.mxu0 0.0
    %2284 = vmatpush.msra.mxu0 0.0
    %2285 = vmatpush.msra.mxu0 0.0
    %2286 = vmatpush.msra.mxu0 0.0
    %2287 = vmatpush.msra.mxu0 0.0
    %2288 = vmatpush.msra.mxu0 0.0
    %2289 = vmatpush.msra.mxu0 0.0
    %2290 = vmatpush.msra.mxu0 0.0
    %2291 = vmatpush.msra.mxu0 0.0
    %2292 = vmatpush.msra.mxu0 0.0
    %2293 = vmatpush.msra.mxu0 %v2273
    %2294 = vmatmul.f32.gmra.mxu0 %v2276
    %v2295 = vpop.f32.mrf.mxu0
    %v2296 = vadd.f32 0.0, %v2295
    %2297 = vdwg.mxu0
    %v2298 = vperm.slane %v2136, 0
    %v2300 = vsel %vm635, %v2296, 0
    %2302 = vmatpush.msra.mxu0 0.0
    %2303 = vmatpush.msra.mxu0 0.0
    %2304 = vmatpush.msra.mxu0 0.0
    %2305 = vmatpush.msra.mxu0 0.0
    %2306 = vmatpush.msra.mxu0 0.0
    %2307 = vmatpush.msra.mxu0 0.0
    %2308 = vmatpush.msra.mxu0 0.0
    %2309 = vmatpush.msra.mxu0 0.0
    %2310 = vmatpush.msra.mxu0 0.0
    %2311 = vmatpush.msra.mxu0 0.0
    %2312 = vmatpush.msra.mxu0 0.0
    %2313 = vmatpush.msra.mxu0 0.0
    %2314 = vmatpush.msra.mxu0 0.0
    %2315 = vmatpush.msra.mxu0 0.0
    %2316 = vmatpush.msra.mxu0 0.0
    %2317 = vmatpush.msra.mxu0 %v2135
    %2318 = vmatmul.f32.gmra.mxu0 %v2300
    %v2319 = vpop.f32.mrf.mxu0
    %v2320 = vadd.f32 %v2298, %v2319
    %2321 = vdwg.mxu0
    %2323 = vrot.lane.b32.xlu0 %v2320, 24
    %v2324 = vpop.permute.xlu0 %2323
    %v2326 = vadd.f32 %v549, %v2324
    %2328 = vrot.lane.b32.xlu0 %v2232, 104
    %v2329 = vpop.permute.xlu0 %2328
    %v2331 = vsel %vm635, %v2329, 0.0
    %2332 = vadd.xlane.f32.xlu0 %v2331
    %v2333 = vpop.xlane.xlu0 %2332
    %2335 = vrot.lane.b32.xlu0 %v2326, 104
    %v2336 = vpop.permute.xlu0 %2335
    %v2338 = vsel %vm635, %v2336, 0.0
    %2339 = vadd.xlane.f32.xlu0 %v2338
    %v2340 = vpop.xlane.xlu0 %2339
    %v2341 = vadd.f32 %v2333, %v2340
    %v2342 = vmul.f32 %v2341, 0.0625
    %v2343 = vsub.f32 %v2232, %v2342
    %v2344 = vsub.f32 %v2326, %v2342
    %v2345 = vmul.f32 %v2343, %v2343
    %2347 = vrot.lane.b32.xlu0 %v2345, 104
    %v2348 = vpop.permute.xlu0 %2347
    %v2350 = vsel %vm635, %v2348, 0.0
    %2351 = vadd.xlane.f32.xlu0 %v2350
    %v2352 = vpop.xlane.xlu0 %2351
    %v2353 = vmul.f32 %v2344, %v2344
    %2355 = vrot.lane.b32.xlu0 %v2353, 104
    %v2356 = vpop.permute.xlu0 %2355
    %v2358 = vsel %vm635, %v2356, 0.0
    %2359 = vadd.xlane.f32.xlu0 %v2358
    %v2360 = vpop.xlane.xlu0 %2359
    %v2361 = vadd.f32 %v2352, %v2360
    %v2362 = vmul.f32 %v2361, 0.0625
    %v2363 = vadd.f32 %v2362, 1e-05
    %v2364 = vrsqrt.pop %v2363
    %v2365 = vmul.f32 %v2364, %v2363
    %v2366 = vmul.f32 %v2365, %v2364
    %v2367 = vmul.f32 0.5, %v2366
    %v2368 = vsub.f32 1.5, %v2367
    %v2369 = vmul.f32 %v2364, %v2368
    %vm2370 = vweird.f32 %v2363
    %vm2371 = vweird.f32 %v2364
    %vm2372 = vmor %vm2370, %vm2371
    %v2373 = vsel %vm2372, %v2364, %v2369
    %v2374 = vmul.f32 %v2343, %v2373
    %v2375 = vperm.slane %v2137, 0
    %2377 = vrot.lane.b32.xlu0 %v2375, 24
    %v2378 = vpop.permute.xlu0 %2377
    %v2380 = vmul.f32 %v2374, %v2378
    %v2381 = vperm.slane %v2138, 0
    %2383 = vrot.lane.b32.xlu0 %v2381, 24
    %v2384 = vpop.permute.xlu0 %2383
    %v2386 = vadd.f32 %v2380, %v2384
    %2388 = vrot.lane.b32.xlu0 %v2386, 24
    %v2389 = vpop.permute.xlu0 %2388
    %vm2391 = vcmask 458112
    %2392 = vst.msk [vmem:[%s20] sm:$0xff] %vm2391, %v2389
    %v2393 = vmul.f32 %v2344, %v2373
    %2394 = vrot.lane.b32.xlu0 %v2375, 16
    %v2395 = vpop.permute.xlu0 %2394
    %v2397 = vmul.f32 %v2393, %v2395
    %2398 = vrot.lane.b32.xlu0 %v2381, 16
    %v2399 = vpop.permute.xlu0 %2398
    %v2401 = vadd.f32 %v2397, %v2399
    %2403 = vrot.lane.b32.xlu0 %v2401, 32
    %v2404 = vpop.permute.xlu0 %2403
    %vm2406 = vcmask 523712
    %2407 = vst.msk [vmem:[%s20] sm:$0xff] %vm2406, %v2404
    %2408 = vrot.lane.b32.xlu0 %v868, 104
    %v2409 = vpop.permute.xlu0 %2408
    %2410 = vrot.lane.b32.xlu0 %v623, 72
    %v2411 = vpop.permute.xlu0 %2410
    %v2412 = vsel %vm635, %v2409, 0
    %v2414 = vsel %vm635, %v2411, 0
    %2416 = vmatpush.xpose.msra.mxu0 0.0
    %2417 = vmatpush.xpose.msra.mxu0 0.0
    %2418 = vmatpush.xpose.msra.mxu0 0.0
    %2419 = vmatpush.xpose.msra.mxu0 0.0
    %2420 = vmatpush.xpose.msra.mxu0 0.0
    %2421 = vmatpush.xpose.msra.mxu0 0.0
    %2422 = vmatpush.xpose.msra.mxu0 0.0
    %2423 = vmatpush.xpose.msra.mxu0 0.0
    %2424 = vmatpush.xpose.msra.mxu0 0.0
    %2425 = vmatpush.xpose.msra.mxu0 0.0
    %2426 = vmatpush.xpose.msra.mxu0 0.0
    %2427 = vmatpush.xpose.msra.mxu0 0.0
    %2428 = vmatpush.xpose.msra.mxu0 0.0
    %2429 = vmatpush.xpose.msra.mxu0 0.0
    %2430 = vmatpush.xpose.msra.mxu0 0.0
    %2431 = vmatpush.xpose.msra.mxu0 %v2414
    %2432 = vmatmul.f32.gmra.mxu0 %v2412
    %v2433 = vpop.f32.mrf.mxu0
    %v2434 = vadd.f32 0.0, %v2433
    %2435 = vdwg.mxu0
    %v2436 = vsel %vm635, %v2434, -inf
    %2437 = vmax.xlane.f32.xlu0 %v2436
    %v2438 = vpop.xlane.xlu0 %2437
    %v2439 = vsub.f32 %v2434, %v2438
    %v2440 = vmul.f32 %v2439, 1.442695
    %v2441 = vpow.pop %v2440
    %v2442 = vsel %vm635, %v2441, 0.0
    %2443 = vadd.xlane.f32.xlu0 %v2442
    %v2444 = vpop.xlane.xlu0 %2443
    %v2445 = vrcp.pop %v2444
    %v2446 = vmul.f32 %v2441, %v2445
    %2447 = vrot.lane.b32.xlu0 %v623, 40
    %v2448 = vpop.permute.xlu0 %2447
    %v2451 = vsel %vm635, %v2446, 0
    %2453 = vmatpush.msra.mxu0 0.0
    %2454 = vmatpush.msra.mxu0 0.0
    %2455 = vmatpush.msra.mxu0 0.0
    %2456 = vmatpush.msra.mxu0 0.0
    %2457 = vmatpush.msra.mxu0 0.0
    %2458 = vmatpush.msra.mxu0 0.0
    %2459 = vmatpush.msra.mxu0 0.0
    %2460 = vmatpush.msra.mxu0 0.0
    %2461 = vmatpush.msra.mxu0 0.0
    %2462 = vmatpush.msra.mxu0 0.0
    %2463 = vmatpush.msra.mxu0 0.0
    %2464 = vmatpush.msra.mxu0 0.0
    %2465 = vmatpush.msra.mxu0 0.0
    %2466 = vmatpush.msra.mxu0 0.0
    %2467 = vmatpush.msra.mxu0 0.0
    %2468 = vmatpush.msra.mxu0 %v2448
    %2469 = vmatmul.f32.gmra.mxu0 %v2451
    %v2470 = vpop.f32.mrf.mxu0
    %v2471 = vadd.f32 0.0, %v2470
    %2472 = vdwg.mxu0
    %v2474 = vsel %vm635, %v2471, 0
    %2476 = vmatpush.msra.mxu0 0.0
    %2477 = vmatpush.msra.mxu0 0.0
    %2478 = vmatpush.msra.mxu0 0.0
    %2479 = vmatpush.msra.mxu0 0.0
    %2480 = vmatpush.msra.mxu0 0.0
    %2481 = vmatpush.msra.mxu0 0.0
    %2482 = vmatpush.msra.mxu0 0.0
    %2483 = vmatpush.msra.mxu0 0.0
    %2484 = vmatpush.msra.mxu0 0.0
    %2485 = vmatpush.msra.mxu0 0.0
    %2486 = vmatpush.msra.mxu0 0.0
    %2487 = vmatpush.msra.mxu0 0.0
    %2488 = vmatpush.msra.mxu0 0.0
    %2489 = vmatpush.msra.mxu0 0.0
    %2490 = vmatpush.msra.mxu0 0.0
    %2491 = vmatpush.msra.mxu0 %v2133
    %2492 = vmatmul.f32.gmra.mxu0 %v2474
    %v2493 = vpop.f32.mrf.mxu0
    %v2494 = vadd.f32 %v2204, %v2493
    %2495 = vdwg.mxu0
    %2497 = vrot.lane.b32.xlu0 %v2494, 24
    %v2498 = vpop.permute.xlu0 %2497
    %v2500 = vadd.f32 %v415, %v2498
    %2501 = vrot.lane.b32.xlu0 %v958, 104
    %v2502 = vpop.permute.xlu0 %2501
    %2503 = vrot.lane.b32.xlu0 %v586, 72
    %v2504 = vpop.permute.xlu0 %2503
    %v2505 = vsel %vm635, %v2502, 0
    %v2507 = vsel %vm635, %v2504, 0
    %2509 = vmatpush.xpose.msra.mxu0 0.0
    %2510 = vmatpush.xpose.msra.mxu0 0.0
    %2511 = vmatpush.xpose.msra.mxu0 0.0
    %2512 = vmatpush.xpose.msra.mxu0 0.0
    %2513 = vmatpush.xpose.msra.mxu0 0.0
    %2514 = vmatpush.xpose.msra.mxu0 0.0
    %2515 = vmatpush.xpose.msra.mxu0 0.0
    %2516 = vmatpush.xpose.msra.mxu0 0.0
    %2517 = vmatpush.xpose.msra.mxu0 0.0
    %2518 = vmatpush.xpose.msra.mxu0 0.0
    %2519 = vmatpush.xpose.msra.mxu0 0.0
    %2520 = vmatpush.xpose.msra.mxu0 0.0
    %2521 = vmatpush.xpose.msra.mxu0 0.0
    %2522 = vmatpush.xpose.msra.mxu0 0.0
    %2523 = vmatpush.xpose.msra.mxu0 0.0
    %2524 = vmatpush.xpose.msra.mxu0 %v2507
    %2525 = vmatmul.f32.gmra.mxu0 %v2505
    %v2526 = vpop.f32.mrf.mxu0
    %v2527 = vadd.f32 0.0, %v2526
    %2528 = vdwg.mxu0
    %v2529 = vsel %vm635, %v2527, -inf
    %2530 = vmax.xlane.f32.xlu0 %v2529
    %v2531 = vpop.xlane.xlu0 %2530
    %v2532 = vsub.f32 %v2527, %v2531
    %v2533 = vmul.f32 %v2532, 1.442695
    %v2534 = vpow.pop %v2533
    %v2535 = vsel %vm635, %v2534, 0.0
    %2536 = vadd.xlane.f32.xlu0 %v2535
    %v2537 = vpop.xlane.xlu0 %2536
    %v2538 = vrcp.pop %v2537
    %v2539 = vmul.f32 %v2534, %v2538
    %2540 = vrot.lane.b32.xlu0 %v586, 40
    %v2541 = vpop.permute.xlu0 %2540
    %v2544 = vsel %vm635, %v2539, 0
    %2546 = vmatpush.msra.mxu0 0.0
    %2547 = vmatpush.msra.mxu0 0.0
    %2548 = vmatpush.msra.mxu0 0.0
    %2549 = vmatpush.msra.mxu0 0.0
    %2550 = vmatpush.msra.mxu0 0.0
    %2551 = vmatpush.msra.mxu0 0.0
    %2552 = vmatpush.msra.mxu0 0.0
    %2553 = vmatpush.msra.mxu0 0.0
    %2554 = vmatpush.msra.mxu0 0.0
    %2555 = vmatpush.msra.mxu0 0.0
    %2556 = vmatpush.msra.mxu0 0.0
    %2557 = vmatpush.msra.mxu0 0.0
    %2558 = vmatpush.msra.mxu0 0.0
    %2559 = vmatpush.msra.mxu0 0.0
    %2560 = vmatpush.msra.mxu0 0.0
    %2561 = vmatpush.msra.mxu0 %v2541
    %2562 = vmatmul.f32.gmra.mxu0 %v2544
    %v2563 = vpop.f32.mrf.mxu0
    %v2564 = vadd.f32 0.0, %v2563
    %2565 = vdwg.mxu0
    %v2567 = vsel %vm635, %v2564, 0
    %2569 = vmatpush.msra.mxu0 0.0
    %2570 = vmatpush.msra.mxu0 0.0
    %2571 = vmatpush.msra.mxu0 0.0
    %2572 = vmatpush.msra.mxu0 0.0
    %2573 = vmatpush.msra.mxu0 0.0
    %2574 = vmatpush.msra.mxu0 0.0
    %2575 = vmatpush.msra.mxu0 0.0
    %2576 = vmatpush.msra.mxu0 0.0
    %2577 = vmatpush.msra.mxu0 0.0
    %2578 = vmatpush.msra.mxu0 0.0
    %2579 = vmatpush.msra.mxu0 0.0
    %2580 = vmatpush.msra.mxu0 0.0
    %2581 = vmatpush.msra.mxu0 0.0
    %2582 = vmatpush.msra.mxu0 0.0
    %2583 = vmatpush.msra.mxu0 0.0
    %2584 = vmatpush.msra.mxu0 %v2135
    %2585 = vmatmul.f32.gmra.mxu0 %v2567
    %v2586 = vpop.f32.mrf.mxu0
    %v2587 = vadd.f32 %v2298, %v2586
    %2588 = vdwg.mxu0
    %2590 = vrot.lane.b32.xlu0 %v2587, 24
    %v2591 = vpop.permute.xlu0 %2590
    %v2593 = vadd.f32 %v550, %v2591
    %2595 = vrot.lane.b32.xlu0 %v2500, 104
    %v2596 = vpop.permute.xlu0 %2595
    %v2598 = vsel %vm635, %v2596, 0.0
    %2599 = vadd.xlane.f32.xlu0 %v2598
    %v2600 = vpop.xlane.xlu0 %2599
    %2602 = vrot.lane.b32.xlu0 %v2593, 104
    %v2603 = vpop.permute.xlu0 %2602
    %v2605 = vsel %vm635, %v2603, 0.0
    %2606 = vadd.xlane.f32.xlu0 %v2605
    %v2607 = vpop.xlane.xlu0 %2606
    %v2608 = vadd.f32 %v2600, %v2607
    %v2609 = vmul.f32 %v2608, 0.0625
    %v2610 = vsub.f32 %v2500, %v2609
    %v2611 = vsub.f32 %v2593, %v2609
    %v2612 = vmul.f32 %v2610, %v2610
    %2614 = vrot.lane.b32.xlu0 %v2612, 104
    %v2615 = vpop.permute.xlu0 %2614
    %v2617 = vsel %vm635, %v2615, 0.0
    %2618 = vadd.xlane.f32.xlu0 %v2617
    %v2619 = vpop.xlane.xlu0 %2618
    %v2620 = vmul.f32 %v2611, %v2611
    %2622 = vrot.lane.b32.xlu0 %v2620, 104
    %v2623 = vpop.permute.xlu0 %2622
    %v2625 = vsel %vm635, %v2623, 0.0
    %2626 = vadd.xlane.f32.xlu0 %v2625
    %v2627 = vpop.xlane.xlu0 %2626
    %v2628 = vadd.f32 %v2619, %v2627
    %v2629 = vmul.f32 %v2628, 0.0625
    %v2630 = vadd.f32 %v2629, 1e-05
    %v2631 = vrsqrt.pop %v2630
    %v2632 = vmul.f32 %v2631, %v2630
    %v2633 = vmul.f32 %v2632, %v2631
    %v2634 = vmul.f32 0.5, %v2633
    %v2635 = vsub.f32 1.5, %v2634
    %v2636 = vmul.f32 %v2631, %v2635
    %vm2637 = vweird.f32 %v2630
    %vm2638 = vweird.f32 %v2631
    %vm2639 = vmor %vm2637, %vm2638
    %v2640 = vsel %vm2639, %v2631, %v2636
    %v2641 = vmul.f32 %v2610, %v2640
    %v2642 = vmul.f32 %v2641, %v2378
    %v2643 = vadd.f32 %v2642, %v2384
    %2645 = vrot.lane.b32.xlu0 %v2643, 24
    %v2646 = vpop.permute.xlu0 %2645
    %2648 = vst.msk [vmem:[%s20 + $0x8] sm:$0xff] %vm2391, %v2646
    %v2649 = vmul.f32 %v2611, %v2640
    %v2650 = vmul.f32 %v2649, %v2395
    %v2651 = vadd.f32 %v2650, %v2399
    %2653 = vrot.lane.b32.xlu0 %v2651, 32
    %v2654 = vpop.permute.xlu0 %2653
    %2656 = vst.msk [vmem:[%s20 + $0x8] sm:$0xff] %vm2406, %v2654
    // Predicated region
    $region142: #{multi_head_cross_attention.1} parent=1 // pred_check
      _
    $region143: #{multi_head_cross_attention.1} parent=1 // pred_check_branch
      %2658 = sbr.rel (0) target = $region145
    $region144: #{multi_head_cross_attention.1} parent=1 // pred_region
      _
    $region145: #{multi_head_cross_attention.1} parent=1 // pred_fallthru
      _
    // Predicated region
    $region146: #{multi_head_cross_attention.1} parent=1 // pred_check
      _
    $region147: #{multi_head_cross_attention.1} parent=1 // pred_check_branch
      %2660 = sbr.rel (0) target = $region149
    $region148: #{multi_head_cross_attention.1} parent=1 // pred_region
      _
    $region149: #{multi_head_cross_attention.1} parent=1 // pred_fallthru
      _
    %2661 = vsyncpa [#allocation3], 1
    %2662 = vsyncpa [#allocation5], 1
    %2663 = vsyncpa [#allocation8], 1
    %2664 = vsyncpa [#allocation11], 1
    %2665 = vsyncpa [#allocation14], 1
    %2666 = vsyncpa [#allocation17], 1
    %2667 = vsyncpa [#allocation20], 1
    %2668 = vsyncpa [#allocation23], 1

</llo_original>
